<compile_context>
chip_gen: v7x
topology: tpu7x:2x2x1
jax: 0.10.0
libtpu: 0.0.40
codegen_flags: <defaults>
</compile_context>

<pallas_src>
import functools

import jax
import jax.numpy as jnp
from jax import lax
from jax.experimental import pallas as pl
from jax.experimental.pallas import tpu as pltpu


def _round_up(x, m):
    return ((x + m - 1) // m) * m


# ----------------------------------------------------------------------------- kernel
def bilstm_kernel(x_ref,                  # (T*bb, Ep)   bf16, rows ordered (t, b_local)
                  wih_ref,                # (Ep, 8*Hp)   bf16, [fwd gates | bwd gates]
                  whh_f_ref, whh_b_ref,   # (Hp, 4*Hp)   bf16
                  b_ref,                  # (1, 8*Hp)    f32, folded b_ih + b_hh
                  out_ref,                # (T*bb, Hp)   f32
                  gin_f_ref, gin_b_ref,   # (T*bb, 4*Hp) f32 scratch (input projection)
                  bwd_ref,                # (T*bb, Hp)   f32 scratch (backward direction)
                  *, seq_len, bb):
    Hp = out_ref.shape[-1]
    G4 = 4 * Hp

    # (1) Input projection for both directions as ONE big bf16 MXU matmul,
    #     biases folded in once (no per-step broadcast+add).
    g_all = (jnp.dot(x_ref[...], wih_ref[...],
                     preferred_element_type=jnp.float32)
             + b_ref[...])
    gin_f_ref[...] = g_all[:, :G4]
    gin_b_ref[...] = g_all[:, G4:]

    # Small recurrent weights, hoisted once (bf16 operands for the MXU).
    whh_f = whh_f_ref[...]
    whh_b = whh_b_ref[...]

    def lstm_cell(gates, c):
        # PyTorch gate order [i, f, g, o]; every slice boundary is a 128-lane multiple.
        i = jax.nn.sigmoid(gates[:, 0 * Hp:1 * Hp])
        f = jax.nn.sigmoid(gates[:, 1 * Hp:2 * Hp])
        g = jnp.tanh(gates[:, 2 * Hp:3 * Hp])
        o = jax.nn.sigmoid(gates[:, 3 * Hp:4 * Hp])
        c_new = f * c + i * g
        h_new = o * jnp.tanh(c_new)
        return h_new, c_new

    # (2) Fused forward/backward recurrence: two independent MXU+EUP chains per
    #     iteration for the VLIW scheduler to overlap.
    def step(t, carry):
        hf, cf, hb, cb = carry
        tb = seq_len - 1 - t
        rf = pl.multiple_of(t * bb, bb)       # forward rows  [t*bb,  t*bb+bb)
        rb = pl.multiple_of(tb * bb, bb)      # backward rows [tb*bb, tb*bb+bb)

        gates_f = gin_f_ref[pl.ds(rf, bb), :] + jnp.dot(
            hf.astype(jnp.bfloat16), whh_f, preferred_element_type=jnp.float32)
        gates_b = gin_b_ref[pl.ds(rb, bb), :] + jnp.dot(
            hb.astype(jnp.bfloat16), whh_b, preferred_element_type=jnp.float32)

        hf, cf = lstm_cell(gates_f, cf)
        hb, cb = lstm_cell(gates_b, cb)

        out_ref[pl.ds(rf, bb), :] = hf        # forward hidden -> output
        bwd_ref[pl.ds(rb, bb), :] = hb        # backward hidden -> scratch
        return hf, cf, hb, cb

    zero = jnp.zeros((bb, Hp), jnp.float32)   # init_hidden(): h0 = c0 = 0
    lax.fori_loop(0, seq_len, step, (zero, zero, zero, zero), unroll=True)

    # out[:, :, :H] + out[:, :, H:]  ->  one full-width vectorized add.
    out_ref[...] = out_ref[...] + bwd_ref[...]


# ----------------------------------------------------------------------------- weight packing
def _pack_w(w, h, hp, dp):
    """PyTorch LSTM weight (4h, d) -> (dp, 4hp): transposed, each gate block padded h->hp."""
    d = w.shape[1]
    out = jnp.zeros((dp, 4 * hp), jnp.float32)
    for k in range(4):
        out = out.at[:d, k * hp:k * hp + h].set(w[k * h:(k + 1) * h, :].T)
    return out


def _pack_b(b, h, hp):
    out = jnp.zeros((4 * hp,), jnp.float32)
    for k in range(4):
        out = out.at[k * hp:k * hp + h].set(b[k * h:(k + 1) * h])
    return out


# ----------------------------------------------------------------------------- wrapper
def encoder_rnn_forward(emb, params, *, batch_block=8):
    """emb: (B, T, E) float32 (already-embedded sentence). Returns (B, T, H) float32."""
    B, T, E = emb.shape
    H = params["whh_f"].shape[1]               # whh_f: (4H, H)

    bb = batch_block
    assert bb % 8 == 0, "batch block must be a sublane multiple"
    Hp = _round_up(H, 128)                     # lane-align hidden dim
    Ep = _round_up(E, 128)                     # lane-align embedding dim (zero padded)
    Bp = _round_up(B, bb)
    nb = Bp // bb
    G4, G8 = 4 * Hp, 8 * Hp

    # Pack weights: gate-padded, pre-transposed, bf16 (MXU); biases folded & f32.
    wih = jnp.concatenate(
        [_pack_w(params["wih_f"], H, Hp, Ep),
         _pack_w(params["wih_b"], H, Hp, Ep)], axis=1).astype(jnp.bfloat16)  # (Ep, 8Hp)
    whh_f = _pack_w(params["whh_f"], H, Hp, Hp).astype(jnp.bfloat16)         # (Hp, 4Hp)
    whh_b = _pack_w(params["whh_b"], H, Hp, Hp).astype(jnp.bfloat16)         # (Hp, 4Hp)
    bias = jnp.concatenate(
        [_pack_b(params["bih_f"] + params["bhh_f"], H, Hp),
         _pack_b(params["bih_b"] + params["bhh_b"], H, Hp)]).reshape(1, G8)  # f32

    # x: pad to (Bp, T, Ep), regroup into per-batch-block, time-major rows (t, b_local).
    x = jnp.pad(emb, ((0, Bp - B), (0, 0), (0, Ep - E)))
    x = x.reshape(nb, bb, T, Ep).transpose(0, 2, 1, 3).reshape(nb, T * bb, Ep)
    x = x.astype(jnp.bfloat16)

    # VMEM limit sized to actual buffers (+ headroom), capped for v7x's 64 MiB.
    x_blk = T * bb * Ep * 2
    out_blk = T * bb * Hp * 4
    w_bytes = Ep * G8 * 2 + 2 * Hp * G4 * 2 + G8 * 4
    scratch_bytes = (2 * T * bb * G4 + T * bb * Hp) * 4
    vmem_needed = 2 * x_blk + 2 * out_blk + 2 * w_bytes + scratch_bytes
    vmem_limit = int(min(max(2 * vmem_needed + (4 << 20), 16 << 20), 64 << 20))

    kernel = functools.partial(bilstm_kernel, seq_len=T, bb=bb)

    out = pl.pallas_call(
        kernel,
        out_shape=jax.ShapeDtypeStruct((nb, T * bb, Hp), jnp.float32),
        grid_spec=pltpu.PrefetchScalarGridSpec(
            num_scalar_prefetch=0,
            grid=(nb,),
            in_specs=[
                pl.BlockSpec((None, T * bb, Ep), lambda n: (n, 0, 0)),   # x (per batch block)
                pl.BlockSpec((Ep, G8), lambda n: (0, 0)),                # wih (both dirs)
                pl.BlockSpec((Hp, G4), lambda n: (0, 0)),                # whh fwd
                pl.BlockSpec((Hp, G4), lambda n: (0, 0)),                # whh bwd
                pl.BlockSpec((1, G8), lambda n: (0, 0)),                 # folded bias
            ],
            out_specs=pl.BlockSpec((None, T * bb, Hp), lambda n: (n, 0, 0)),
            scratch_shapes=[
                pltpu.VMEM((T * bb, G4), jnp.float32),   # fwd input-projection gates
                pltpu.VMEM((T * bb, G4), jnp.float32),   # bwd input-projection gates
                pltpu.VMEM((T * bb, Hp), jnp.float32),   # bwd hidden states
            ],
        ),
        compiler_params=pltpu.CompilerParams(
            dimension_semantics=("parallel",),
            vmem_limit_bytes=vmem_limit,
        ),
    )(x, wih, whh_f, whh_b, bias)

    # Unpack: (nb, T*bb, Hp) -> (Bp, T, Hp) -> (B, T, H)
    out = out.reshape(nb, T, bb, Hp).transpose(0, 2, 1, 3).reshape(Bp, T, Hp)
    return out[:B, :, :H]


# ----------------------------------------------------------------------------- pure-JAX reference
def bilstm_reference(emb, params, *, bf16_matmul=False):
    B, T, E = emb.shape
    H = params["whh_f"].shape[1]
    dot_dtype = jnp.bfloat16 if bf16_matmul else jnp.float32

    def run(xs, wih, whh, b):                  # xs: (T, B, E)
        wih_c = wih.astype(dot_dtype)
        whh_c = whh.astype(dot_dtype)
        # Input projection hoisted like the kernel; bias added once in f32.
        gin = jnp.einsum("tbe,ge->tbg", xs.astype(dot_dtype), wih_c,
                         preferred_element_type=jnp.float32) + b

        def step(carry, g_t):
            h, c = carry
            gates = g_t + jnp.dot(h.astype(dot_dtype), whh_c.T,
                                  preferred_element_type=jnp.float32)
            i = jax.nn.sigmoid(gates[:, 0 * H:1 * H])
            f = jax.nn.sigmoid(gates[:, 1 * H:2 * H])
            g = jnp.tanh(gates[:, 2 * H:3 * H])
            o = jax.nn.sigmoid(gates[:, 3 * H:4 * H])
            c_new = f * c + i * g
            h_new = o * jnp.tanh(c_new)
            return (h_new, c_new), h_new

        init = (jnp.zeros((B, H), jnp.float32), jnp.zeros((B, H), jnp.float32))
        _, hs = lax.scan(step, init, gin)
        return hs                              # (T, B, H)

    xs = jnp.transpose(emb, (1, 0, 2))
    b_f = params["bih_f"] + params["bhh_f"]
    b_b = params["bih_b"] + params["bhh_b"]
    h_fwd = run(xs, params["wih_f"], params["whh_f"], b_f)
    h_bwd = run(xs[::-1], params["wih_b"], params["whh_b"], b_b)[::-1]
    return jnp.transpose(h_fwd + h_bwd, (1, 0, 2))


# ----------------------------------------------------------------------------- params
def init_params(key, emb_dim, h_dim):
    """Deterministic xavier-uniform-ish init (gain = sqrt(2), like calculate_gain('relu'))."""
    gain = jnp.sqrt(2.0)

    def xavier(k, shape):
        fan_out, fan_in = shape
        bound = gain * jnp.sqrt(6.0 / (fan_in + fan_out))
        return jax.random.uniform(k, shape, jnp.float32, -bound, bound)

    ks = jax.random.split(key, 8)
    G = 4 * h_dim
    return {
        "wih_f": xavier(ks[0], (G, emb_dim)),
        "whh_f": xavier(ks[1], (G, h_dim)),
        "bih_f": 0.01 * jax.random.normal(ks[2], (G,), jnp.float32),
        "bhh_f": 0.01 * jax.random.normal(ks[3], (G,), jnp.float32),
        "wih_b": xavier(ks[4], (G, emb_dim)),
        "whh_b": xavier(ks[5], (G, h_dim)),
        "bih_b": 0.01 * jax.random.normal(ks[6], (G,), jnp.float32),
        "bhh_b": 0.01 * jax.random.normal(ks[7], (G,), jnp.float32),
    }


# ----------------------------------------------------------------------------- main
if __name__ == "__main__":
    B, T = 2, 8            # batch, sequence length (MAX_SENT_LEN is 32 in the module)
    E, H = 32, 32          # emb_dim (768 for BERT; small synthetic value), h_dim

    key = jax.random.PRNGKey(0)
    k_emb, k_par = jax.random.split(key)
    emb = jax.random.normal(k_emb, (B, T, E), jnp.float32)   # "sentence" already embedded
    params = init_params(k_par, E, H)

    out = jax.jit(encoder_rnn_forward)(emb, params)
    out = jax.block_until_ready(out)

    ref_bf16 = bilstm_reference(emb, params, bf16_matmul=True)    # mirrors kernel numerics
    ref_f32 = bilstm_reference(emb, params, bf16_matmul=False)    # full-precision semantics

    assert out.shape == (B, T, H)
    assert jnp.allclose(out, ref_bf16, atol=1e-3, rtol=1e-3), \
        "Pallas bi-LSTM mismatch vs bf16-matmul reference"
    assert jnp.allclose(out, ref_f32, atol=5e-2, rtol=5e-2), \
        "Pallas bi-LSTM mismatch vs f32 reference"

    print("KERNEL_OK")
</pallas_src>

<mosaic_0001>
module attributes {stable_mosaic.version = 11 : i64} {
  func.func @bilstm_kernel(%arg0: i32, %arg1: memref<1x64x128xbf16, #tpu.memory_space<vmem>>, %arg2: memref<128x1024xbf16, #tpu.memory_space<vmem>>, %arg3: memref<128x512xbf16, #tpu.memory_space<vmem>>, %arg4: memref<128x512xbf16, #tpu.memory_space<vmem>>, %arg5: memref<1x1024xf32, #tpu.memory_space<vmem>>, %arg6: memref<1x64x128xf32, #tpu.memory_space<vmem>>, %arg7: memref<64x512xf32, #tpu.memory_space<vmem>>, %arg8: memref<64x512xf32, #tpu.memory_space<vmem>>, %arg9: memref<64x128xf32, #tpu.memory_space<vmem>>) attributes {dimension_semantics = [#tpu.dimension_semantics<parallel>], iteration_bounds = array<i64: 1>, scalar_prefetch = 0 : i64, scratch_operands = 3 : i64, tpu.core_type = #tpu.core_type<tc>, window_params = [{transform_indices = @transform_0, window_bounds = array<i64: 1, 64, 128>}, {pipeline_mode = #tpu.pipeline_mode<synchronous>, transform_indices = @transform_1, window_bounds = array<i64: 128, 1024>}, {pipeline_mode = #tpu.pipeline_mode<synchronous>, transform_indices = @transform_2, window_bounds = array<i64: 128, 512>}, {pipeline_mode = #tpu.pipeline_mode<synchronous>, transform_indices = @transform_3, window_bounds = array<i64: 128, 512>}, {pipeline_mode = #tpu.pipeline_mode<synchronous>, transform_indices = @transform_4, window_bounds = array<i64: 1, 1024>}, {transform_indices = @transform_5, window_bounds = array<i64: 1, 64, 128>}]} {
    %c0 = arith.constant 0 : index
    %c0_0 = arith.constant 0 : index
    %c0_1 = arith.constant 0 : index
    %0 = vector.load %arg1[%c0, %c0_0, %c0_1] : memref<1x64x128xbf16, #tpu.memory_space<vmem>>, vector<1x64x128xbf16>
    %1 = vector.shape_cast %0 : vector<1x64x128xbf16> to vector<64x128xbf16>
    %c0_2 = arith.constant 0 : index
    %c0_3 = arith.constant 0 : index
    %2 = vector.load %arg2[%c0_2, %c0_3] : memref<128x1024xbf16, #tpu.memory_space<vmem>>, vector<128x1024xbf16>
    %cst = arith.constant dense<0.000000e+00> : vector<64x1024xf32>
    %3 = tpu.matmul %1, %2, %cst {dimension_numbers = #tpu.dot_dimension_numbers<[1], [0], [0], [1], [0, 0, 1, 1], [], []>} : vector<64x128xbf16>, vector<128x1024xbf16>, vector<64x1024xf32> -> vector<64x1024xf32>
    %c0_4 = arith.constant 0 : index
    %c0_5 = arith.constant 0 : index
    %4 = vector.load %arg5[%c0_4, %c0_5] : memref<1x1024xf32, #tpu.memory_space<vmem>>, vector<1x1024xf32>
    %5 = vector.broadcast %4 : vector<1x1024xf32> to vector<64x1024xf32>
    %6 = arith.addf %3, %5 : vector<64x1024xf32>
    %7 = vector.extract_strided_slice %6 {offsets = [0, 0], sizes = [64, 512], strides = [1, 1]} : vector<64x1024xf32> to vector<64x512xf32>
    %c0_6 = arith.constant 0 : index
    %c0_7 = arith.constant 0 : index
    %8 = vector.load %arg7[%c0_6, %c0_7] : memref<64x512xf32, #tpu.memory_space<vmem>>, vector<64x512xf32>
    tpu.vector_store %arg7[%c0_6, %c0_7], %7 {strides = array<i32>} : memref<64x512xf32, #tpu.memory_space<vmem>>, vector<64x512xf32>,
    %9 = vector.extract_strided_slice %6 {offsets = [0, 512], sizes = [64, 512], strides = [1, 1]} : vector<64x1024xf32> to vector<64x512xf32>
    %c0_8 = arith.constant 0 : index
    %c0_9 = arith.constant 0 : index
    %10 = vector.load %arg8[%c0_8, %c0_9] : memref<64x512xf32, #tpu.memory_space<vmem>>, vector<64x512xf32>
    tpu.vector_store %arg8[%c0_8, %c0_9], %9 {strides = array<i32>} : memref<64x512xf32, #tpu.memory_space<vmem>>, vector<64x512xf32>,
    %c0_10 = arith.constant 0 : index
    %c0_11 = arith.constant 0 : index
    %11 = vector.load %arg3[%c0_10, %c0_11] : memref<128x512xbf16, #tpu.memory_space<vmem>>, vector<128x512xbf16>
    %c0_12 = arith.constant 0 : index
    %c0_13 = arith.constant 0 : index
    %12 = vector.load %arg4[%c0_12, %c0_13] : memref<128x512xbf16, #tpu.memory_space<vmem>>, vector<128x512xbf16>
    %cst_14 = arith.constant 0.000000e+00 : f32
    %13 = vector.broadcast %cst_14 : f32 to vector<8x128xf32>
    %c0_i32 = arith.constant 0 : i32
    %c7_i32 = arith.constant 7 : i32
    %14 = arith.subi %c7_i32, %c0_i32 : i32
    %c8_i32 = arith.constant 8 : i32
    %15 = arith.muli %c0_i32, %c8_i32 : i32
    %16 = tpu.assume_multiple %15, 8 : i32
    %c8_i32_15 = arith.constant 8 : i32
    %17 = arith.muli %14, %c8_i32_15 : i32
    %18 = tpu.assume_multiple %17, 8 : i32
    %19 = arith.index_cast %16 : i32 to index
    %c0_16 = arith.constant 0 : index
    %20 = vector.load %arg7[%19, %c0_16] : memref<64x512xf32, #tpu.memory_space<vmem>>, vector<8x512xf32>
    %21 = arith.truncf %13 : vector<8x128xf32> to vector<8x128xbf16>
    %cst_17 = arith.constant dense<0.000000e+00> : vector<8x512xf32>
    %22 = tpu.matmul %21, %11, %cst_17 {dimension_numbers = #tpu.dot_dimension_numbers<[1], [0], [0], [1], [0, 0, 1, 1], [], []>} : vector<8x128xbf16>, vector<128x512xbf16>, vector<8x512xf32> -> vector<8x512xf32>
    %23 = arith.addf %20, %22 : vector<8x512xf32>
    %24 = arith.index_cast %18 : i32 to index
    %c0_18 = arith.constant 0 : index
    %25 = vector.load %arg8[%24, %c0_18] : memref<64x512xf32, #tpu.memory_space<vmem>>, vector<8x512xf32>
    %26 = arith.truncf %13 : vector<8x128xf32> to vector<8x128xbf16>
    %cst_19 = arith.constant dense<0.000000e+00> : vector<8x512xf32>
    %27 = tpu.matmul %26, %12, %cst_19 {dimension_numbers = #tpu.dot_dimension_numbers<[1], [0], [0], [1], [0, 0, 1, 1], [], []>} : vector<8x128xbf16>, vector<128x512xbf16>, vector<8x512xf32> -> vector<8x512xf32>
    %28 = arith.addf %25, %27 : vector<8x512xf32>
    %29 = vector.extract_strided_slice %23 {offsets = [0, 0], sizes = [8, 128], strides = [1, 1]} : vector<8x512xf32> to vector<8x128xf32>
    %30 = arith.negf %29 : vector<8x128xf32>
    %31 = math.exp %30 : vector<8x128xf32>
    %cst_20 = arith.constant 1.000000e+00 : f32
    %32 = vector.broadcast %cst_20 : f32 to vector<8x128xf32>
    %33 = arith.addf %32, %31 : vector<8x128xf32>
    %34 = arith.divf %32, %33 : vector<8x128xf32>
    %35 = vector.extract_strided_slice %23 {offsets = [0, 128], sizes = [8, 128], strides = [1, 1]} : vector<8x512xf32> to vector<8x128xf32>
    %36 = arith.negf %35 : vector<8x128xf32>
    %37 = math.exp %36 : vector<8x128xf32>
    %cst_21 = arith.constant 1.000000e+00 : f32
    %38 = vector.broadcast %cst_21 : f32 to vector<8x128xf32>
    %39 = arith.addf %38, %37 : vector<8x128xf32>
    %40 = arith.divf %38, %39 : vector<8x128xf32>
    %41 = vector.extract_strided_slice %23 {offsets = [0, 256], sizes = [8, 128], strides = [1, 1]} : vector<8x512xf32> to vector<8x128xf32>
    %42 = math.tanh %41 : vector<8x128xf32>
    %43 = vector.extract_strided_slice %23 {offsets = [0, 384], sizes = [8, 128], strides = [1, 1]} : vector<8x512xf32> to vector<8x128xf32>
    %44 = arith.negf %43 : vector<8x128xf32>
    %45 = math.exp %44 : vector<8x128xf32>
    %cst_22 = arith.constant 1.000000e+00 : f32
    %46 = vector.broadcast %cst_22 : f32 to vector<8x128xf32>
    %47 = arith.addf %46, %45 : vector<8x128xf32>
    %48 = arith.divf %46, %47 : vector<8x128xf32>
    %49 = arith.mulf %40, %13 : vector<8x128xf32>
    %50 = arith.mulf %34, %42 : vector<8x128xf32>
    %51 = arith.addf %49, %50 : vector<8x128xf32>
    %52 = math.tanh %51 : vector<8x128xf32>
    %53 = arith.mulf %48, %52 : vector<8x128xf32>
    %54 = vector.extract_strided_slice %28 {offsets = [0, 0], sizes = [8, 128], strides = [1, 1]} : vector<8x512xf32> to vector<8x128xf32>
    %55 = arith.negf %54 : vector<8x128xf32>
    %56 = math.exp %55 : vector<8x128xf32>
    %cst_23 = arith.constant 1.000000e+00 : f32
    %57 = vector.broadcast %cst_23 : f32 to vector<8x128xf32>
    %58 = arith.addf %57, %56 : vector<8x128xf32>
    %59 = arith.divf %57, %58 : vector<8x128xf32>
    %60 = vector.extract_strided_slice %28 {offsets = [0, 128], sizes = [8, 128], strides = [1, 1]} : vector<8x512xf32> to vector<8x128xf32>
    %61 = arith.negf %60 : vector<8x128xf32>
    %62 = math.exp %61 : vector<8x128xf32>
    %cst_24 = arith.constant 1.000000e+00 : f32
    %63 = vector.broadcast %cst_24 : f32 to vector<8x128xf32>
    %64 = arith.addf %63, %62 : vector<8x128xf32>
    %65 = arith.divf %63, %64 : vector<8x128xf32>
    %66 = vector.extract_strided_slice %28 {offsets = [0, 256], sizes = [8, 128], strides = [1, 1]} : vector<8x512xf32> to vector<8x128xf32>
    %67 = math.tanh %66 : vector<8x128xf32>
    %68 = vector.extract_strided_slice %28 {offsets = [0, 384], sizes = [8, 128], strides = [1, 1]} : vector<8x512xf32> to vector<8x128xf32>
    %69 = arith.negf %68 : vector<8x128xf32>
    %70 = math.exp %69 : vector<8x128xf32>
    %cst_25 = arith.constant 1.000000e+00 : f32
    %71 = vector.broadcast %cst_25 : f32 to vector<8x128xf32>
    %72 = arith.addf %71, %70 : vector<8x128xf32>
    %73 = arith.divf %71, %72 : vector<8x128xf32>
    %74 = arith.mulf %65, %13 : vector<8x128xf32>
    %75 = arith.mulf %59, %67 : vector<8x128xf32>
    %76 = arith.addf %74, %75 : vector<8x128xf32>
    %77 = math.tanh %76 : vector<8x128xf32>
    %78 = arith.mulf %73, %77 : vector<8x128xf32>
    %c0_26 = arith.constant 0 : index
    %79 = arith.index_cast %16 : i32 to index
    %c0_27 = arith.constant 0 : index
    %80 = vector.load %arg6[%c0_26, %79, %c0_27] : memref<1x64x128xf32, #tpu.memory_space<vmem>>, vector<1x8x128xf32>
    %81 = vector.shape_cast %80 : vector<1x8x128xf32> to vector<8x128xf32>
    %82 = vector.shape_cast %53 : vector<8x128xf32> to vector<1x8x128xf32>
    tpu.vector_store %arg6[%c0_26, %79, %c0_27], %82 {strides = array<i32>} : memref<1x64x128xf32, #tpu.memory_space<vmem>>, vector<1x8x128xf32>,
    %83 = arith.index_cast %18 : i32 to index
    %c0_28 = arith.constant 0 : index
    %84 = vector.load %arg9[%83, %c0_28] : memref<64x128xf32, #tpu.memory_space<vmem>>, vector<8x128xf32>
    tpu.vector_store %arg9[%83, %c0_28], %78 {strides = array<i32>} : memref<64x128xf32, #tpu.memory_space<vmem>>, vector<8x128xf32>,
    %c1_i32 = arith.constant 1 : i32
    %c7_i32_29 = arith.constant 7 : i32
    %85 = arith.subi %c7_i32_29, %c1_i32 : i32
    %c8_i32_30 = arith.constant 8 : i32
    %86 = arith.muli %c1_i32, %c8_i32_30 : i32
    %87 = tpu.assume_multiple %86, 8 : i32
    %c8_i32_31 = arith.constant 8 : i32
    %88 = arith.muli %85, %c8_i32_31 : i32
    %89 = tpu.assume_multiple %88, 8 : i32
    %90 = arith.index_cast %87 : i32 to index
    %c0_32 = arith.constant 0 : index
    %91 = vector.load %arg7[%90, %c0_32] : memref<64x512xf32, #tpu.memory_space<vmem>>, vector<8x512xf32>
    %92 = arith.truncf %53 : vector<8x128xf32> to vector<8x128xbf16>
    %cst_33 = arith.constant dense<0.000000e+00> : vector<8x512xf32>
    %93 = tpu.matmul %92, %11, %cst_33 {dimension_numbers = #tpu.dot_dimension_numbers<[1], [0], [0], [1], [0, 0, 1, 1], [], []>} : vector<8x128xbf16>, vector<128x512xbf16>, vector<8x512xf32> -> vector<8x512xf32>
    %94 = arith.addf %91, %93 : vector<8x512xf32>
    %95 = arith.index_cast %89 : i32 to index
    %c0_34 = arith.constant 0 : index
    %96 = vector.load %arg8[%95, %c0_34] : memref<64x512xf32, #tpu.memory_space<vmem>>, vector<8x512xf32>
    %97 = arith.truncf %78 : vector<8x128xf32> to vector<8x128xbf16>
    %cst_35 = arith.constant dense<0.000000e+00> : vector<8x512xf32>
    %98 = tpu.matmul %97, %12, %cst_35 {dimension_numbers = #tpu.dot_dimension_numbers<[1], [0], [0], [1], [0, 0, 1, 1], [], []>} : vector<8x128xbf16>, vector<128x512xbf16>, vector<8x512xf32> -> vector<8x512xf32>
    %99 = arith.addf %96, %98 : vector<8x512xf32>
    %100 = vector.extract_strided_slice %94 {offsets = [0, 0], sizes = [8, 128], strides = [1, 1]} : vector<8x512xf32> to vector<8x128xf32>
    %101 = arith.negf %100 : vector<8x128xf32>
    %102 = math.exp %101 : vector<8x128xf32>
    %cst_36 = arith.constant 1.000000e+00 : f32
    %103 = vector.broadcast %cst_36 : f32 to vector<8x128xf32>
    %104 = arith.addf %103, %102 : vector<8x128xf32>
    %105 = arith.divf %103, %104 : vector<8x128xf32>
    %106 = vector.extract_strided_slice %94 {offsets = [0, 128], sizes = [8, 128], strides = [1, 1]} : vector<8x512xf32> to vector<8x128xf32>
    %107 = arith.negf %106 : vector<8x128xf32>
    %108 = math.exp %107 : vector<8x128xf32>
    %cst_37 = arith.constant 1.000000e+00 : f32
    %109 = vector.broadcast %cst_37 : f32 to vector<8x128xf32>
    %110 = arith.addf %109, %108 : vector<8x128xf32>
    %111 = arith.divf %109, %110 : vector<8x128xf32>
    %112 = vector.extract_strided_slice %94 {offsets = [0, 256], sizes = [8, 128], strides = [1, 1]} : vector<8x512xf32> to vector<8x128xf32>
    %113 = math.tanh %112 : vector<8x128xf32>
    %114 = vector.extract_strided_slice %94 {offsets = [0, 384], sizes = [8, 128], strides = [1, 1]} : vector<8x512xf32> to vector<8x128xf32>
    %115 = arith.negf %114 : vector<8x128xf32>
    %116 = math.exp %115 : vector<8x128xf32>
    %cst_38 = arith.constant 1.000000e+00 : f32
    %117 = vector.broadcast %cst_38 : f32 to vector<8x128xf32>
    %118 = arith.addf %117, %116 : vector<8x128xf32>
    %119 = arith.divf %117, %118 : vector<8x128xf32>
    %120 = arith.mulf %111, %51 : vector<8x128xf32>
    %121 = arith.mulf %105, %113 : vector<8x128xf32>
    %122 = arith.addf %120, %121 : vector<8x128xf32>
    %123 = math.tanh %122 : vector<8x128xf32>
    %124 = arith.mulf %119, %123 : vector<8x128xf32>
    %125 = vector.extract_strided_slice %99 {offsets = [0, 0], sizes = [8, 128], strides = [1, 1]} : vector<8x512xf32> to vector<8x128xf32>
    %126 = arith.negf %125 : vector<8x128xf32>
    %127 = math.exp %126 : vector<8x128xf32>
    %cst_39 = arith.constant 1.000000e+00 : f32
    %128 = vector.broadcast %cst_39 : f32 to vector<8x128xf32>
    %129 = arith.addf %128, %127 : vector<8x128xf32>
    %130 = arith.divf %128, %129 : vector<8x128xf32>
    %131 = vector.extract_strided_slice %99 {offsets = [0, 128], sizes = [8, 128], strides = [1, 1]} : vector<8x512xf32> to vector<8x128xf32>
    %132 = arith.negf %131 : vector<8x128xf32>
    %133 = math.exp %132 : vector<8x128xf32>
    %cst_40 = arith.constant 1.000000e+00 : f32
    %134 = vector.broadcast %cst_40 : f32 to vector<8x128xf32>
    %135 = arith.addf %134, %133 : vector<8x128xf32>
    %136 = arith.divf %134, %135 : vector<8x128xf32>
    %137 = vector.extract_strided_slice %99 {offsets = [0, 256], sizes = [8, 128], strides = [1, 1]} : vector<8x512xf32> to vector<8x128xf32>
    %138 = math.tanh %137 : vector<8x128xf32>
    %139 = vector.extract_strided_slice %99 {offsets = [0, 384], sizes = [8, 128], strides = [1, 1]} : vector<8x512xf32> to vector<8x128xf32>
    %140 = arith.negf %139 : vector<8x128xf32>
    %141 = math.exp %140 : vector<8x128xf32>
    %cst_41 = arith.constant 1.000000e+00 : f32
    %142 = vector.broadcast %cst_41 : f32 to vector<8x128xf32>
    %143 = arith.addf %142, %141 : vector<8x128xf32>
    %144 = arith.divf %142, %143 : vector<8x128xf32>
    %145 = arith.mulf %136, %76 : vector<8x128xf32>
    %146 = arith.mulf %130, %138 : vector<8x128xf32>
    %147 = arith.addf %145, %146 : vector<8x128xf32>
    %148 = math.tanh %147 : vector<8x128xf32>
    %149 = arith.mulf %144, %148 : vector<8x128xf32>
    %c0_42 = arith.constant 0 : index
    %150 = arith.index_cast %87 : i32 to index
    %c0_43 = arith.constant 0 : index
    %151 = vector.load %arg6[%c0_42, %150, %c0_43] : memref<1x64x128xf32, #tpu.memory_space<vmem>>, vector<1x8x128xf32>
    %152 = vector.shape_cast %151 : vector<1x8x128xf32> to vector<8x128xf32>
    %153 = vector.shape_cast %124 : vector<8x128xf32> to vector<1x8x128xf32>
    tpu.vector_store %arg6[%c0_42, %150, %c0_43], %153 {strides = array<i32>} : memref<1x64x128xf32, #tpu.memory_space<vmem>>, vector<1x8x128xf32>,
    %154 = arith.index_cast %89 : i32 to index
    %c0_44 = arith.constant 0 : index
    %155 = vector.load %arg9[%154, %c0_44] : memref<64x128xf32, #tpu.memory_space<vmem>>, vector<8x128xf32>
    tpu.vector_store %arg9[%154, %c0_44], %149 {strides = array<i32>} : memref<64x128xf32, #tpu.memory_space<vmem>>, vector<8x128xf32>,
    %c2_i32 = arith.constant 2 : i32
    %c7_i32_45 = arith.constant 7 : i32
    %156 = arith.subi %c7_i32_45, %c2_i32 : i32
    %c8_i32_46 = arith.constant 8 : i32
    %157 = arith.muli %c2_i32, %c8_i32_46 : i32
    %158 = tpu.assume_multiple %157, 8 : i32
    %c8_i32_47 = arith.constant 8 : i32
    %159 = arith.muli %156, %c8_i32_47 : i32
    %160 = tpu.assume_multiple %159, 8 : i32
    %161 = arith.index_cast %158 : i32 to index
    %c0_48 = arith.constant 0 : index
    %162 = vector.load %arg7[%161, %c0_48] : memref<64x512xf32, #tpu.memory_space<vmem>>, vector<8x512xf32>
    %163 = arith.truncf %124 : vector<8x128xf32> to vector<8x128xbf16>
    %cst_49 = arith.constant dense<0.000000e+00> : vector<8x512xf32>
    %164 = tpu.matmul %163, %11, %cst_49 {dimension_numbers = #tpu.dot_dimension_numbers<[1], [0], [0], [1], [0, 0, 1, 1], [], []>} : vector<8x128xbf16>, vector<128x512xbf16>, vector<8x512xf32> -> vector<8x512xf32>
    %165 = arith.addf %162, %164 : vector<8x512xf32>
    %166 = arith.index_cast %160 : i32 to index
    %c0_50 = arith.constant 0 : index
    %167 = vector.load %arg8[%166, %c0_50] : memref<64x512xf32, #tpu.memory_space<vmem>>, vector<8x512xf32>
    %168 = arith.truncf %149 : vector<8x128xf32> to vector<8x128xbf16>
    %cst_51 = arith.constant dense<0.000000e+00> : vector<8x512xf32>
    %169 = tpu.matmul %168, %12, %cst_51 {dimension_numbers = #tpu.dot_dimension_numbers<[1], [0], [0], [1], [0, 0, 1, 1], [], []>} : vector<8x128xbf16>, vector<128x512xbf16>, vector<8x512xf32> -> vector<8x512xf32>
    %170 = arith.addf %167, %169 : vector<8x512xf32>
    %171 = vector.extract_strided_slice %165 {offsets = [0, 0], sizes = [8, 128], strides = [1, 1]} : vector<8x512xf32> to vector<8x128xf32>
    %172 = arith.negf %171 : vector<8x128xf32>
    %173 = math.exp %172 : vector<8x128xf32>
    %cst_52 = arith.constant 1.000000e+00 : f32
    %174 = vector.broadcast %cst_52 : f32 to vector<8x128xf32>
    %175 = arith.addf %174, %173 : vector<8x128xf32>
    %176 = arith.divf %174, %175 : vector<8x128xf32>
    %177 = vector.extract_strided_slice %165 {offsets = [0, 128], sizes = [8, 128], strides = [1, 1]} : vector<8x512xf32> to vector<8x128xf32>
    %178 = arith.negf %177 : vector<8x128xf32>
    %179 = math.exp %178 : vector<8x128xf32>
    %cst_53 = arith.constant 1.000000e+00 : f32
    %180 = vector.broadcast %cst_53 : f32 to vector<8x128xf32>
    %181 = arith.addf %180, %179 : vector<8x128xf32>
    %182 = arith.divf %180, %181 : vector<8x128xf32>
    %183 = vector.extract_strided_slice %165 {offsets = [0, 256], sizes = [8, 128], strides = [1, 1]} : vector<8x512xf32> to vector<8x128xf32>
    %184 = math.tanh %183 : vector<8x128xf32>
    %185 = vector.extract_strided_slice %165 {offsets = [0, 384], sizes = [8, 128], strides = [1, 1]} : vector<8x512xf32> to vector<8x128xf32>
    %186 = arith.negf %185 : vector<8x128xf32>
    %187 = math.exp %186 : vector<8x128xf32>
    %cst_54 = arith.constant 1.000000e+00 : f32
    %188 = vector.broadcast %cst_54 : f32 to vector<8x128xf32>
    %189 = arith.addf %188, %187 : vector<8x128xf32>
    %190 = arith.divf %188, %189 : vector<8x128xf32>
    %191 = arith.mulf %182, %122 : vector<8x128xf32>
    %192 = arith.mulf %176, %184 : vector<8x128xf32>
    %193 = arith.addf %191, %192 : vector<8x128xf32>
    %194 = math.tanh %193 : vector<8x128xf32>
    %195 = arith.mulf %190, %194 : vector<8x128xf32>
    %196 = vector.extract_strided_slice %170 {offsets = [0, 0], sizes = [8, 128], strides = [1, 1]} : vector<8x512xf32> to vector<8x128xf32>
    %197 = arith.negf %196 : vector<8x128xf32>
    %198 = math.exp %197 : vector<8x128xf32>
    %cst_55 = arith.constant 1.000000e+00 : f32
    %199 = vector.broadcast %cst_55 : f32 to vector<8x128xf32>
    %200 = arith.addf %199, %198 : vector<8x128xf32>
    %201 = arith.divf %199, %200 : vector<8x128xf32>
    %202 = vector.extract_strided_slice %170 {offsets = [0, 128], sizes = [8, 128], strides = [1, 1]} : vector<8x512xf32> to vector<8x128xf32>
    %203 = arith.negf %202 : vector<8x128xf32>
    %204 = math.exp %203 : vector<8x128xf32>
    %cst_56 = arith.constant 1.000000e+00 : f32
    %205 = vector.broadcast %cst_56 : f32 to vector<8x128xf32>
    %206 = arith.addf %205, %204 : vector<8x128xf32>
    %207 = arith.divf %205, %206 : vector<8x128xf32>
    %208 = vector.extract_strided_slice %170 {offsets = [0, 256], sizes = [8, 128], strides = [1, 1]} : vector<8x512xf32> to vector<8x128xf32>
    %209 = math.tanh %208 : vector<8x128xf32>
    %210 = vector.extract_strided_slice %170 {offsets = [0, 384], sizes = [8, 128], strides = [1, 1]} : vector<8x512xf32> to vector<8x128xf32>
    %211 = arith.negf %210 : vector<8x128xf32>
    %212 = math.exp %211 : vector<8x128xf32>
    %cst_57 = arith.constant 1.000000e+00 : f32
    %213 = vector.broadcast %cst_57 : f32 to vector<8x128xf32>
    %214 = arith.addf %213, %212 : vector<8x128xf32>
    %215 = arith.divf %213, %214 : vector<8x128xf32>
    %216 = arith.mulf %207, %147 : vector<8x128xf32>
    %217 = arith.mulf %201, %209 : vector<8x128xf32>
    %218 = arith.addf %216, %217 : vector<8x128xf32>
    %219 = math.tanh %218 : vector<8x128xf32>
    %220 = arith.mulf %215, %219 : vector<8x128xf32>
    %c0_58 = arith.constant 0 : index
    %221 = arith.index_cast %158 : i32 to index
    %c0_59 = arith.constant 0 : index
    %222 = vector.load %arg6[%c0_58, %221, %c0_59] : memref<1x64x128xf32, #tpu.memory_space<vmem>>, vector<1x8x128xf32>
    %223 = vector.shape_cast %222 : vector<1x8x128xf32> to vector<8x128xf32>
    %224 = vector.shape_cast %195 : vector<8x128xf32> to vector<1x8x128xf32>
    tpu.vector_store %arg6[%c0_58, %221, %c0_59], %224 {strides = array<i32>} : memref<1x64x128xf32, #tpu.memory_space<vmem>>, vector<1x8x128xf32>,
    %225 = arith.index_cast %160 : i32 to index
    %c0_60 = arith.constant 0 : index
    %226 = vector.load %arg9[%225, %c0_60] : memref<64x128xf32, #tpu.memory_space<vmem>>, vector<8x128xf32>
    tpu.vector_store %arg9[%225, %c0_60], %220 {strides = array<i32>} : memref<64x128xf32, #tpu.memory_space<vmem>>, vector<8x128xf32>,
    %c3_i32 = arith.constant 3 : i32
    %c7_i32_61 = arith.constant 7 : i32
    %227 = arith.subi %c7_i32_61, %c3_i32 : i32
    %c8_i32_62 = arith.constant 8 : i32
    %228 = arith.muli %c3_i32, %c8_i32_62 : i32
    %229 = tpu.assume_multiple %228, 8 : i32
    %c8_i32_63 = arith.constant 8 : i32
    %230 = arith.muli %227, %c8_i32_63 : i32
    %231 = tpu.assume_multiple %230, 8 : i32
    %232 = arith.index_cast %229 : i32 to index
    %c0_64 = arith.constant 0 : index
    %233 = vector.load %arg7[%232, %c0_64] : memref<64x512xf32, #tpu.memory_space<vmem>>, vector<8x512xf32>
    %234 = arith.truncf %195 : vector<8x128xf32> to vector<8x128xbf16>
    %cst_65 = arith.constant dense<0.000000e+00> : vector<8x512xf32>
    %235 = tpu.matmul %234, %11, %cst_65 {dimension_numbers = #tpu.dot_dimension_numbers<[1], [0], [0], [1], [0, 0, 1, 1], [], []>} : vector<8x128xbf16>, vector<128x512xbf16>, vector<8x512xf32> -> vector<8x512xf32>
    %236 = arith.addf %233, %235 : vector<8x512xf32>
    %237 = arith.index_cast %231 : i32 to index
    %c0_66 = arith.constant 0 : index
    %238 = vector.load %arg8[%237, %c0_66] : memref<64x512xf32, #tpu.memory_space<vmem>>, vector<8x512xf32>
    %239 = arith.truncf %220 : vector<8x128xf32> to vector<8x128xbf16>
    %cst_67 = arith.constant dense<0.000000e+00> : vector<8x512xf32>
    %240 = tpu.matmul %239, %12, %cst_67 {dimension_numbers = #tpu.dot_dimension_numbers<[1], [0], [0], [1], [0, 0, 1, 1], [], []>} : vector<8x128xbf16>, vector<128x512xbf16>, vector<8x512xf32> -> vector<8x512xf32>
    %241 = arith.addf %238, %240 : vector<8x512xf32>
    %242 = vector.extract_strided_slice %236 {offsets = [0, 0], sizes = [8, 128], strides = [1, 1]} : vector<8x512xf32> to vector<8x128xf32>
    %243 = arith.negf %242 : vector<8x128xf32>
    %244 = math.exp %243 : vector<8x128xf32>
    %cst_68 = arith.constant 1.000000e+00 : f32
    %245 = vector.broadcast %cst_68 : f32 to vector<8x128xf32>
    %246 = arith.addf %245, %244 : vector<8x128xf32>
    %247 = arith.divf %245, %246 : vector<8x128xf32>
    %248 = vector.extract_strided_slice %236 {offsets = [0, 128], sizes = [8, 128], strides = [1, 1]} : vector<8x512xf32> to vector<8x128xf32>
    %249 = arith.negf %248 : vector<8x128xf32>
    %250 = math.exp %249 : vector<8x128xf32>
    %cst_69 = arith.constant 1.000000e+00 : f32
    %251 = vector.broadcast %cst_69 : f32 to vector<8x128xf32>
    %252 = arith.addf %251, %250 : vector<8x128xf32>
    %253 = arith.divf %251, %252 : vector<8x128xf32>
    %254 = vector.extract_strided_slice %236 {offsets = [0, 256], sizes = [8, 128], strides = [1, 1]} : vector<8x512xf32> to vector<8x128xf32>
    %255 = math.tanh %254 : vector<8x128xf32>
    %256 = vector.extract_strided_slice %236 {offsets = [0, 384], sizes = [8, 128], strides = [1, 1]} : vector<8x512xf32> to vector<8x128xf32>
    %257 = arith.negf %256 : vector<8x128xf32>
    %258 = math.exp %257 : vector<8x128xf32>
    %cst_70 = arith.constant 1.000000e+00 : f32
    %259 = vector.broadcast %cst_70 : f32 to vector<8x128xf32>
    %260 = arith.addf %259, %258 : vector<8x128xf32>
    %261 = arith.divf %259, %260 : vector<8x128xf32>
    %262 = arith.mulf %253, %193 : vector<8x128xf32>
    %263 = arith.mulf %247, %255 : vector<8x128xf32>
    %264 = arith.addf %262, %263 : vector<8x128xf32>
    %265 = math.tanh %264 : vector<8x128xf32>
    %266 = arith.mulf %261, %265 : vector<8x128xf32>
    %267 = vector.extract_strided_slice %241 {offsets = [0, 0], sizes = [8, 128], strides = [1, 1]} : vector<8x512xf32> to vector<8x128xf32>
    %268 = arith.negf %267 : vector<8x128xf32>
    %269 = math.exp %268 : vector<8x128xf32>
    %cst_71 = arith.constant 1.000000e+00 : f32
    %270 = vector.broadcast %cst_71 : f32 to vector<8x128xf32>
    %271 = arith.addf %270, %269 : vector<8x128xf32>
    %272 = arith.divf %270, %271 : vector<8x128xf32>
    %273 = vector.extract_strided_slice %241 {offsets = [0, 128], sizes = [8, 128], strides = [1, 1]} : vector<8x512xf32> to vector<8x128xf32>
    %274 = arith.negf %273 : vector<8x128xf32>
    %275 = math.exp %274 : vector<8x128xf32>
    %cst_72 = arith.constant 1.000000e+00 : f32
    %276 = vector.broadcast %cst_72 : f32 to vector<8x128xf32>
    %277 = arith.addf %276, %275 : vector<8x128xf32>
    %278 = arith.divf %276, %277 : vector<8x128xf32>
    %279 = vector.extract_strided_slice %241 {offsets = [0, 256], sizes = [8, 128], strides = [1, 1]} : vector<8x512xf32> to vector<8x128xf32>
    %280 = math.tanh %279 : vector<8x128xf32>
    %281 = vector.extract_strided_slice %241 {offsets = [0, 384], sizes = [8, 128], strides = [1, 1]} : vector<8x512xf32> to vector<8x128xf32>
    %282 = arith.negf %281 : vector<8x128xf32>
    %283 = math.exp %282 : vector<8x128xf32>
    %cst_73 = arith.constant 1.000000e+00 : f32
    %284 = vector.broadcast %cst_73 : f32 to vector<8x128xf32>
    %285 = arith.addf %284, %283 : vector<8x128xf32>
    %286 = arith.divf %284, %285 : vector<8x128xf32>
    %287 = arith.mulf %278, %218 : vector<8x128xf32>
    %288 = arith.mulf %272, %280 : vector<8x128xf32>
    %289 = arith.addf %287, %288 : vector<8x128xf32>
    %290 = math.tanh %289 : vector<8x128xf32>
    %291 = arith.mulf %286, %290 : vector<8x128xf32>
    %c0_74 = arith.constant 0 : index
    %292 = arith.index_cast %229 : i32 to index
    %c0_75 = arith.constant 0 : index
    %293 = vector.load %arg6[%c0_74, %292, %c0_75] : memref<1x64x128xf32, #tpu.memory_space<vmem>>, vector<1x8x128xf32>
    %294 = vector.shape_cast %293 : vector<1x8x128xf32> to vector<8x128xf32>
    %295 = vector.shape_cast %266 : vector<8x128xf32> to vector<1x8x128xf32>
    tpu.vector_store %arg6[%c0_74, %292, %c0_75], %295 {strides = array<i32>} : memref<1x64x128xf32, #tpu.memory_space<vmem>>, vector<1x8x128xf32>,
    %296 = arith.index_cast %231 : i32 to index
    %c0_76 = arith.constant 0 : index
    %297 = vector.load %arg9[%296, %c0_76] : memref<64x128xf32, #tpu.memory_space<vmem>>, vector<8x128xf32>
    tpu.vector_store %arg9[%296, %c0_76], %291 {strides = array<i32>} : memref<64x128xf32, #tpu.memory_space<vmem>>, vector<8x128xf32>,
    %c4_i32 = arith.constant 4 : i32
    %c7_i32_77 = arith.constant 7 : i32
    %298 = arith.subi %c7_i32_77, %c4_i32 : i32
    %c8_i32_78 = arith.constant 8 : i32
    %299 = arith.muli %c4_i32, %c8_i32_78 : i32
    %300 = tpu.assume_multiple %299, 8 : i32
    %c8_i32_79 = arith.constant 8 : i32
    %301 = arith.muli %298, %c8_i32_79 : i32
    %302 = tpu.assume_multiple %301, 8 : i32
    %303 = arith.index_cast %300 : i32 to index
    %c0_80 = arith.constant 0 : index
    %304 = vector.load %arg7[%303, %c0_80] : memref<64x512xf32, #tpu.memory_space<vmem>>, vector<8x512xf32>
    %305 = arith.truncf %266 : vector<8x128xf32> to vector<8x128xbf16>
    %cst_81 = arith.constant dense<0.000000e+00> : vector<8x512xf32>
    %306 = tpu.matmul %305, %11, %cst_81 {dimension_numbers = #tpu.dot_dimension_numbers<[1], [0], [0], [1], [0, 0, 1, 1], [], []>} : vector<8x128xbf16>, vector<128x512xbf16>, vector<8x512xf32> -> vector<8x512xf32>
    %307 = arith.addf %304, %306 : vector<8x512xf32>
    %308 = arith.index_cast %302 : i32 to index
    %c0_82 = arith.constant 0 : index
    %309 = vector.load %arg8[%308, %c0_82] : memref<64x512xf32, #tpu.memory_space<vmem>>, vector<8x512xf32>
    %310 = arith.truncf %291 : vector<8x128xf32> to vector<8x128xbf16>
    %cst_83 = arith.constant dense<0.000000e+00> : vector<8x512xf32>
    %311 = tpu.matmul %310, %12, %cst_83 {dimension_numbers = #tpu.dot_dimension_numbers<[1], [0], [0], [1], [0, 0, 1, 1], [], []>} : vector<8x128xbf16>, vector<128x512xbf16>, vector<8x512xf32> -> vector<8x512xf32>
    %312 = arith.addf %309, %311 : vector<8x512xf32>
    %313 = vector.extract_strided_slice %307 {offsets = [0, 0], sizes = [8, 128], strides = [1, 1]} : vector<8x512xf32> to vector<8x128xf32>
    %314 = arith.negf %313 : vector<8x128xf32>
    %315 = math.exp %314 : vector<8x128xf32>
    %cst_84 = arith.constant 1.000000e+00 : f32
    %316 = vector.broadcast %cst_84 : f32 to vector<8x128xf32>
    %317 = arith.addf %316, %315 : vector<8x128xf32>
    %318 = arith.divf %316, %317 : vector<8x128xf32>
    %319 = vector.extract_strided_slice %307 {offsets = [0, 128], sizes = [8, 128], strides = [1, 1]} : vector<8x512xf32> to vector<8x128xf32>
    %320 = arith.negf %319 : vector<8x128xf32>
    %321 = math.exp %320 : vector<8x128xf32>
    %cst_85 = arith.constant 1.000000e+00 : f32
    %322 = vector.broadcast %cst_85 : f32 to vector<8x128xf32>
    %323 = arith.addf %322, %321 : vector<8x128xf32>
    %324 = arith.divf %322, %323 : vector<8x128xf32>
    %325 = vector.extract_strided_slice %307 {offsets = [0, 256], sizes = [8, 128], strides = [1, 1]} : vector<8x512xf32> to vector<8x128xf32>
    %326 = math.tanh %325 : vector<8x128xf32>
    %327 = vector.extract_strided_slice %307 {offsets = [0, 384], sizes = [8, 128], strides = [1, 1]} : vector<8x512xf32> to vector<8x128xf32>
    %328 = arith.negf %327 : vector<8x128xf32>
    %329 = math.exp %328 : vector<8x128xf32>
    %cst_86 = arith.constant 1.000000e+00 : f32
    %330 = vector.broadcast %cst_86 : f32 to vector<8x128xf32>
    %331 = arith.addf %330, %329 : vector<8x128xf32>
    %332 = arith.divf %330, %331 : vector<8x128xf32>
    %333 = arith.mulf %324, %264 : vector<8x128xf32>
    %334 = arith.mulf %318, %326 : vector<8x128xf32>
    %335 = arith.addf %333, %334 : vector<8x128xf32>
    %336 = math.tanh %335 : vector<8x128xf32>
    %337 = arith.mulf %332, %336 : vector<8x128xf32>
    %338 = vector.extract_strided_slice %312 {offsets = [0, 0], sizes = [8, 128], strides = [1, 1]} : vector<8x512xf32> to vector<8x128xf32>
    %339 = arith.negf %338 : vector<8x128xf32>
    %340 = math.exp %339 : vector<8x128xf32>
    %cst_87 = arith.constant 1.000000e+00 : f32
    %341 = vector.broadcast %cst_87 : f32 to vector<8x128xf32>
    %342 = arith.addf %341, %340 : vector<8x128xf32>
    %343 = arith.divf %341, %342 : vector<8x128xf32>
    %344 = vector.extract_strided_slice %312 {offsets = [0, 128], sizes = [8, 128], strides = [1, 1]} : vector<8x512xf32> to vector<8x128xf32>
    %345 = arith.negf %344 : vector<8x128xf32>
    %346 = math.exp %345 : vector<8x128xf32>
    %cst_88 = arith.constant 1.000000e+00 : f32
    %347 = vector.broadcast %cst_88 : f32 to vector<8x128xf32>
    %348 = arith.addf %347, %346 : vector<8x128xf32>
    %349 = arith.divf %347, %348 : vector<8x128xf32>
    %350 = vector.extract_strided_slice %312 {offsets = [0, 256], sizes = [8, 128], strides = [1, 1]} : vector<8x512xf32> to vector<8x128xf32>
    %351 = math.tanh %350 : vector<8x128xf32>
    %352 = vector.extract_strided_slice %312 {offsets = [0, 384], sizes = [8, 128], strides = [1, 1]} : vector<8x512xf32> to vector<8x128xf32>
    %353 = arith.negf %352 : vector<8x128xf32>
    %354 = math.exp %353 : vector<8x128xf32>
    %cst_89 = arith.constant 1.000000e+00 : f32
    %355 = vector.broadcast %cst_89 : f32 to vector<8x128xf32>
    %356 = arith.addf %355, %354 : vector<8x128xf32>
    %357 = arith.divf %355, %356 : vector<8x128xf32>
    %358 = arith.mulf %349, %289 : vector<8x128xf32>
    %359 = arith.mulf %343, %351 : vector<8x128xf32>
    %360 = arith.addf %358, %359 : vector<8x128xf32>
    %361 = math.tanh %360 : vector<8x128xf32>
    %362 = arith.mulf %357, %361 : vector<8x128xf32>
    %c0_90 = arith.constant 0 : index
    %363 = arith.index_cast %300 : i32 to index
    %c0_91 = arith.constant 0 : index
    %364 = vector.load %arg6[%c0_90, %363, %c0_91] : memref<1x64x128xf32, #tpu.memory_space<vmem>>, vector<1x8x128xf32>
    %365 = vector.shape_cast %364 : vector<1x8x128xf32> to vector<8x128xf32>
    %366 = vector.shape_cast %337 : vector<8x128xf32> to vector<1x8x128xf32>
    tpu.vector_store %arg6[%c0_90, %363, %c0_91], %366 {strides = array<i32>} : memref<1x64x128xf32, #tpu.memory_space<vmem>>, vector<1x8x128xf32>,
    %367 = arith.index_cast %302 : i32 to index
    %c0_92 = arith.constant 0 : index
    %368 = vector.load %arg9[%367, %c0_92] : memref<64x128xf32, #tpu.memory_space<vmem>>, vector<8x128xf32>
    tpu.vector_store %arg9[%367, %c0_92], %362 {strides = array<i32>} : memref<64x128xf32, #tpu.memory_space<vmem>>, vector<8x128xf32>,
    %c5_i32 = arith.constant 5 : i32
    %c7_i32_93 = arith.constant 7 : i32
    %369 = arith.subi %c7_i32_93, %c5_i32 : i32
    %c8_i32_94 = arith.constant 8 : i32
    %370 = arith.muli %c5_i32, %c8_i32_94 : i32
    %371 = tpu.assume_multiple %370, 8 : i32
    %c8_i32_95 = arith.constant 8 : i32
    %372 = arith.muli %369, %c8_i32_95 : i32
    %373 = tpu.assume_multiple %372, 8 : i32
    %374 = arith.index_cast %371 : i32 to index
    %c0_96 = arith.constant 0 : index
    %375 = vector.load %arg7[%374, %c0_96] : memref<64x512xf32, #tpu.memory_space<vmem>>, vector<8x512xf32>
    %376 = arith.truncf %337 : vector<8x128xf32> to vector<8x128xbf16>
    %cst_97 = arith.constant dense<0.000000e+00> : vector<8x512xf32>
    %377 = tpu.matmul %376, %11, %cst_97 {dimension_numbers = #tpu.dot_dimension_numbers<[1], [0], [0], [1], [0, 0, 1, 1], [], []>} : vector<8x128xbf16>, vector<128x512xbf16>, vector<8x512xf32> -> vector<8x512xf32>
    %378 = arith.addf %375, %377 : vector<8x512xf32>
    %379 = arith.index_cast %373 : i32 to index
    %c0_98 = arith.constant 0 : index
    %380 = vector.load %arg8[%379, %c0_98] : memref<64x512xf32, #tpu.memory_space<vmem>>, vector<8x512xf32>
    %381 = arith.truncf %362 : vector<8x128xf32> to vector<8x128xbf16>
    %cst_99 = arith.constant dense<0.000000e+00> : vector<8x512xf32>
    %382 = tpu.matmul %381, %12, %cst_99 {dimension_numbers = #tpu.dot_dimension_numbers<[1], [0], [0], [1], [0, 0, 1, 1], [], []>} : vector<8x128xbf16>, vector<128x512xbf16>, vector<8x512xf32> -> vector<8x512xf32>
    %383 = arith.addf %380, %382 : vector<8x512xf32>
    %384 = vector.extract_strided_slice %378 {offsets = [0, 0], sizes = [8, 128], strides = [1, 1]} : vector<8x512xf32> to vector<8x128xf32>
    %385 = arith.negf %384 : vector<8x128xf32>
    %386 = math.exp %385 : vector<8x128xf32>
    %cst_100 = arith.constant 1.000000e+00 : f32
    %387 = vector.broadcast %cst_100 : f32 to vector<8x128xf32>
    %388 = arith.addf %387, %386 : vector<8x128xf32>
    %389 = arith.divf %387, %388 : vector<8x128xf32>
    %390 = vector.extract_strided_slice %378 {offsets = [0, 128], sizes = [8, 128], strides = [1, 1]} : vector<8x512xf32> to vector<8x128xf32>
    %391 = arith.negf %390 : vector<8x128xf32>
    %392 = math.exp %391 : vector<8x128xf32>
    %cst_101 = arith.constant 1.000000e+00 : f32
    %393 = vector.broadcast %cst_101 : f32 to vector<8x128xf32>
    %394 = arith.addf %393, %392 : vector<8x128xf32>
    %395 = arith.divf %393, %394 : vector<8x128xf32>
    %396 = vector.extract_strided_slice %378 {offsets = [0, 256], sizes = [8, 128], strides = [1, 1]} : vector<8x512xf32> to vector<8x128xf32>
    %397 = math.tanh %396 : vector<8x128xf32>
    %398 = vector.extract_strided_slice %378 {offsets = [0, 384], sizes = [8, 128], strides = [1, 1]} : vector<8x512xf32> to vector<8x128xf32>
    %399 = arith.negf %398 : vector<8x128xf32>
    %400 = math.exp %399 : vector<8x128xf32>
    %cst_102 = arith.constant 1.000000e+00 : f32
    %401 = vector.broadcast %cst_102 : f32 to vector<8x128xf32>
    %402 = arith.addf %401, %400 : vector<8x128xf32>
    %403 = arith.divf %401, %402 : vector<8x128xf32>
    %404 = arith.mulf %395, %335 : vector<8x128xf32>
    %405 = arith.mulf %389, %397 : vector<8x128xf32>
    %406 = arith.addf %404, %405 : vector<8x128xf32>
    %407 = math.tanh %406 : vector<8x128xf32>
    %408 = arith.mulf %403, %407 : vector<8x128xf32>
    %409 = vector.extract_strided_slice %383 {offsets = [0, 0], sizes = [8, 128], strides = [1, 1]} : vector<8x512xf32> to vector<8x128xf32>
    %410 = arith.negf %409 : vector<8x128xf32>
    %411 = math.exp %410 : vector<8x128xf32>
    %cst_103 = arith.constant 1.000000e+00 : f32
    %412 = vector.broadcast %cst_103 : f32 to vector<8x128xf32>
    %413 = arith.addf %412, %411 : vector<8x128xf32>
    %414 = arith.divf %412, %413 : vector<8x128xf32>
    %415 = vector.extract_strided_slice %383 {offsets = [0, 128], sizes = [8, 128], strides = [1, 1]} : vector<8x512xf32> to vector<8x128xf32>
    %416 = arith.negf %415 : vector<8x128xf32>
    %417 = math.exp %416 : vector<8x128xf32>
    %cst_104 = arith.constant 1.000000e+00 : f32
    %418 = vector.broadcast %cst_104 : f32 to vector<8x128xf32>
    %419 = arith.addf %418, %417 : vector<8x128xf32>
    %420 = arith.divf %418, %419 : vector<8x128xf32>
    %421 = vector.extract_strided_slice %383 {offsets = [0, 256], sizes = [8, 128], strides = [1, 1]} : vector<8x512xf32> to vector<8x128xf32>
    %422 = math.tanh %421 : vector<8x128xf32>
    %423 = vector.extract_strided_slice %383 {offsets = [0, 384], sizes = [8, 128], strides = [1, 1]} : vector<8x512xf32> to vector<8x128xf32>
    %424 = arith.negf %423 : vector<8x128xf32>
    %425 = math.exp %424 : vector<8x128xf32>
    %cst_105 = arith.constant 1.000000e+00 : f32
    %426 = vector.broadcast %cst_105 : f32 to vector<8x128xf32>
    %427 = arith.addf %426, %425 : vector<8x128xf32>
    %428 = arith.divf %426, %427 : vector<8x128xf32>
    %429 = arith.mulf %420, %360 : vector<8x128xf32>
    %430 = arith.mulf %414, %422 : vector<8x128xf32>
    %431 = arith.addf %429, %430 : vector<8x128xf32>
    %432 = math.tanh %431 : vector<8x128xf32>
    %433 = arith.mulf %428, %432 : vector<8x128xf32>
    %c0_106 = arith.constant 0 : index
    %434 = arith.index_cast %371 : i32 to index
    %c0_107 = arith.constant 0 : index
    %435 = vector.load %arg6[%c0_106, %434, %c0_107] : memref<1x64x128xf32, #tpu.memory_space<vmem>>, vector<1x8x128xf32>
    %436 = vector.shape_cast %435 : vector<1x8x128xf32> to vector<8x128xf32>
    %437 = vector.shape_cast %408 : vector<8x128xf32> to vector<1x8x128xf32>
    tpu.vector_store %arg6[%c0_106, %434, %c0_107], %437 {strides = array<i32>} : memref<1x64x128xf32, #tpu.memory_space<vmem>>, vector<1x8x128xf32>,
    %438 = arith.index_cast %373 : i32 to index
    %c0_108 = arith.constant 0 : index
    %439 = vector.load %arg9[%438, %c0_108] : memref<64x128xf32, #tpu.memory_space<vmem>>, vector<8x128xf32>
    tpu.vector_store %arg9[%438, %c0_108], %433 {strides = array<i32>} : memref<64x128xf32, #tpu.memory_space<vmem>>, vector<8x128xf32>,
    %c6_i32 = arith.constant 6 : i32
    %c7_i32_109 = arith.constant 7 : i32
    %440 = arith.subi %c7_i32_109, %c6_i32 : i32
    %c8_i32_110 = arith.constant 8 : i32
    %441 = arith.muli %c6_i32, %c8_i32_110 : i32
    %442 = tpu.assume_multiple %441, 8 : i32
    %c8_i32_111 = arith.constant 8 : i32
    %443 = arith.muli %440, %c8_i32_111 : i32
    %444 = tpu.assume_multiple %443, 8 : i32
    %445 = arith.index_cast %442 : i32 to index
    %c0_112 = arith.constant 0 : index
    %446 = vector.load %arg7[%445, %c0_112] : memref<64x512xf32, #tpu.memory_space<vmem>>, vector<8x512xf32>
    %447 = arith.truncf %408 : vector<8x128xf32> to vector<8x128xbf16>
    %cst_113 = arith.constant dense<0.000000e+00> : vector<8x512xf32>
    %448 = tpu.matmul %447, %11, %cst_113 {dimension_numbers = #tpu.dot_dimension_numbers<[1], [0], [0], [1], [0, 0, 1, 1], [], []>} : vector<8x128xbf16>, vector<128x512xbf16>, vector<8x512xf32> -> vector<8x512xf32>
    %449 = arith.addf %446, %448 : vector<8x512xf32>
    %450 = arith.index_cast %444 : i32 to index
    %c0_114 = arith.constant 0 : index
    %451 = vector.load %arg8[%450, %c0_114] : memref<64x512xf32, #tpu.memory_space<vmem>>, vector<8x512xf32>
    %452 = arith.truncf %433 : vector<8x128xf32> to vector<8x128xbf16>
    %cst_115 = arith.constant dense<0.000000e+00> : vector<8x512xf32>
    %453 = tpu.matmul %452, %12, %cst_115 {dimension_numbers = #tpu.dot_dimension_numbers<[1], [0], [0], [1], [0, 0, 1, 1], [], []>} : vector<8x128xbf16>, vector<128x512xbf16>, vector<8x512xf32> -> vector<8x512xf32>
    %454 = arith.addf %451, %453 : vector<8x512xf32>
    %455 = vector.extract_strided_slice %449 {offsets = [0, 0], sizes = [8, 128], strides = [1, 1]} : vector<8x512xf32> to vector<8x128xf32>
    %456 = arith.negf %455 : vector<8x128xf32>
    %457 = math.exp %456 : vector<8x128xf32>
    %cst_116 = arith.constant 1.000000e+00 : f32
    %458 = vector.broadcast %cst_116 : f32 to vector<8x128xf32>
    %459 = arith.addf %458, %457 : vector<8x128xf32>
    %460 = arith.divf %458, %459 : vector<8x128xf32>
    %461 = vector.extract_strided_slice %449 {offsets = [0, 128], sizes = [8, 128], strides = [1, 1]} : vector<8x512xf32> to vector<8x128xf32>
    %462 = arith.negf %461 : vector<8x128xf32>
    %463 = math.exp %462 : vector<8x128xf32>
    %cst_117 = arith.constant 1.000000e+00 : f32
    %464 = vector.broadcast %cst_117 : f32 to vector<8x128xf32>
    %465 = arith.addf %464, %463 : vector<8x128xf32>
    %466 = arith.divf %464, %465 : vector<8x128xf32>
    %467 = vector.extract_strided_slice %449 {offsets = [0, 256], sizes = [8, 128], strides = [1, 1]} : vector<8x512xf32> to vector<8x128xf32>
    %468 = math.tanh %467 : vector<8x128xf32>
    %469 = vector.extract_strided_slice %449 {offsets = [0, 384], sizes = [8, 128], strides = [1, 1]} : vector<8x512xf32> to vector<8x128xf32>
    %470 = arith.negf %469 : vector<8x128xf32>
    %471 = math.exp %470 : vector<8x128xf32>
    %cst_118 = arith.constant 1.000000e+00 : f32
    %472 = vector.broadcast %cst_118 : f32 to vector<8x128xf32>
    %473 = arith.addf %472, %471 : vector<8x128xf32>
    %474 = arith.divf %472, %473 : vector<8x128xf32>
    %475 = arith.mulf %466, %406 : vector<8x128xf32>
    %476 = arith.mulf %460, %468 : vector<8x128xf32>
    %477 = arith.addf %475, %476 : vector<8x128xf32>
    %478 = math.tanh %477 : vector<8x128xf32>
    %479 = arith.mulf %474, %478 : vector<8x128xf32>
    %480 = vector.extract_strided_slice %454 {offsets = [0, 0], sizes = [8, 128], strides = [1, 1]} : vector<8x512xf32> to vector<8x128xf32>
    %481 = arith.negf %480 : vector<8x128xf32>
    %482 = math.exp %481 : vector<8x128xf32>
    %cst_119 = arith.constant 1.000000e+00 : f32
    %483 = vector.broadcast %cst_119 : f32 to vector<8x128xf32>
    %484 = arith.addf %483, %482 : vector<8x128xf32>
    %485 = arith.divf %483, %484 : vector<8x128xf32>
    %486 = vector.extract_strided_slice %454 {offsets = [0, 128], sizes = [8, 128], strides = [1, 1]} : vector<8x512xf32> to vector<8x128xf32>
    %487 = arith.negf %486 : vector<8x128xf32>
    %488 = math.exp %487 : vector<8x128xf32>
    %cst_120 = arith.constant 1.000000e+00 : f32
    %489 = vector.broadcast %cst_120 : f32 to vector<8x128xf32>
    %490 = arith.addf %489, %488 : vector<8x128xf32>
    %491 = arith.divf %489, %490 : vector<8x128xf32>
    %492 = vector.extract_strided_slice %454 {offsets = [0, 256], sizes = [8, 128], strides = [1, 1]} : vector<8x512xf32> to vector<8x128xf32>
    %493 = math.tanh %492 : vector<8x128xf32>
    %494 = vector.extract_strided_slice %454 {offsets = [0, 384], sizes = [8, 128], strides = [1, 1]} : vector<8x512xf32> to vector<8x128xf32>
    %495 = arith.negf %494 : vector<8x128xf32>
    %496 = math.exp %495 : vector<8x128xf32>
    %cst_121 = arith.constant 1.000000e+00 : f32
    %497 = vector.broadcast %cst_121 : f32 to vector<8x128xf32>
    %498 = arith.addf %497, %496 : vector<8x128xf32>
    %499 = arith.divf %497, %498 : vector<8x128xf32>
    %500 = arith.mulf %491, %431 : vector<8x128xf32>
    %501 = arith.mulf %485, %493 : vector<8x128xf32>
    %502 = arith.addf %500, %501 : vector<8x128xf32>
    %503 = math.tanh %502 : vector<8x128xf32>
    %504 = arith.mulf %499, %503 : vector<8x128xf32>
    %c0_122 = arith.constant 0 : index
    %505 = arith.index_cast %442 : i32 to index
    %c0_123 = arith.constant 0 : index
    %506 = vector.load %arg6[%c0_122, %505, %c0_123] : memref<1x64x128xf32, #tpu.memory_space<vmem>>, vector<1x8x128xf32>
    %507 = vector.shape_cast %506 : vector<1x8x128xf32> to vector<8x128xf32>
    %508 = vector.shape_cast %479 : vector<8x128xf32> to vector<1x8x128xf32>
    tpu.vector_store %arg6[%c0_122, %505, %c0_123], %508 {strides = array<i32>} : memref<1x64x128xf32, #tpu.memory_space<vmem>>, vector<1x8x128xf32>,
    %509 = arith.index_cast %444 : i32 to index
    %c0_124 = arith.constant 0 : index
    %510 = vector.load %arg9[%509, %c0_124] : memref<64x128xf32, #tpu.memory_space<vmem>>, vector<8x128xf32>
    tpu.vector_store %arg9[%509, %c0_124], %504 {strides = array<i32>} : memref<64x128xf32, #tpu.memory_space<vmem>>, vector<8x128xf32>,
    %c7_i32_125 = arith.constant 7 : i32
    %c7_i32_126 = arith.constant 7 : i32
    %511 = arith.subi %c7_i32_126, %c7_i32_125 : i32
    %c8_i32_127 = arith.constant 8 : i32
    %512 = arith.muli %c7_i32_125, %c8_i32_127 : i32
    %513 = tpu.assume_multiple %512, 8 : i32
    %c8_i32_128 = arith.constant 8 : i32
    %514 = arith.muli %511, %c8_i32_128 : i32
    %515 = tpu.assume_multiple %514, 8 : i32
    %516 = arith.index_cast %513 : i32 to index
    %c0_129 = arith.constant 0 : index
    %517 = vector.load %arg7[%516, %c0_129] : memref<64x512xf32, #tpu.memory_space<vmem>>, vector<8x512xf32>
    %518 = arith.truncf %479 : vector<8x128xf32> to vector<8x128xbf16>
    %cst_130 = arith.constant dense<0.000000e+00> : vector<8x512xf32>
    %519 = tpu.matmul %518, %11, %cst_130 {dimension_numbers = #tpu.dot_dimension_numbers<[1], [0], [0], [1], [0, 0, 1, 1], [], []>} : vector<8x128xbf16>, vector<128x512xbf16>, vector<8x512xf32> -> vector<8x512xf32>
    %520 = arith.addf %517, %519 : vector<8x512xf32>
    %521 = arith.index_cast %515 : i32 to index
    %c0_131 = arith.constant 0 : index
    %522 = vector.load %arg8[%521, %c0_131] : memref<64x512xf32, #tpu.memory_space<vmem>>, vector<8x512xf32>
    %523 = arith.truncf %504 : vector<8x128xf32> to vector<8x128xbf16>
    %cst_132 = arith.constant dense<0.000000e+00> : vector<8x512xf32>
    %524 = tpu.matmul %523, %12, %cst_132 {dimension_numbers = #tpu.dot_dimension_numbers<[1], [0], [0], [1], [0, 0, 1, 1], [], []>} : vector<8x128xbf16>, vector<128x512xbf16>, vector<8x512xf32> -> vector<8x512xf32>
    %525 = arith.addf %522, %524 : vector<8x512xf32>
    %526 = vector.extract_strided_slice %520 {offsets = [0, 0], sizes = [8, 128], strides = [1, 1]} : vector<8x512xf32> to vector<8x128xf32>
    %527 = arith.negf %526 : vector<8x128xf32>
    %528 = math.exp %527 : vector<8x128xf32>
    %cst_133 = arith.constant 1.000000e+00 : f32
    %529 = vector.broadcast %cst_133 : f32 to vector<8x128xf32>
    %530 = arith.addf %529, %528 : vector<8x128xf32>
    %531 = arith.divf %529, %530 : vector<8x128xf32>
    %532 = vector.extract_strided_slice %520 {offsets = [0, 128], sizes = [8, 128], strides = [1, 1]} : vector<8x512xf32> to vector<8x128xf32>
    %533 = arith.negf %532 : vector<8x128xf32>
    %534 = math.exp %533 : vector<8x128xf32>
    %cst_134 = arith.constant 1.000000e+00 : f32
    %535 = vector.broadcast %cst_134 : f32 to vector<8x128xf32>
    %536 = arith.addf %535, %534 : vector<8x128xf32>
    %537 = arith.divf %535, %536 : vector<8x128xf32>
    %538 = vector.extract_strided_slice %520 {offsets = [0, 256], sizes = [8, 128], strides = [1, 1]} : vector<8x512xf32> to vector<8x128xf32>
    %539 = math.tanh %538 : vector<8x128xf32>
    %540 = vector.extract_strided_slice %520 {offsets = [0, 384], sizes = [8, 128], strides = [1, 1]} : vector<8x512xf32> to vector<8x128xf32>
    %541 = arith.negf %540 : vector<8x128xf32>
    %542 = math.exp %541 : vector<8x128xf32>
    %cst_135 = arith.constant 1.000000e+00 : f32
    %543 = vector.broadcast %cst_135 : f32 to vector<8x128xf32>
    %544 = arith.addf %543, %542 : vector<8x128xf32>
    %545 = arith.divf %543, %544 : vector<8x128xf32>
    %546 = arith.mulf %537, %477 : vector<8x128xf32>
    %547 = arith.mulf %531, %539 : vector<8x128xf32>
    %548 = arith.addf %546, %547 : vector<8x128xf32>
    %549 = math.tanh %548 : vector<8x128xf32>
    %550 = arith.mulf %545, %549 : vector<8x128xf32>
    %551 = vector.extract_strided_slice %525 {offsets = [0, 0], sizes = [8, 128], strides = [1, 1]} : vector<8x512xf32> to vector<8x128xf32>
    %552 = arith.negf %551 : vector<8x128xf32>
    %553 = math.exp %552 : vector<8x128xf32>
    %cst_136 = arith.constant 1.000000e+00 : f32
    %554 = vector.broadcast %cst_136 : f32 to vector<8x128xf32>
    %555 = arith.addf %554, %553 : vector<8x128xf32>
    %556 = arith.divf %554, %555 : vector<8x128xf32>
    %557 = vector.extract_strided_slice %525 {offsets = [0, 128], sizes = [8, 128], strides = [1, 1]} : vector<8x512xf32> to vector<8x128xf32>
    %558 = arith.negf %557 : vector<8x128xf32>
    %559 = math.exp %558 : vector<8x128xf32>
    %cst_137 = arith.constant 1.000000e+00 : f32
    %560 = vector.broadcast %cst_137 : f32 to vector<8x128xf32>
    %561 = arith.addf %560, %559 : vector<8x128xf32>
    %562 = arith.divf %560, %561 : vector<8x128xf32>
    %563 = vector.extract_strided_slice %525 {offsets = [0, 256], sizes = [8, 128], strides = [1, 1]} : vector<8x512xf32> to vector<8x128xf32>
    %564 = math.tanh %563 : vector<8x128xf32>
    %565 = vector.extract_strided_slice %525 {offsets = [0, 384], sizes = [8, 128], strides = [1, 1]} : vector<8x512xf32> to vector<8x128xf32>
    %566 = arith.negf %565 : vector<8x128xf32>
    %567 = math.exp %566 : vector<8x128xf32>
    %cst_138 = arith.constant 1.000000e+00 : f32
    %568 = vector.broadcast %cst_138 : f32 to vector<8x128xf32>
    %569 = arith.addf %568, %567 : vector<8x128xf32>
    %570 = arith.divf %568, %569 : vector<8x128xf32>
    %571 = arith.mulf %562, %502 : vector<8x128xf32>
    %572 = arith.mulf %556, %564 : vector<8x128xf32>
    %573 = arith.addf %571, %572 : vector<8x128xf32>
    %574 = math.tanh %573 : vector<8x128xf32>
    %575 = arith.mulf %570, %574 : vector<8x128xf32>
    %c0_139 = arith.constant 0 : index
    %576 = arith.index_cast %513 : i32 to index
    %c0_140 = arith.constant 0 : index
    %577 = vector.load %arg6[%c0_139, %576, %c0_140] : memref<1x64x128xf32, #tpu.memory_space<vmem>>, vector<1x8x128xf32>
    %578 = vector.shape_cast %577 : vector<1x8x128xf32> to vector<8x128xf32>
    %579 = vector.shape_cast %550 : vector<8x128xf32> to vector<1x8x128xf32>
    tpu.vector_store %arg6[%c0_139, %576, %c0_140], %579 {strides = array<i32>} : memref<1x64x128xf32, #tpu.memory_space<vmem>>, vector<1x8x128xf32>,
    %580 = arith.index_cast %515 : i32 to index
    %c0_141 = arith.constant 0 : index
    %581 = vector.load %arg9[%580, %c0_141] : memref<64x128xf32, #tpu.memory_space<vmem>>, vector<8x128xf32>
    tpu.vector_store %arg9[%580, %c0_141], %575 {strides = array<i32>} : memref<64x128xf32, #tpu.memory_space<vmem>>, vector<8x128xf32>,
    %c8_i32_142 = arith.constant 8 : i32
    %c0_143 = arith.constant 0 : index
    %c0_144 = arith.constant 0 : index
    %c0_145 = arith.constant 0 : index
    %582 = vector.load %arg6[%c0_143, %c0_144, %c0_145] : memref<1x64x128xf32, #tpu.memory_space<vmem>>, vector<1x64x128xf32>
    %583 = vector.shape_cast %582 : vector<1x64x128xf32> to vector<64x128xf32>
    %c0_146 = arith.constant 0 : index
    %c0_147 = arith.constant 0 : index
    %584 = vector.load %arg9[%c0_146, %c0_147] : memref<64x128xf32, #tpu.memory_space<vmem>>, vector<64x128xf32>
    %585 = arith.addf %583, %584 : vector<64x128xf32>
    %c0_148 = arith.constant 0 : index
    %c0_149 = arith.constant 0 : index
    %c0_150 = arith.constant 0 : index
    %586 = vector.load %arg6[%c0_148, %c0_149, %c0_150] : memref<1x64x128xf32, #tpu.memory_space<vmem>>, vector<1x64x128xf32>
    %587 = vector.shape_cast %586 : vector<1x64x128xf32> to vector<64x128xf32>
    %588 = vector.shape_cast %585 : vector<64x128xf32> to vector<1x64x128xf32>
    tpu.vector_store %arg6[%c0_148, %c0_149, %c0_150], %588 {strides = array<i32>} : memref<1x64x128xf32, #tpu.memory_space<vmem>>, vector<1x64x128xf32>,
    return
  }
  func.func @transform_0(%arg0: i32) -> (i32, i32, i32) {
    %c0_i32 = arith.constant 0 : i32
    %c0_i32_0 = arith.constant 0 : i32
    %c0_i32_1 = arith.constant 0 : i32
    return %arg0, %c0_i32, %c0_i32_0 : i32, i32, i32
  }
  func.func @transform_1(%arg0: i32) -> (i32, i32) {
    %c0_i32 = arith.constant 0 : i32
    %c0_i32_0 = arith.constant 0 : i32
    %c0_i32_1 = arith.constant 0 : i32
    return %c0_i32, %c0_i32_0 : i32, i32
  }
  func.func @transform_2(%arg0: i32) -> (i32, i32) {
    %c0_i32 = arith.constant 0 : i32
    %c0_i32_0 = arith.constant 0 : i32
    %c0_i32_1 = arith.constant 0 : i32
    return %c0_i32, %c0_i32_0 : i32, i32
  }
  func.func @transform_3(%arg0: i32) -> (i32, i32) {
    %c0_i32 = arith.constant 0 : i32
    %c0_i32_0 = arith.constant 0 : i32
    %c0_i32_1 = arith.constant 0 : i32
    return %c0_i32, %c0_i32_0 : i32, i32
  }
  func.func @transform_4(%arg0: i32) -> (i32, i32) {
    %c0_i32 = arith.constant 0 : i32
    %c0_i32_0 = arith.constant 0 : i32
    %c0_i32_1 = arith.constant 0 : i32
    return %c0_i32, %c0_i32_0 : i32, i32
  }
  func.func @transform_5(%arg0: i32) -> (i32, i32, i32) {
    %c0_i32 = arith.constant 0 : i32
    %c0_i32_0 = arith.constant 0 : i32
    %c0_i32_1 = arith.constant 0 : i32
    return %arg0, %c0_i32, %c0_i32_0 : i32, i32, i32
  }
}

</mosaic_0001>

<llo_original>
// kernel: encoder_rnn_forward.1
$region0: #{encoder_rnn_forward.1}
  #allocation0 [shape = 'u32[]', space=smem, size = 0x4, offset = 0x4, fixed_abs, tag = 'smem constant byte address 0x4 - core index']
  #allocation1 [shape = 'u32[144,128]{1,0:T(1,128)}', space=vmem, size = 0x12000, scoped, tag = 'internal scratch']
  #allocation2 [shape = 'f32[64,512]{1,0:T(8,128)}', space=vmem, size = 0x20000, scoped, tag = 'scratch operand']
  #allocation3 [shape = 'f32[64,512]{1,0:T(8,128)}', space=vmem, size = 0x20000, scoped, tag = 'scratch operand']
  #allocation4 [shape = 'f32[64,128]{1,0:T(8,128)}', space=vmem, size = 0x8000, scoped, tag = 'scratch operand']
  %s0 = inlined_call_operand.vmem [shape: bf16[1,64,128], index: 0, kind: input, shape index: {}]
  %s1 = inlined_call_operand.vmem [shape: bf16[128,1024], index: 1, kind: input, shape index: {}]
  %s2 = inlined_call_operand.vmem [shape: bf16[128,512], index: 2, kind: input, shape index: {}]
  %s3 = inlined_call_operand.vmem [shape: bf16[128,512], index: 3, kind: input, shape index: {}]
  %s4 = inlined_call_operand.vmem [shape: f32[1,1024], index: 4, kind: input, shape index: {}]
  %s5 = inlined_call_operand.vmem [shape: f32[1,64,128], index: 5, kind: output, shape index: {}]
  %s6 = sld [smem:[#allocation0]]
  $region30: #{encoder_rnn_forward.1} parent=0
    _
  %s8 = ssub.s32 1, %s6
  %s9 = scalar_select 0, %s8, %s6
  // Predicated region
  $region2: #{encoder_rnn_forward.1} parent=0 // pred_check
    _
  $region3: #{encoder_rnn_forward.1} parent=0 // pred_check_branch
    %11 = sbr.rel (0) target = $region5
  $region4: #{encoder_rnn_forward.1} parent=0 // pred_region
    _
  $region5: #{encoder_rnn_forward.1} parent=0 // pred_fallthru
    _
  // Predicated region
  $region6: #{encoder_rnn_forward.1} parent=0 // pred_check
    _
  $region7: #{encoder_rnn_forward.1} parent=0 // pred_check_branch
    %13 = sbr.rel (0) target = $region9
  $region8: #{encoder_rnn_forward.1} parent=0 // pred_region
    _
  $region9: #{encoder_rnn_forward.1} parent=0 // pred_fallthru
    _
  // Predicated region
  $region10: #{encoder_rnn_forward.1} parent=0 // pred_check
    _
  $region11: #{encoder_rnn_forward.1} parent=0 // pred_check_branch
    %15 = sbr.rel (0) target = $region13
  $region12: #{encoder_rnn_forward.1} parent=0 // pred_region
    _
  $region13: #{encoder_rnn_forward.1} parent=0 // pred_fallthru
    _
  // Predicated region
  $region14: #{encoder_rnn_forward.1} parent=0 // pred_check
    _
  $region15: #{encoder_rnn_forward.1} parent=0 // pred_check_branch
    %17 = sbr.rel (0) target = $region17
  $region16: #{encoder_rnn_forward.1} parent=0 // pred_region
    _
  $region17: #{encoder_rnn_forward.1} parent=0 // pred_fallthru
    _
  // Predicated region
  $region18: #{encoder_rnn_forward.1} parent=0 // pred_check
    _
  $region19: #{encoder_rnn_forward.1} parent=0 // pred_check_branch
    %19 = sbr.rel (0) target = $region21
  $region20: #{encoder_rnn_forward.1} parent=0 // pred_region
    _
  $region21: #{encoder_rnn_forward.1} parent=0 // pred_fallthru
    _
  %v21 = vld [vmem:[%s0] sm:$0xf]
  %v22 = vld [vmem:[%s0 + $0x4] sm:$0xf]
  %v23 = vld [vmem:[%s0 + $0x8] sm:$0xf]
  %v24 = vld [vmem:[%s0 + $0xc] sm:$0xf]
  %v25 = vld [vmem:[%s0 + $0x10] sm:$0xf]
  %v26 = vld [vmem:[%s0 + $0x14] sm:$0xf]
  %v27 = vld [vmem:[%s0 + $0x18] sm:$0xf]
  %v28 = vld [vmem:[%s0 + $0x1c] sm:$0xf]
  %v29 = vld [vmem:[%s1] sm:$0xff]
  %v30 = vld [vmem:[%s1 + $0x8] sm:$0xff]
  %v31 = vld [vmem:[%s1 + $0x10] sm:$0xff]
  %v32 = vld [vmem:[%s1 + $0x18] sm:$0xff]
  %v33 = vld [vmem:[%s1 + $0x20] sm:$0xff]
  %v34 = vld [vmem:[%s1 + $0x28] sm:$0xff]
  %v35 = vld [vmem:[%s1 + $0x30] sm:$0xff]
  %v36 = vld [vmem:[%s1 + $0x38] sm:$0xff]
  %v37 = vld [vmem:[%s1 + $0x40] sm:$0xff]
  %v38 = vld [vmem:[%s1 + $0x48] sm:$0xff]
  %v39 = vld [vmem:[%s1 + $0x50] sm:$0xff]
  %v40 = vld [vmem:[%s1 + $0x58] sm:$0xff]
  %v41 = vld [vmem:[%s1 + $0x60] sm:$0xff]
  %v42 = vld [vmem:[%s1 + $0x68] sm:$0xff]
  %v43 = vld [vmem:[%s1 + $0x70] sm:$0xff]
  %v44 = vld [vmem:[%s1 + $0x78] sm:$0xff]
  %v45 = vld [vmem:[%s1 + $0x80] sm:$0xff]
  %v46 = vld [vmem:[%s1 + $0x88] sm:$0xff]
  %v47 = vld [vmem:[%s1 + $0x90] sm:$0xff]
  %v48 = vld [vmem:[%s1 + $0x98] sm:$0xff]
  %v49 = vld [vmem:[%s1 + $0xa0] sm:$0xff]
  %v50 = vld [vmem:[%s1 + $0xa8] sm:$0xff]
  %v51 = vld [vmem:[%s1 + $0xb0] sm:$0xff]
  %v52 = vld [vmem:[%s1 + $0xb8] sm:$0xff]
  %v53 = vld [vmem:[%s1 + $0xc0] sm:$0xff]
  %v54 = vld [vmem:[%s1 + $0xc8] sm:$0xff]
  %v55 = vld [vmem:[%s1 + $0xd0] sm:$0xff]
  %v56 = vld [vmem:[%s1 + $0xd8] sm:$0xff]
  %v57 = vld [vmem:[%s1 + $0xe0] sm:$0xff]
  %v58 = vld [vmem:[%s1 + $0xe8] sm:$0xff]
  %v59 = vld [vmem:[%s1 + $0xf0] sm:$0xff]
  %v60 = vld [vmem:[%s1 + $0xf8] sm:$0xff]
  %v61 = vld [vmem:[%s1 + $0x100] sm:$0xff]
  %v62 = vld [vmem:[%s1 + $0x108] sm:$0xff]
  %v63 = vld [vmem:[%s1 + $0x110] sm:$0xff]
  %v64 = vld [vmem:[%s1 + $0x118] sm:$0xff]
  %v65 = vld [vmem:[%s1 + $0x120] sm:$0xff]
  %v66 = vld [vmem:[%s1 + $0x128] sm:$0xff]
  %v67 = vld [vmem:[%s1 + $0x130] sm:$0xff]
  %v68 = vld [vmem:[%s1 + $0x138] sm:$0xff]
  %v69 = vld [vmem:[%s1 + $0x140] sm:$0xff]
  %v70 = vld [vmem:[%s1 + $0x148] sm:$0xff]
  %v71 = vld [vmem:[%s1 + $0x150] sm:$0xff]
  %v72 = vld [vmem:[%s1 + $0x158] sm:$0xff]
  %v73 = vld [vmem:[%s1 + $0x160] sm:$0xff]
  %v74 = vld [vmem:[%s1 + $0x168] sm:$0xff]
  %v75 = vld [vmem:[%s1 + $0x170] sm:$0xff]
  %v76 = vld [vmem:[%s1 + $0x178] sm:$0xff]
  %v77 = vld [vmem:[%s1 + $0x180] sm:$0xff]
  %v78 = vld [vmem:[%s1 + $0x188] sm:$0xff]
  %v79 = vld [vmem:[%s1 + $0x190] sm:$0xff]
  %v80 = vld [vmem:[%s1 + $0x198] sm:$0xff]
  %v81 = vld [vmem:[%s1 + $0x1a0] sm:$0xff]
  %v82 = vld [vmem:[%s1 + $0x1a8] sm:$0xff]
  %v83 = vld [vmem:[%s1 + $0x1b0] sm:$0xff]
  %v84 = vld [vmem:[%s1 + $0x1b8] sm:$0xff]
  %v85 = vld [vmem:[%s1 + $0x1c0] sm:$0xff]
  %v86 = vld [vmem:[%s1 + $0x1c8] sm:$0xff]
  %v87 = vld [vmem:[%s1 + $0x1d0] sm:$0xff]
  %v88 = vld [vmem:[%s1 + $0x1d8] sm:$0xff]
  %v89 = vld [vmem:[%s1 + $0x1e0] sm:$0xff]
  %v90 = vld [vmem:[%s1 + $0x1e8] sm:$0xff]
  %v91 = vld [vmem:[%s1 + $0x1f0] sm:$0xff]
  %v92 = vld [vmem:[%s1 + $0x1f8] sm:$0xff]
  %v93 = vld [vmem:[%s4] sm:$0xff]
  %v95 = vlaneseq
  %v96 = vshrl.u32 %v95, 7
  %v97 = vsub.s32 0, %v96
  %v98 = vrot.slane %v93, %v97
  %v99 = vlaneseq
  %v100 = vshrl.u32 %v99, 7
  %v101 = vsub.s32 1, %v100
  %v102 = vrot.slane %v93, %v101
  %v103 = vlaneseq
  %v104 = vshrl.u32 %v103, 7
  %v105 = vsub.s32 2, %v104
  %v106 = vrot.slane %v93, %v105
  %v107 = vlaneseq
  %v108 = vshrl.u32 %v107, 7
  %v109 = vsub.s32 3, %v108
  %v110 = vrot.slane %v93, %v109
  %v111 = vlaneseq
  %v112 = vshrl.u32 %v111, 7
  %v113 = vsub.s32 4, %v112
  %v114 = vrot.slane %v93, %v113
  %v115 = vlaneseq
  %v116 = vshrl.u32 %v115, 7
  %v117 = vsub.s32 5, %v116
  %v118 = vrot.slane %v93, %v117
  %v119 = vlaneseq
  %v120 = vshrl.u32 %v119, 7
  %v121 = vsub.s32 6, %v120
  %v122 = vrot.slane %v93, %v121
  %v123 = vlaneseq
  %v124 = vshrl.u32 %v123, 7
  %v125 = vsub.s32 7, %v124
  %v126 = vrot.slane %v93, %v125
  %v143 = vunpack.c.l.b16 %v21
  %v144 = vunpack.c.l.b16 %v22
  %v145 = vunpack.c.l.b16 %v23
  %v146 = vunpack.c.l.b16 %v24
  %v147 = vunpack.c.l.b16 %v25
  %v148 = vunpack.c.l.b16 %v26
  %v149 = vunpack.c.l.b16 %v27
  %v150 = vunpack.c.l.b16 %v28
  %v151 = vpack.c.b16 %v144, %v143
  %v152 = vpack.c.b16 %v146, %v145
  %v153 = vpack.c.b16 %v148, %v147
  %v154 = vpack.c.b16 %v150, %v149
  %v223 = vunpack.c.l.b16 %v29
  %v224 = vunpack.c.h.b16 %v29
  %v225 = vunpack.c.l.b16 %v30
  %v226 = vunpack.c.h.b16 %v30
  %v227 = vunpack.c.l.b16 %v31
  %v228 = vunpack.c.h.b16 %v31
  %v229 = vunpack.c.l.b16 %v32
  %v230 = vunpack.c.h.b16 %v32
  %v231 = vunpack.c.l.b16 %v33
  %v232 = vunpack.c.h.b16 %v33
  %v233 = vunpack.c.l.b16 %v34
  %v234 = vunpack.c.h.b16 %v34
  %v235 = vunpack.c.l.b16 %v35
  %v236 = vunpack.c.h.b16 %v35
  %v237 = vunpack.c.l.b16 %v36
  %v238 = vunpack.c.h.b16 %v36
  %v239 = vunpack.c.l.b16 %v37
  %v240 = vunpack.c.h.b16 %v37
  %v241 = vunpack.c.l.b16 %v38
  %v242 = vunpack.c.h.b16 %v38
  %v243 = vunpack.c.l.b16 %v39
  %v244 = vunpack.c.h.b16 %v39
  %v245 = vunpack.c.l.b16 %v40
  %v246 = vunpack.c.h.b16 %v40
  %v247 = vunpack.c.l.b16 %v41
  %v248 = vunpack.c.h.b16 %v41
  %v249 = vunpack.c.l.b16 %v42
  %v250 = vunpack.c.h.b16 %v42
  %v251 = vunpack.c.l.b16 %v43
  %v252 = vunpack.c.h.b16 %v43
  %v253 = vunpack.c.l.b16 %v44
  %v254 = vunpack.c.h.b16 %v44
  %v255 = vunpack.c.l.b16 %v45
  %v256 = vunpack.c.h.b16 %v45
  %v257 = vunpack.c.l.b16 %v46
  %v258 = vunpack.c.h.b16 %v46
  %v259 = vunpack.c.l.b16 %v47
  %v260 = vunpack.c.h.b16 %v47
  %v261 = vunpack.c.l.b16 %v48
  %v262 = vunpack.c.h.b16 %v48
  %v263 = vunpack.c.l.b16 %v49
  %v264 = vunpack.c.h.b16 %v49
  %v265 = vunpack.c.l.b16 %v50
  %v266 = vunpack.c.h.b16 %v50
  %v267 = vunpack.c.l.b16 %v51
  %v268 = vunpack.c.h.b16 %v51
  %v269 = vunpack.c.l.b16 %v52
  %v270 = vunpack.c.h.b16 %v52
  %v271 = vunpack.c.l.b16 %v53
  %v272 = vunpack.c.h.b16 %v53
  %v273 = vunpack.c.l.b16 %v54
  %v274 = vunpack.c.h.b16 %v54
  %v275 = vunpack.c.l.b16 %v55
  %v276 = vunpack.c.h.b16 %v55
  %v277 = vunpack.c.l.b16 %v56
  %v278 = vunpack.c.h.b16 %v56
  %v279 = vunpack.c.l.b16 %v57
  %v280 = vunpack.c.h.b16 %v57
  %v281 = vunpack.c.l.b16 %v58
  %v282 = vunpack.c.h.b16 %v58
  %v283 = vunpack.c.l.b16 %v59
  %v284 = vunpack.c.h.b16 %v59
  %v285 = vunpack.c.l.b16 %v60
  %v286 = vunpack.c.h.b16 %v60
  %v287 = vunpack.c.l.b16 %v61
  %v288 = vunpack.c.h.b16 %v61
  %v289 = vunpack.c.l.b16 %v62
  %v290 = vunpack.c.h.b16 %v62
  %v291 = vunpack.c.l.b16 %v63
  %v292 = vunpack.c.h.b16 %v63
  %v293 = vunpack.c.l.b16 %v64
  %v294 = vunpack.c.h.b16 %v64
  %v295 = vunpack.c.l.b16 %v65
  %v296 = vunpack.c.h.b16 %v65
  %v297 = vunpack.c.l.b16 %v66
  %v298 = vunpack.c.h.b16 %v66
  %v299 = vunpack.c.l.b16 %v67
  %v300 = vunpack.c.h.b16 %v67
  %v301 = vunpack.c.l.b16 %v68
  %v302 = vunpack.c.h.b16 %v68
  %v303 = vunpack.c.l.b16 %v69
  %v304 = vunpack.c.h.b16 %v69
  %v305 = vunpack.c.l.b16 %v70
  %v306 = vunpack.c.h.b16 %v70
  %v307 = vunpack.c.l.b16 %v71
  %v308 = vunpack.c.h.b16 %v71
  %v309 = vunpack.c.l.b16 %v72
  %v310 = vunpack.c.h.b16 %v72
  %v311 = vunpack.c.l.b16 %v73
  %v312 = vunpack.c.h.b16 %v73
  %v313 = vunpack.c.l.b16 %v74
  %v314 = vunpack.c.h.b16 %v74
  %v315 = vunpack.c.l.b16 %v75
  %v316 = vunpack.c.h.b16 %v75
  %v317 = vunpack.c.l.b16 %v76
  %v318 = vunpack.c.h.b16 %v76
  %v319 = vunpack.c.l.b16 %v77
  %v320 = vunpack.c.h.b16 %v77
  %v321 = vunpack.c.l.b16 %v78
  %v322 = vunpack.c.h.b16 %v78
  %v323 = vunpack.c.l.b16 %v79
  %v324 = vunpack.c.h.b16 %v79
  %v325 = vunpack.c.l.b16 %v80
  %v326 = vunpack.c.h.b16 %v80
  %v327 = vunpack.c.l.b16 %v81
  %v328 = vunpack.c.h.b16 %v81
  %v329 = vunpack.c.l.b16 %v82
  %v330 = vunpack.c.h.b16 %v82
  %v331 = vunpack.c.l.b16 %v83
  %v332 = vunpack.c.h.b16 %v83
  %v333 = vunpack.c.l.b16 %v84
  %v334 = vunpack.c.h.b16 %v84
  %v335 = vunpack.c.l.b16 %v85
  %v336 = vunpack.c.h.b16 %v85
  %v337 = vunpack.c.l.b16 %v86
  %v338 = vunpack.c.h.b16 %v86
  %v339 = vunpack.c.l.b16 %v87
  %v340 = vunpack.c.h.b16 %v87
  %v341 = vunpack.c.l.b16 %v88
  %v342 = vunpack.c.h.b16 %v88
  %v343 = vunpack.c.l.b16 %v89
  %v344 = vunpack.c.h.b16 %v89
  %v345 = vunpack.c.l.b16 %v90
  %v346 = vunpack.c.h.b16 %v90
  %v347 = vunpack.c.l.b16 %v91
  %v348 = vunpack.c.h.b16 %v91
  %v349 = vunpack.c.l.b16 %v92
  %v350 = vunpack.c.h.b16 %v92
  %v351 = vpack.c.b16 %v231, %v223
  %v352 = vpack.c.b16 %v232, %v224
  %v353 = vpack.c.b16 %v233, %v225
  %v354 = vpack.c.b16 %v234, %v226
  %v355 = vpack.c.b16 %v235, %v227
  %v356 = vpack.c.b16 %v236, %v228
  %v357 = vpack.c.b16 %v237, %v229
  %v358 = vpack.c.b16 %v238, %v230
  %v359 = vpack.c.b16 %v247, %v239
  %v360 = vpack.c.b16 %v248, %v240
  %v361 = vpack.c.b16 %v249, %v241
  %v362 = vpack.c.b16 %v250, %v242
  %v363 = vpack.c.b16 %v251, %v243
  %v364 = vpack.c.b16 %v252, %v244
  %v365 = vpack.c.b16 %v253, %v245
  %v366 = vpack.c.b16 %v254, %v246
  %v367 = vpack.c.b16 %v263, %v255
  %v368 = vpack.c.b16 %v264, %v256
  %v369 = vpack.c.b16 %v265, %v257
  %v370 = vpack.c.b16 %v266, %v258
  %v371 = vpack.c.b16 %v267, %v259
  %v372 = vpack.c.b16 %v268, %v260
  %v373 = vpack.c.b16 %v269, %v261
  %v374 = vpack.c.b16 %v270, %v262
  %v375 = vpack.c.b16 %v279, %v271
  %v376 = vpack.c.b16 %v280, %v272
  %v377 = vpack.c.b16 %v281, %v273
  %v378 = vpack.c.b16 %v282, %v274
  %v379 = vpack.c.b16 %v283, %v275
  %v380 = vpack.c.b16 %v284, %v276
  %v381 = vpack.c.b16 %v285, %v277
  %v382 = vpack.c.b16 %v286, %v278
  %v383 = vpack.c.b16 %v295, %v287
  %v384 = vpack.c.b16 %v296, %v288
  %v385 = vpack.c.b16 %v297, %v289
  %v386 = vpack.c.b16 %v298, %v290
  %v387 = vpack.c.b16 %v299, %v291
  %v388 = vpack.c.b16 %v300, %v292
  %v389 = vpack.c.b16 %v301, %v293
  %v390 = vpack.c.b16 %v302, %v294
  %v391 = vpack.c.b16 %v311, %v303
  %v392 = vpack.c.b16 %v312, %v304
  %v393 = vpack.c.b16 %v313, %v305
  %v394 = vpack.c.b16 %v314, %v306
  %v395 = vpack.c.b16 %v315, %v307
  %v396 = vpack.c.b16 %v316, %v308
  %v397 = vpack.c.b16 %v317, %v309
  %v398 = vpack.c.b16 %v318, %v310
  %v399 = vpack.c.b16 %v327, %v319
  %v400 = vpack.c.b16 %v328, %v320
  %v401 = vpack.c.b16 %v329, %v321
  %v402 = vpack.c.b16 %v330, %v322
  %v403 = vpack.c.b16 %v331, %v323
  %v404 = vpack.c.b16 %v332, %v324
  %v405 = vpack.c.b16 %v333, %v325
  %v406 = vpack.c.b16 %v334, %v326
  %v407 = vpack.c.b16 %v343, %v335
  %v408 = vpack.c.b16 %v344, %v336
  %v409 = vpack.c.b16 %v345, %v337
  %v410 = vpack.c.b16 %v346, %v338
  %v411 = vpack.c.b16 %v347, %v339
  %v412 = vpack.c.b16 %v348, %v340
  %v413 = vpack.c.b16 %v349, %v341
  %v414 = vpack.c.b16 %v350, %v342
  %479 = vmatprep.subr.bf16.mxu0 %v352
  %480 = vmatpush1.bf16.msra.mxu0 %v351
  %481 = vmatprep.subr.bf16.mxu0 %v360
  %482 = vmatpush1.bf16.msra.mxu0 %v359
  %483 = vmatprep.subr.bf16.mxu0 %v368
  %484 = vmatpush1.bf16.msra.mxu0 %v367
  %485 = vmatprep.subr.bf16.mxu0 %v376
  %486 = vmatpush1.bf16.msra.mxu0 %v375
  %487 = vmatprep.subr.bf16.mxu0 %v384
  %488 = vmatpush1.bf16.msra.mxu0 %v383
  %489 = vmatprep.subr.bf16.mxu0 %v392
  %490 = vmatpush1.bf16.msra.mxu0 %v391
  %491 = vmatprep.subr.bf16.mxu0 %v400
  %492 = vmatpush1.bf16.msra.mxu0 %v399
  %493 = vmatprep.subr.bf16.mxu0 %v408
  %494 = vmatpush1.bf16.msra.mxu0 %v407
  %495 = vmatprep.subr.bf16.mxu0 0
  %496 = vmatpush1.bf16.msra.mxu0 0
  %497 = vmatprep.subr.bf16.mxu0 0
  %498 = vmatpush1.bf16.msra.mxu0 0
  %499 = vmatprep.subr.bf16.mxu0 0
  %500 = vmatpush1.bf16.msra.mxu0 0
  %501 = vmatprep.subr.bf16.mxu0 0
  %502 = vmatpush1.bf16.msra.mxu0 0
  %503 = vmatprep.subr.bf16.mxu0 0
  %504 = vmatpush1.bf16.msra.mxu0 0
  %505 = vmatprep.subr.bf16.mxu0 0
  %506 = vmatpush1.bf16.msra.mxu0 0
  %507 = vmatprep.subr.bf16.mxu0 0
  %508 = vmatpush1.bf16.msra.mxu0 0
  %509 = vmatprep.subr.bf16.mxu0 0
  %510 = vmatpush1.bf16.msra.mxu0 0
  %511 = vmatprep.mubr.bf16.mxu0 0
  %512 = vmatmul.mubr.bf16.gmra.mrb[0].mxu0 %v151
  %v513 = vpop.f32.mrb[0].mxu0
  %v514 = vadd.f32 %v98, %v513
  %v515 = vpop.f32.mrb[0].mxu0
  %v516 = vadd.f32 %v102, %v515
  %v517 = vpop.f32.mrb[0].mxu0
  %v518 = vadd.f32 %v98, %v517
  %v519 = vpop.f32.mrb[0].mxu0
  %v520 = vadd.f32 %v102, %v519
  %521 = vmatprep.mubr.bf16.mxu0 0
  %522 = vmatmul.mubr.bf16.gmra.mrb[0].mxu0 %v152
  %v523 = vpop.f32.mrb[0].mxu0
  %v524 = vadd.f32 %v98, %v523
  %v525 = vpop.f32.mrb[0].mxu0
  %v526 = vadd.f32 %v102, %v525
  %v527 = vpop.f32.mrb[0].mxu0
  %v528 = vadd.f32 %v98, %v527
  %v529 = vpop.f32.mrb[0].mxu0
  %v530 = vadd.f32 %v102, %v529
  %531 = vmatprep.mubr.bf16.mxu0 0
  %532 = vmatmul.mubr.bf16.gmra.mrb[0].mxu0 %v153
  %v533 = vpop.f32.mrb[0].mxu0
  %v534 = vadd.f32 %v98, %v533
  %v535 = vpop.f32.mrb[0].mxu0
  %v536 = vadd.f32 %v102, %v535
  %v537 = vpop.f32.mrb[0].mxu0
  %v538 = vadd.f32 %v98, %v537
  %v539 = vpop.f32.mrb[0].mxu0
  %v540 = vadd.f32 %v102, %v539
  %541 = vmatprep.mubr.bf16.mxu0 0
  %542 = vmatmul.mubr.bf16.gmra.mrb[0].mxu0 %v154
  %v543 = vpop.f32.mrb[0].mxu0
  %v544 = vadd.f32 %v98, %v543
  %v545 = vpop.f32.mrb[0].mxu0
  %v546 = vadd.f32 %v102, %v545
  %v547 = vpop.f32.mrb[0].mxu0
  %v548 = vadd.f32 %v98, %v547
  %v549 = vpop.f32.mrb[0].mxu0
  %v550 = vadd.f32 %v102, %v549
  %551 = vdwg.mxu0
  %552 = vmatprep.subr.bf16.mxu0 %v354
  %553 = vmatpush1.bf16.msra.mxu0 %v353
  %554 = vmatprep.subr.bf16.mxu0 %v362
  %555 = vmatpush1.bf16.msra.mxu0 %v361
  %556 = vmatprep.subr.bf16.mxu0 %v370
  %557 = vmatpush1.bf16.msra.mxu0 %v369
  %558 = vmatprep.subr.bf16.mxu0 %v378
  %559 = vmatpush1.bf16.msra.mxu0 %v377
  %560 = vmatprep.subr.bf16.mxu0 %v386
  %561 = vmatpush1.bf16.msra.mxu0 %v385
  %562 = vmatprep.subr.bf16.mxu0 %v394
  %563 = vmatpush1.bf16.msra.mxu0 %v393
  %564 = vmatprep.subr.bf16.mxu0 %v402
  %565 = vmatpush1.bf16.msra.mxu0 %v401
  %566 = vmatprep.subr.bf16.mxu0 %v410
  %567 = vmatpush1.bf16.msra.mxu0 %v409
  %568 = vmatprep.subr.bf16.mxu0 0
  %569 = vmatpush1.bf16.msra.mxu0 0
  %570 = vmatprep.subr.bf16.mxu0 0
  %571 = vmatpush1.bf16.msra.mxu0 0
  %572 = vmatprep.subr.bf16.mxu0 0
  %573 = vmatpush1.bf16.msra.mxu0 0
  %574 = vmatprep.subr.bf16.mxu0 0
  %575 = vmatpush1.bf16.msra.mxu0 0
  %576 = vmatprep.subr.bf16.mxu0 0
  %577 = vmatpush1.bf16.msra.mxu0 0
  %578 = vmatprep.subr.bf16.mxu0 0
  %579 = vmatpush1.bf16.msra.mxu0 0
  %580 = vmatprep.subr.bf16.mxu0 0
  %581 = vmatpush1.bf16.msra.mxu0 0
  %582 = vmatprep.subr.bf16.mxu0 0
  %583 = vmatpush1.bf16.msra.mxu0 0
  %584 = vmatprep.mubr.bf16.mxu0 0
  %585 = vmatmul.mubr.bf16.gmra.mrb[0].mxu0 %v151
  %v586 = vpop.f32.mrb[0].mxu0
  %v587 = vadd.f32 %v106, %v586
  %v588 = vpop.f32.mrb[0].mxu0
  %v589 = vadd.f32 %v110, %v588
  %v590 = vpop.f32.mrb[0].mxu0
  %v591 = vadd.f32 %v106, %v590
  %v592 = vpop.f32.mrb[0].mxu0
  %v593 = vadd.f32 %v110, %v592
  %594 = vmatprep.mubr.bf16.mxu0 0
  %595 = vmatmul.mubr.bf16.gmra.mrb[0].mxu0 %v152
  %v596 = vpop.f32.mrb[0].mxu0
  %v597 = vadd.f32 %v106, %v596
  %v598 = vpop.f32.mrb[0].mxu0
  %v599 = vadd.f32 %v110, %v598
  %v600 = vpop.f32.mrb[0].mxu0
  %v601 = vadd.f32 %v106, %v600
  %v602 = vpop.f32.mrb[0].mxu0
  %v603 = vadd.f32 %v110, %v602
  %604 = vmatprep.mubr.bf16.mxu0 0
  %605 = vmatmul.mubr.bf16.gmra.mrb[0].mxu0 %v153
  %v606 = vpop.f32.mrb[0].mxu0
  %v607 = vadd.f32 %v106, %v606
  %v608 = vpop.f32.mrb[0].mxu0
  %v609 = vadd.f32 %v110, %v608
  %v610 = vpop.f32.mrb[0].mxu0
  %v611 = vadd.f32 %v106, %v610
  %v612 = vpop.f32.mrb[0].mxu0
  %v613 = vadd.f32 %v110, %v612
  %614 = vmatprep.mubr.bf16.mxu0 0
  %615 = vmatmul.mubr.bf16.gmra.mrb[0].mxu0 %v154
  %v616 = vpop.f32.mrb[0].mxu0
  %v617 = vadd.f32 %v106, %v616
  %v618 = vpop.f32.mrb[0].mxu0
  %v619 = vadd.f32 %v110, %v618
  %v620 = vpop.f32.mrb[0].mxu0
  %v621 = vadd.f32 %v106, %v620
  %v622 = vpop.f32.mrb[0].mxu0
  %v623 = vadd.f32 %v110, %v622
  %624 = vdwg.mxu0
  %625 = vmatprep.subr.bf16.mxu0 %v356
  %626 = vmatpush1.bf16.msra.mxu0 %v355
  %627 = vmatprep.subr.bf16.mxu0 %v364
  %628 = vmatpush1.bf16.msra.mxu0 %v363
  %629 = vmatprep.subr.bf16.mxu0 %v372
  %630 = vmatpush1.bf16.msra.mxu0 %v371
  %631 = vmatprep.subr.bf16.mxu0 %v380
  %632 = vmatpush1.bf16.msra.mxu0 %v379
  %633 = vmatprep.subr.bf16.mxu0 %v388
  %634 = vmatpush1.bf16.msra.mxu0 %v387
  %635 = vmatprep.subr.bf16.mxu0 %v396
  %636 = vmatpush1.bf16.msra.mxu0 %v395
  %637 = vmatprep.subr.bf16.mxu0 %v404
  %638 = vmatpush1.bf16.msra.mxu0 %v403
  %639 = vmatprep.subr.bf16.mxu0 %v412
  %640 = vmatpush1.bf16.msra.mxu0 %v411
  %641 = vmatprep.subr.bf16.mxu0 0
  %642 = vmatpush1.bf16.msra.mxu0 0
  %643 = vmatprep.subr.bf16.mxu0 0
  %644 = vmatpush1.bf16.msra.mxu0 0
  %645 = vmatprep.subr.bf16.mxu0 0
  %646 = vmatpush1.bf16.msra.mxu0 0
  %647 = vmatprep.subr.bf16.mxu0 0
  %648 = vmatpush1.bf16.msra.mxu0 0
  %649 = vmatprep.subr.bf16.mxu0 0
  %650 = vmatpush1.bf16.msra.mxu0 0
  %651 = vmatprep.subr.bf16.mxu0 0
  %652 = vmatpush1.bf16.msra.mxu0 0
  %653 = vmatprep.subr.bf16.mxu0 0
  %654 = vmatpush1.bf16.msra.mxu0 0
  %655 = vmatprep.subr.bf16.mxu0 0
  %656 = vmatpush1.bf16.msra.mxu0 0
  %657 = vmatprep.mubr.bf16.mxu0 0
  %658 = vmatmul.mubr.bf16.gmra.mrb[0].mxu0 %v151
  %v659 = vpop.f32.mrb[0].mxu0
  %v660 = vadd.f32 %v114, %v659
  %v661 = vpop.f32.mrb[0].mxu0
  %v662 = vadd.f32 %v118, %v661
  %v663 = vpop.f32.mrb[0].mxu0
  %v664 = vadd.f32 %v114, %v663
  %v665 = vpop.f32.mrb[0].mxu0
  %v666 = vadd.f32 %v118, %v665
  %667 = vmatprep.mubr.bf16.mxu0 0
  %668 = vmatmul.mubr.bf16.gmra.mrb[0].mxu0 %v152
  %v669 = vpop.f32.mrb[0].mxu0
  %v670 = vadd.f32 %v114, %v669
  %v671 = vpop.f32.mrb[0].mxu0
  %v672 = vadd.f32 %v118, %v671
  %v673 = vpop.f32.mrb[0].mxu0
  %v674 = vadd.f32 %v114, %v673
  %v675 = vpop.f32.mrb[0].mxu0
  %v676 = vadd.f32 %v118, %v675
  %677 = vmatprep.mubr.bf16.mxu0 0
  %678 = vmatmul.mubr.bf16.gmra.mrb[0].mxu0 %v153
  %v679 = vpop.f32.mrb[0].mxu0
  %v680 = vadd.f32 %v114, %v679
  %v681 = vpop.f32.mrb[0].mxu0
  %v682 = vadd.f32 %v118, %v681
  %v683 = vpop.f32.mrb[0].mxu0
  %v684 = vadd.f32 %v114, %v683
  %v685 = vpop.f32.mrb[0].mxu0
  %v686 = vadd.f32 %v118, %v685
  %687 = vmatprep.mubr.bf16.mxu0 0
  %688 = vmatmul.mubr.bf16.gmra.mrb[0].mxu0 %v154
  %v689 = vpop.f32.mrb[0].mxu0
  %v690 = vadd.f32 %v114, %v689
  %v691 = vpop.f32.mrb[0].mxu0
  %v692 = vadd.f32 %v118, %v691
  %v693 = vpop.f32.mrb[0].mxu0
  %v694 = vadd.f32 %v114, %v693
  %v695 = vpop.f32.mrb[0].mxu0
  %v696 = vadd.f32 %v118, %v695
  %697 = vdwg.mxu0
  %698 = vmatprep.subr.bf16.mxu0 %v358
  %699 = vmatpush1.bf16.msra.mxu0 %v357
  %700 = vmatprep.subr.bf16.mxu0 %v366
  %701 = vmatpush1.bf16.msra.mxu0 %v365
  %702 = vmatprep.subr.bf16.mxu0 %v374
  %703 = vmatpush1.bf16.msra.mxu0 %v373
  %704 = vmatprep.subr.bf16.mxu0 %v382
  %705 = vmatpush1.bf16.msra.mxu0 %v381
  %706 = vmatprep.subr.bf16.mxu0 %v390
  %707 = vmatpush1.bf16.msra.mxu0 %v389
  %708 = vmatprep.subr.bf16.mxu0 %v398
  %709 = vmatpush1.bf16.msra.mxu0 %v397
  %710 = vmatprep.subr.bf16.mxu0 %v406
  %711 = vmatpush1.bf16.msra.mxu0 %v405
  %712 = vmatprep.subr.bf16.mxu0 %v414
  %713 = vmatpush1.bf16.msra.mxu0 %v413
  %714 = vmatprep.subr.bf16.mxu0 0
  %715 = vmatpush1.bf16.msra.mxu0 0
  %716 = vmatprep.subr.bf16.mxu0 0
  %717 = vmatpush1.bf16.msra.mxu0 0
  %718 = vmatprep.subr.bf16.mxu0 0
  %719 = vmatpush1.bf16.msra.mxu0 0
  %720 = vmatprep.subr.bf16.mxu0 0
  %721 = vmatpush1.bf16.msra.mxu0 0
  %722 = vmatprep.subr.bf16.mxu0 0
  %723 = vmatpush1.bf16.msra.mxu0 0
  %724 = vmatprep.subr.bf16.mxu0 0
  %725 = vmatpush1.bf16.msra.mxu0 0
  %726 = vmatprep.subr.bf16.mxu0 0
  %727 = vmatpush1.bf16.msra.mxu0 0
  %728 = vmatprep.subr.bf16.mxu0 0
  %729 = vmatpush1.bf16.msra.mxu0 0
  %730 = vmatprep.mubr.bf16.mxu0 0
  %731 = vmatmul.mubr.bf16.gmra.mrb[0].mxu0 %v151
  %v732 = vpop.f32.mrb[0].mxu0
  %v733 = vadd.f32 %v122, %v732
  %v734 = vpop.f32.mrb[0].mxu0
  %v735 = vadd.f32 %v126, %v734
  %v736 = vpop.f32.mrb[0].mxu0
  %v737 = vadd.f32 %v122, %v736
  %v738 = vpop.f32.mrb[0].mxu0
  %v739 = vadd.f32 %v126, %v738
  %740 = vmatprep.mubr.bf16.mxu0 0
  %741 = vmatmul.mubr.bf16.gmra.mrb[0].mxu0 %v152
  %v742 = vpop.f32.mrb[0].mxu0
  %v743 = vadd.f32 %v122, %v742
  %v744 = vpop.f32.mrb[0].mxu0
  %v745 = vadd.f32 %v126, %v744
  %v746 = vpop.f32.mrb[0].mxu0
  %v747 = vadd.f32 %v122, %v746
  %v748 = vpop.f32.mrb[0].mxu0
  %v749 = vadd.f32 %v126, %v748
  %750 = vmatprep.mubr.bf16.mxu0 0
  %751 = vmatmul.mubr.bf16.gmra.mrb[0].mxu0 %v153
  %v752 = vpop.f32.mrb[0].mxu0
  %v753 = vadd.f32 %v122, %v752
  %v754 = vpop.f32.mrb[0].mxu0
  %v755 = vadd.f32 %v126, %v754
  %v756 = vpop.f32.mrb[0].mxu0
  %v757 = vadd.f32 %v122, %v756
  %v758 = vpop.f32.mrb[0].mxu0
  %v759 = vadd.f32 %v126, %v758
  %760 = vmatprep.mubr.bf16.mxu0 0
  %761 = vmatmul.mubr.bf16.gmra.mrb[0].mxu0 %v154
  %v762 = vpop.f32.mrb[0].mxu0
  %v763 = vadd.f32 %v122, %v762
  %v764 = vpop.f32.mrb[0].mxu0
  %v765 = vadd.f32 %v126, %v764
  %v766 = vpop.f32.mrb[0].mxu0
  %v767 = vadd.f32 %v122, %v766
  %v768 = vpop.f32.mrb[0].mxu0
  %v769 = vadd.f32 %v126, %v768
  %770 = vdwg.mxu0
  %771 = vst [vmem:[#allocation2] sm:$0xff] %v514
  %772 = vst [vmem:[#allocation2 + $0x8] sm:$0xff] %v516
  %773 = vst [vmem:[#allocation2 + $0x10] sm:$0xff] %v587
  %774 = vst [vmem:[#allocation2 + $0x18] sm:$0xff] %v589
  %775 = vst [vmem:[#allocation2 + $0x20] sm:$0xff] %v518
  %776 = vst [vmem:[#allocation2 + $0x28] sm:$0xff] %v520
  %777 = vst [vmem:[#allocation2 + $0x30] sm:$0xff] %v591
  %778 = vst [vmem:[#allocation2 + $0x38] sm:$0xff] %v593
  %779 = vst [vmem:[#allocation2 + $0x40] sm:$0xff] %v524
  %780 = vst [vmem:[#allocation2 + $0x48] sm:$0xff] %v526
  %781 = vst [vmem:[#allocation2 + $0x50] sm:$0xff] %v597
  %782 = vst [vmem:[#allocation2 + $0x58] sm:$0xff] %v599
  %783 = vst [vmem:[#allocation2 + $0x60] sm:$0xff] %v528
  %784 = vst [vmem:[#allocation2 + $0x68] sm:$0xff] %v530
  %785 = vst [vmem:[#allocation2 + $0x70] sm:$0xff] %v601
  %786 = vst [vmem:[#allocation2 + $0x78] sm:$0xff] %v603
  %787 = vst [vmem:[#allocation2 + $0x80] sm:$0xff] %v534
  %788 = vst [vmem:[#allocation2 + $0x88] sm:$0xff] %v536
  %789 = vst [vmem:[#allocation2 + $0x90] sm:$0xff] %v607
  %790 = vst [vmem:[#allocation2 + $0x98] sm:$0xff] %v609
  %791 = vst [vmem:[#allocation2 + $0xa0] sm:$0xff] %v538
  %792 = vst [vmem:[#allocation2 + $0xa8] sm:$0xff] %v540
  %793 = vst [vmem:[#allocation2 + $0xb0] sm:$0xff] %v611
  %794 = vst [vmem:[#allocation2 + $0xb8] sm:$0xff] %v613
  %795 = vst [vmem:[#allocation2 + $0xc0] sm:$0xff] %v544
  %796 = vst [vmem:[#allocation2 + $0xc8] sm:$0xff] %v546
  %797 = vst [vmem:[#allocation2 + $0xd0] sm:$0xff] %v617
  %798 = vst [vmem:[#allocation2 + $0xd8] sm:$0xff] %v619
  %799 = vst [vmem:[#allocation2 + $0xe0] sm:$0xff] %v548
  %800 = vst [vmem:[#allocation2 + $0xe8] sm:$0xff] %v550
  %801 = vst [vmem:[#allocation2 + $0xf0] sm:$0xff] %v621
  %802 = vst [vmem:[#allocation2 + $0xf8] sm:$0xff] %v623
  %803 = vst [vmem:[#allocation3] sm:$0xff] %v660
  %804 = vst [vmem:[#allocation3 + $0x8] sm:$0xff] %v662
  %805 = vst [vmem:[#allocation3 + $0x10] sm:$0xff] %v733
  %806 = vst [vmem:[#allocation3 + $0x18] sm:$0xff] %v735
  %807 = vst [vmem:[#allocation3 + $0x20] sm:$0xff] %v664
  %808 = vst [vmem:[#allocation3 + $0x28] sm:$0xff] %v666
  %809 = vst [vmem:[#allocation3 + $0x30] sm:$0xff] %v737
  %810 = vst [vmem:[#allocation3 + $0x38] sm:$0xff] %v739
  %811 = vst [vmem:[#allocation3 + $0x40] sm:$0xff] %v670
  %812 = vst [vmem:[#allocation3 + $0x48] sm:$0xff] %v672
  %813 = vst [vmem:[#allocation3 + $0x50] sm:$0xff] %v743
  %814 = vst [vmem:[#allocation3 + $0x58] sm:$0xff] %v745
  %815 = vst [vmem:[#allocation3 + $0x60] sm:$0xff] %v674
  %816 = vst [vmem:[#allocation3 + $0x68] sm:$0xff] %v676
  %817 = vst [vmem:[#allocation3 + $0x70] sm:$0xff] %v747
  %818 = vst [vmem:[#allocation3 + $0x78] sm:$0xff] %v749
  %819 = vst [vmem:[#allocation3 + $0x80] sm:$0xff] %v680
  %820 = vst [vmem:[#allocation3 + $0x88] sm:$0xff] %v682
  %821 = vst [vmem:[#allocation3 + $0x90] sm:$0xff] %v753
  %822 = vst [vmem:[#allocation3 + $0x98] sm:$0xff] %v755
  %823 = vst [vmem:[#allocation3 + $0xa0] sm:$0xff] %v684
  %824 = vst [vmem:[#allocation3 + $0xa8] sm:$0xff] %v686
  %825 = vst [vmem:[#allocation3 + $0xb0] sm:$0xff] %v757
  %826 = vst [vmem:[#allocation3 + $0xb8] sm:$0xff] %v759
  %827 = vst [vmem:[#allocation3 + $0xc0] sm:$0xff] %v690
  %828 = vst [vmem:[#allocation3 + $0xc8] sm:$0xff] %v692
  %829 = vst [vmem:[#allocation3 + $0xd0] sm:$0xff] %v763
  %830 = vst [vmem:[#allocation3 + $0xd8] sm:$0xff] %v765
  %831 = vst [vmem:[#allocation3 + $0xe0] sm:$0xff] %v694
  %832 = vst [vmem:[#allocation3 + $0xe8] sm:$0xff] %v696
  %833 = vst [vmem:[#allocation3 + $0xf0] sm:$0xff] %v767
  %834 = vst [vmem:[#allocation3 + $0xf8] sm:$0xff] %v769
  %v835 = vld [vmem:[%s2] sm:$0xff]
  %v836 = vld [vmem:[%s2 + $0x8] sm:$0xff]
  %v837 = vld [vmem:[%s2 + $0x10] sm:$0xff]
  %v838 = vld [vmem:[%s2 + $0x18] sm:$0xff]
  %v839 = vld [vmem:[%s2 + $0x20] sm:$0xff]
  %v840 = vld [vmem:[%s2 + $0x28] sm:$0xff]
  %v841 = vld [vmem:[%s2 + $0x30] sm:$0xff]
  %v842 = vld [vmem:[%s2 + $0x38] sm:$0xff]
  %v843 = vld [vmem:[%s2 + $0x40] sm:$0xff]
  %v844 = vld [vmem:[%s2 + $0x48] sm:$0xff]
  %v845 = vld [vmem:[%s2 + $0x50] sm:$0xff]
  %v846 = vld [vmem:[%s2 + $0x58] sm:$0xff]
  %v847 = vld [vmem:[%s2 + $0x60] sm:$0xff]
  %v848 = vld [vmem:[%s2 + $0x68] sm:$0xff]
  %v849 = vld [vmem:[%s2 + $0x70] sm:$0xff]
  %v850 = vld [vmem:[%s2 + $0x78] sm:$0xff]
  %v851 = vld [vmem:[%s2 + $0x80] sm:$0xff]
  %v852 = vld [vmem:[%s2 + $0x88] sm:$0xff]
  %v853 = vld [vmem:[%s2 + $0x90] sm:$0xff]
  %v854 = vld [vmem:[%s2 + $0x98] sm:$0xff]
  %v855 = vld [vmem:[%s2 + $0xa0] sm:$0xff]
  %v856 = vld [vmem:[%s2 + $0xa8] sm:$0xff]
  %v857 = vld [vmem:[%s2 + $0xb0] sm:$0xff]
  %v858 = vld [vmem:[%s2 + $0xb8] sm:$0xff]
  %v859 = vld [vmem:[%s2 + $0xc0] sm:$0xff]
  %v860 = vld [vmem:[%s2 + $0xc8] sm:$0xff]
  %v861 = vld [vmem:[%s2 + $0xd0] sm:$0xff]
  %v862 = vld [vmem:[%s2 + $0xd8] sm:$0xff]
  %v863 = vld [vmem:[%s2 + $0xe0] sm:$0xff]
  %v864 = vld [vmem:[%s2 + $0xe8] sm:$0xff]
  %v865 = vld [vmem:[%s2 + $0xf0] sm:$0xff]
  %v866 = vld [vmem:[%s2 + $0xf8] sm:$0xff]
  %v867 = vld [vmem:[%s3] sm:$0xff]
  %v868 = vld [vmem:[%s3 + $0x8] sm:$0xff]
  %v869 = vld [vmem:[%s3 + $0x10] sm:$0xff]
  %v870 = vld [vmem:[%s3 + $0x18] sm:$0xff]
  %v871 = vld [vmem:[%s3 + $0x20] sm:$0xff]
  %v872 = vld [vmem:[%s3 + $0x28] sm:$0xff]
  %v873 = vld [vmem:[%s3 + $0x30] sm:$0xff]
  %v874 = vld [vmem:[%s3 + $0x38] sm:$0xff]
  %v875 = vld [vmem:[%s3 + $0x40] sm:$0xff]
  %v876 = vld [vmem:[%s3 + $0x48] sm:$0xff]
  %v877 = vld [vmem:[%s3 + $0x50] sm:$0xff]
  %v878 = vld [vmem:[%s3 + $0x58] sm:$0xff]
  %v879 = vld [vmem:[%s3 + $0x60] sm:$0xff]
  %v880 = vld [vmem:[%s3 + $0x68] sm:$0xff]
  %v881 = vld [vmem:[%s3 + $0x70] sm:$0xff]
  %v882 = vld [vmem:[%s3 + $0x78] sm:$0xff]
  %v883 = vld [vmem:[%s3 + $0x80] sm:$0xff]
  %v884 = vld [vmem:[%s3 + $0x88] sm:$0xff]
  %v885 = vld [vmem:[%s3 + $0x90] sm:$0xff]
  %v886 = vld [vmem:[%s3 + $0x98] sm:$0xff]
  %v887 = vld [vmem:[%s3 + $0xa0] sm:$0xff]
  %v888 = vld [vmem:[%s3 + $0xa8] sm:$0xff]
  %v889 = vld [vmem:[%s3 + $0xb0] sm:$0xff]
  %v890 = vld [vmem:[%s3 + $0xb8] sm:$0xff]
  %v891 = vld [vmem:[%s3 + $0xc0] sm:$0xff]
  %v892 = vld [vmem:[%s3 + $0xc8] sm:$0xff]
  %v893 = vld [vmem:[%s3 + $0xd0] sm:$0xff]
  %v894 = vld [vmem:[%s3 + $0xd8] sm:$0xff]
  %v895 = vld [vmem:[%s3 + $0xe0] sm:$0xff]
  %v896 = vld [vmem:[%s3 + $0xe8] sm:$0xff]
  %v897 = vld [vmem:[%s3 + $0xf0] sm:$0xff]
  %v898 = vld [vmem:[%s3 + $0xf8] sm:$0xff]
  %s899 = smul.u32 0, 4
  %s900 = smul.addr %s899, 8
  %s901 = scalar_lea.vmem [#allocation2], %s900
  %v902 = vld [vmem:[%s901] sm:$0xff]
  %v903 = vld [vmem:[%s901 + $0x8] sm:$0xff]
  %v904 = vld [vmem:[%s901 + $0x10] sm:$0xff]
  %v905 = vld [vmem:[%s901 + $0x18] sm:$0xff]
  %v938 = vunpack.c.l.b16 %v835
  %v939 = vunpack.c.h.b16 %v835
  %v940 = vunpack.c.l.b16 %v836
  %v941 = vunpack.c.h.b16 %v836
  %v942 = vunpack.c.l.b16 %v837
  %v943 = vunpack.c.h.b16 %v837
  %v944 = vunpack.c.l.b16 %v838
  %v945 = vunpack.c.h.b16 %v838
  %v946 = vunpack.c.l.b16 %v839
  %v947 = vunpack.c.h.b16 %v839
  %v948 = vunpack.c.l.b16 %v840
  %v949 = vunpack.c.h.b16 %v840
  %v950 = vunpack.c.l.b16 %v841
  %v951 = vunpack.c.h.b16 %v841
  %v952 = vunpack.c.l.b16 %v842
  %v953 = vunpack.c.h.b16 %v842
  %v954 = vunpack.c.l.b16 %v843
  %v955 = vunpack.c.h.b16 %v843
  %v956 = vunpack.c.l.b16 %v844
  %v957 = vunpack.c.h.b16 %v844
  %v958 = vunpack.c.l.b16 %v845
  %v959 = vunpack.c.h.b16 %v845
  %v960 = vunpack.c.l.b16 %v846
  %v961 = vunpack.c.h.b16 %v846
  %v962 = vunpack.c.l.b16 %v847
  %v963 = vunpack.c.h.b16 %v847
  %v964 = vunpack.c.l.b16 %v848
  %v965 = vunpack.c.h.b16 %v848
  %v966 = vunpack.c.l.b16 %v849
  %v967 = vunpack.c.h.b16 %v849
  %v968 = vunpack.c.l.b16 %v850
  %v969 = vunpack.c.h.b16 %v850
  %v970 = vunpack.c.l.b16 %v851
  %v971 = vunpack.c.h.b16 %v851
  %v972 = vunpack.c.l.b16 %v852
  %v973 = vunpack.c.h.b16 %v852
  %v974 = vunpack.c.l.b16 %v853
  %v975 = vunpack.c.h.b16 %v853
  %v976 = vunpack.c.l.b16 %v854
  %v977 = vunpack.c.h.b16 %v854
  %v978 = vunpack.c.l.b16 %v855
  %v979 = vunpack.c.h.b16 %v855
  %v980 = vunpack.c.l.b16 %v856
  %v981 = vunpack.c.h.b16 %v856
  %v982 = vunpack.c.l.b16 %v857
  %v983 = vunpack.c.h.b16 %v857
  %v984 = vunpack.c.l.b16 %v858
  %v985 = vunpack.c.h.b16 %v858
  %v986 = vunpack.c.l.b16 %v859
  %v987 = vunpack.c.h.b16 %v859
  %v988 = vunpack.c.l.b16 %v860
  %v989 = vunpack.c.h.b16 %v860
  %v990 = vunpack.c.l.b16 %v861
  %v991 = vunpack.c.h.b16 %v861
  %v992 = vunpack.c.l.b16 %v862
  %v993 = vunpack.c.h.b16 %v862
  %v994 = vunpack.c.l.b16 %v863
  %v995 = vunpack.c.h.b16 %v863
  %v996 = vunpack.c.l.b16 %v864
  %v997 = vunpack.c.h.b16 %v864
  %v998 = vunpack.c.l.b16 %v865
  %v999 = vunpack.c.h.b16 %v865
  %v1000 = vunpack.c.l.b16 %v866
  %v1001 = vunpack.c.h.b16 %v866
  %v1002 = vpack.c.b16 %v942, %v938
  %v1003 = vpack.c.b16 %v943, %v939
  %v1004 = vpack.c.b16 %v944, %v940
  %v1005 = vpack.c.b16 %v945, %v941
  %v1006 = vpack.c.b16 %v950, %v946
  %v1007 = vpack.c.b16 %v951, %v947
  %v1008 = vpack.c.b16 %v952, %v948
  %v1009 = vpack.c.b16 %v953, %v949
  %v1010 = vpack.c.b16 %v958, %v954
  %v1011 = vpack.c.b16 %v959, %v955
  %v1012 = vpack.c.b16 %v960, %v956
  %v1013 = vpack.c.b16 %v961, %v957
  %v1014 = vpack.c.b16 %v966, %v962
  %v1015 = vpack.c.b16 %v967, %v963
  %v1016 = vpack.c.b16 %v968, %v964
  %v1017 = vpack.c.b16 %v969, %v965
  %v1018 = vpack.c.b16 %v974, %v970
  %v1019 = vpack.c.b16 %v975, %v971
  %v1020 = vpack.c.b16 %v976, %v972
  %v1021 = vpack.c.b16 %v977, %v973
  %v1022 = vpack.c.b16 %v982, %v978
  %v1023 = vpack.c.b16 %v983, %v979
  %v1024 = vpack.c.b16 %v984, %v980
  %v1025 = vpack.c.b16 %v985, %v981
  %v1026 = vpack.c.b16 %v990, %v986
  %v1027 = vpack.c.b16 %v991, %v987
  %v1028 = vpack.c.b16 %v992, %v988
  %v1029 = vpack.c.b16 %v993, %v989
  %v1030 = vpack.c.b16 %v998, %v994
  %v1031 = vpack.c.b16 %v999, %v995
  %v1032 = vpack.c.b16 %v1000, %v996
  %v1033 = vpack.c.b16 %v1001, %v997
  %1066 = vmatprep.subr.bf16.mxu0 %v1003
  %1067 = vmatpush1.bf16.msra.mxu0 %v1002
  %1068 = vmatprep.subr.bf16.mxu0 %v1007
  %1069 = vmatpush1.bf16.msra.mxu0 %v1006
  %1070 = vmatprep.subr.bf16.mxu0 %v1011
  %1071 = vmatpush1.bf16.msra.mxu0 %v1010
  %1072 = vmatprep.subr.bf16.mxu0 %v1015
  %1073 = vmatpush1.bf16.msra.mxu0 %v1014
  %1074 = vmatprep.subr.bf16.mxu0 %v1019
  %1075 = vmatpush1.bf16.msra.mxu0 %v1018
  %1076 = vmatprep.subr.bf16.mxu0 %v1023
  %1077 = vmatpush1.bf16.msra.mxu0 %v1022
  %1078 = vmatprep.subr.bf16.mxu0 %v1027
  %1079 = vmatpush1.bf16.msra.mxu0 %v1026
  %1080 = vmatprep.subr.bf16.mxu0 %v1031
  %1081 = vmatpush1.bf16.msra.mxu0 %v1030
  %1082 = vmatprep.subr.bf16.mxu0 0
  %1083 = vmatpush1.bf16.msra.mxu0 0
  %1084 = vmatprep.subr.bf16.mxu0 0
  %1085 = vmatpush1.bf16.msra.mxu0 0
  %1086 = vmatprep.subr.bf16.mxu0 0
  %1087 = vmatpush1.bf16.msra.mxu0 0
  %1088 = vmatprep.subr.bf16.mxu0 0
  %1089 = vmatpush1.bf16.msra.mxu0 0
  %1090 = vmatprep.subr.bf16.mxu0 0
  %1091 = vmatpush1.bf16.msra.mxu0 0
  %1092 = vmatprep.subr.bf16.mxu0 0
  %1093 = vmatpush1.bf16.msra.mxu0 0
  %1094 = vmatprep.subr.bf16.mxu0 0
  %1095 = vmatpush1.bf16.msra.mxu0 0
  %1096 = vmatprep.subr.bf16.mxu0 0
  %1097 = vmatpush1.bf16.msra.mxu0 0
  %1098 = vmatprep.mubr.bf16.mxu0 0
  %1099 = vmatmul.mubr.bf16.gmra.mrb[0].mxu0 0
  %v1100 = vpop.f32.mrb[0].mxu0
  %v1101 = vadd.f32 0.0, %v1100
  %v1102 = vpop.f32.mrb[0].mxu0
  %v1103 = vadd.f32 0.0, %v1102
  %v1104 = vpop.f32.mrb[0].mxu0
  %v1105 = vpop.f32.mrb[0].mxu0
  %1106 = vdwg.mxu0
  %1107 = vmatprep.subr.bf16.mxu0 %v1005
  %1108 = vmatpush1.bf16.msra.mxu0 %v1004
  %1109 = vmatprep.subr.bf16.mxu0 %v1009
  %1110 = vmatpush1.bf16.msra.mxu0 %v1008
  %1111 = vmatprep.subr.bf16.mxu0 %v1013
  %1112 = vmatpush1.bf16.msra.mxu0 %v1012
  %1113 = vmatprep.subr.bf16.mxu0 %v1017
  %1114 = vmatpush1.bf16.msra.mxu0 %v1016
  %1115 = vmatprep.subr.bf16.mxu0 %v1021
  %1116 = vmatpush1.bf16.msra.mxu0 %v1020
  %1117 = vmatprep.subr.bf16.mxu0 %v1025
  %1118 = vmatpush1.bf16.msra.mxu0 %v1024
  %1119 = vmatprep.subr.bf16.mxu0 %v1029
  %1120 = vmatpush1.bf16.msra.mxu0 %v1028
  %1121 = vmatprep.subr.bf16.mxu0 %v1033
  %1122 = vmatpush1.bf16.msra.mxu0 %v1032
  %1123 = vmatprep.subr.bf16.mxu0 0
  %1124 = vmatpush1.bf16.msra.mxu0 0
  %1125 = vmatprep.subr.bf16.mxu0 0
  %1126 = vmatpush1.bf16.msra.mxu0 0
  %1127 = vmatprep.subr.bf16.mxu0 0
  %1128 = vmatpush1.bf16.msra.mxu0 0
  %1129 = vmatprep.subr.bf16.mxu0 0
  %1130 = vmatpush1.bf16.msra.mxu0 0
  %1131 = vmatprep.subr.bf16.mxu0 0
  %1132 = vmatpush1.bf16.msra.mxu0 0
  %1133 = vmatprep.subr.bf16.mxu0 0
  %1134 = vmatpush1.bf16.msra.mxu0 0
  %1135 = vmatprep.subr.bf16.mxu0 0
  %1136 = vmatpush1.bf16.msra.mxu0 0
  %1137 = vmatprep.subr.bf16.mxu0 0
  %1138 = vmatpush1.bf16.msra.mxu0 0
  %1139 = vmatprep.mubr.bf16.mxu0 0
  %1140 = vmatmul.mubr.bf16.gmra.mrb[0].mxu0 0
  %v1141 = vpop.f32.mrb[0].mxu0
  %v1142 = vadd.f32 0.0, %v1141
  %v1143 = vpop.f32.mrb[0].mxu0
  %v1144 = vadd.f32 0.0, %v1143
  %v1145 = vpop.f32.mrb[0].mxu0
  %v1146 = vpop.f32.mrb[0].mxu0
  %1147 = vdwg.mxu0
  %v1148 = vadd.f32 %v902, %v1101
  %v1149 = vadd.f32 %v903, %v1103
  %v1150 = vadd.f32 %v904, %v1142
  %v1151 = vadd.f32 %v905, %v1144
  %s1152 = smul.u32 7, 4
  %s1153 = smul.addr %s1152, 8
  %s1154 = scalar_lea.vmem [#allocation3], %s1153
  %v1155 = vld [vmem:[%s1154] sm:$0xff]
  %v1156 = vld [vmem:[%s1154 + $0x8] sm:$0xff]
  %v1157 = vld [vmem:[%s1154 + $0x10] sm:$0xff]
  %v1158 = vld [vmem:[%s1154 + $0x18] sm:$0xff]
  %v1191 = vunpack.c.l.b16 %v867
  %v1192 = vunpack.c.h.b16 %v867
  %v1193 = vunpack.c.l.b16 %v868
  %v1194 = vunpack.c.h.b16 %v868
  %v1195 = vunpack.c.l.b16 %v869
  %v1196 = vunpack.c.h.b16 %v869
  %v1197 = vunpack.c.l.b16 %v870
  %v1198 = vunpack.c.h.b16 %v870
  %v1199 = vunpack.c.l.b16 %v871
  %v1200 = vunpack.c.h.b16 %v871
  %v1201 = vunpack.c.l.b16 %v872
  %v1202 = vunpack.c.h.b16 %v872
  %v1203 = vunpack.c.l.b16 %v873
  %v1204 = vunpack.c.h.b16 %v873
  %v1205 = vunpack.c.l.b16 %v874
  %v1206 = vunpack.c.h.b16 %v874
  %v1207 = vunpack.c.l.b16 %v875
  %v1208 = vunpack.c.h.b16 %v875
  %v1209 = vunpack.c.l.b16 %v876
  %v1210 = vunpack.c.h.b16 %v876
  %v1211 = vunpack.c.l.b16 %v877
  %v1212 = vunpack.c.h.b16 %v877
  %v1213 = vunpack.c.l.b16 %v878
  %v1214 = vunpack.c.h.b16 %v878
  %v1215 = vunpack.c.l.b16 %v879
  %v1216 = vunpack.c.h.b16 %v879
  %v1217 = vunpack.c.l.b16 %v880
  %v1218 = vunpack.c.h.b16 %v880
  %v1219 = vunpack.c.l.b16 %v881
  %v1220 = vunpack.c.h.b16 %v881
  %v1221 = vunpack.c.l.b16 %v882
  %v1222 = vunpack.c.h.b16 %v882
  %v1223 = vunpack.c.l.b16 %v883
  %v1224 = vunpack.c.h.b16 %v883
  %v1225 = vunpack.c.l.b16 %v884
  %v1226 = vunpack.c.h.b16 %v884
  %v1227 = vunpack.c.l.b16 %v885
  %v1228 = vunpack.c.h.b16 %v885
  %v1229 = vunpack.c.l.b16 %v886
  %v1230 = vunpack.c.h.b16 %v886
  %v1231 = vunpack.c.l.b16 %v887
  %v1232 = vunpack.c.h.b16 %v887
  %v1233 = vunpack.c.l.b16 %v888
  %v1234 = vunpack.c.h.b16 %v888
  %v1235 = vunpack.c.l.b16 %v889
  %v1236 = vunpack.c.h.b16 %v889
  %v1237 = vunpack.c.l.b16 %v890
  %v1238 = vunpack.c.h.b16 %v890
  %v1239 = vunpack.c.l.b16 %v891
  %v1240 = vunpack.c.h.b16 %v891
  %v1241 = vunpack.c.l.b16 %v892
  %v1242 = vunpack.c.h.b16 %v892
  %v1243 = vunpack.c.l.b16 %v893
  %v1244 = vunpack.c.h.b16 %v893
  %v1245 = vunpack.c.l.b16 %v894
  %v1246 = vunpack.c.h.b16 %v894
  %v1247 = vunpack.c.l.b16 %v895
  %v1248 = vunpack.c.h.b16 %v895
  %v1249 = vunpack.c.l.b16 %v896
  %v1250 = vunpack.c.h.b16 %v896
  %v1251 = vunpack.c.l.b16 %v897
  %v1252 = vunpack.c.h.b16 %v897
  %v1253 = vunpack.c.l.b16 %v898
  %v1254 = vunpack.c.h.b16 %v898
  %v1255 = vpack.c.b16 %v1195, %v1191
  %v1256 = vpack.c.b16 %v1196, %v1192
  %v1257 = vpack.c.b16 %v1197, %v1193
  %v1258 = vpack.c.b16 %v1198, %v1194
  %v1259 = vpack.c.b16 %v1203, %v1199
  %v1260 = vpack.c.b16 %v1204, %v1200
  %v1261 = vpack.c.b16 %v1205, %v1201
  %v1262 = vpack.c.b16 %v1206, %v1202
  %v1263 = vpack.c.b16 %v1211, %v1207
  %v1264 = vpack.c.b16 %v1212, %v1208
  %v1265 = vpack.c.b16 %v1213, %v1209
  %v1266 = vpack.c.b16 %v1214, %v1210
  %v1267 = vpack.c.b16 %v1219, %v1215
  %v1268 = vpack.c.b16 %v1220, %v1216
  %v1269 = vpack.c.b16 %v1221, %v1217
  %v1270 = vpack.c.b16 %v1222, %v1218
  %v1271 = vpack.c.b16 %v1227, %v1223
  %v1272 = vpack.c.b16 %v1228, %v1224
  %v1273 = vpack.c.b16 %v1229, %v1225
  %v1274 = vpack.c.b16 %v1230, %v1226
  %v1275 = vpack.c.b16 %v1235, %v1231
  %v1276 = vpack.c.b16 %v1236, %v1232
  %v1277 = vpack.c.b16 %v1237, %v1233
  %v1278 = vpack.c.b16 %v1238, %v1234
  %v1279 = vpack.c.b16 %v1243, %v1239
  %v1280 = vpack.c.b16 %v1244, %v1240
  %v1281 = vpack.c.b16 %v1245, %v1241
  %v1282 = vpack.c.b16 %v1246, %v1242
  %v1283 = vpack.c.b16 %v1251, %v1247
  %v1284 = vpack.c.b16 %v1252, %v1248
  %v1285 = vpack.c.b16 %v1253, %v1249
  %v1286 = vpack.c.b16 %v1254, %v1250
  %1319 = vmatprep.subr.bf16.mxu0 %v1256
  %1320 = vmatpush1.bf16.msra.mxu0 %v1255
  %1321 = vmatprep.subr.bf16.mxu0 %v1260
  %1322 = vmatpush1.bf16.msra.mxu0 %v1259
  %1323 = vmatprep.subr.bf16.mxu0 %v1264
  %1324 = vmatpush1.bf16.msra.mxu0 %v1263
  %1325 = vmatprep.subr.bf16.mxu0 %v1268
  %1326 = vmatpush1.bf16.msra.mxu0 %v1267
  %1327 = vmatprep.subr.bf16.mxu0 %v1272
  %1328 = vmatpush1.bf16.msra.mxu0 %v1271
  %1329 = vmatprep.subr.bf16.mxu0 %v1276
  %1330 = vmatpush1.bf16.msra.mxu0 %v1275
  %1331 = vmatprep.subr.bf16.mxu0 %v1280
  %1332 = vmatpush1.bf16.msra.mxu0 %v1279
  %1333 = vmatprep.subr.bf16.mxu0 %v1284
  %1334 = vmatpush1.bf16.msra.mxu0 %v1283
  %1335 = vmatprep.subr.bf16.mxu0 0
  %1336 = vmatpush1.bf16.msra.mxu0 0
  %1337 = vmatprep.subr.bf16.mxu0 0
  %1338 = vmatpush1.bf16.msra.mxu0 0
  %1339 = vmatprep.subr.bf16.mxu0 0
  %1340 = vmatpush1.bf16.msra.mxu0 0
  %1341 = vmatprep.subr.bf16.mxu0 0
  %1342 = vmatpush1.bf16.msra.mxu0 0
  %1343 = vmatprep.subr.bf16.mxu0 0
  %1344 = vmatpush1.bf16.msra.mxu0 0
  %1345 = vmatprep.subr.bf16.mxu0 0
  %1346 = vmatpush1.bf16.msra.mxu0 0
  %1347 = vmatprep.subr.bf16.mxu0 0
  %1348 = vmatpush1.bf16.msra.mxu0 0
  %1349 = vmatprep.subr.bf16.mxu0 0
  %1350 = vmatpush1.bf16.msra.mxu0 0
  %1351 = vmatprep.mubr.bf16.mxu0 0
  %1352 = vmatmul.mubr.bf16.gmra.mrb[0].mxu0 0
  %v1353 = vpop.f32.mrb[0].mxu0
  %v1354 = vadd.f32 0.0, %v1353
  %v1355 = vpop.f32.mrb[0].mxu0
  %v1356 = vadd.f32 0.0, %v1355
  %v1357 = vpop.f32.mrb[0].mxu0
  %v1358 = vpop.f32.mrb[0].mxu0
  %1359 = vdwg.mxu0
  %1360 = vmatprep.subr.bf16.mxu0 %v1258
  %1361 = vmatpush1.bf16.msra.mxu0 %v1257
  %1362 = vmatprep.subr.bf16.mxu0 %v1262
  %1363 = vmatpush1.bf16.msra.mxu0 %v1261
  %1364 = vmatprep.subr.bf16.mxu0 %v1266
  %1365 = vmatpush1.bf16.msra.mxu0 %v1265
  %1366 = vmatprep.subr.bf16.mxu0 %v1270
  %1367 = vmatpush1.bf16.msra.mxu0 %v1269
  %1368 = vmatprep.subr.bf16.mxu0 %v1274
  %1369 = vmatpush1.bf16.msra.mxu0 %v1273
  %1370 = vmatprep.subr.bf16.mxu0 %v1278
  %1371 = vmatpush1.bf16.msra.mxu0 %v1277
  %1372 = vmatprep.subr.bf16.mxu0 %v1282
  %1373 = vmatpush1.bf16.msra.mxu0 %v1281
  %1374 = vmatprep.subr.bf16.mxu0 %v1286
  %1375 = vmatpush1.bf16.msra.mxu0 %v1285
  %1376 = vmatprep.subr.bf16.mxu0 0
  %1377 = vmatpush1.bf16.msra.mxu0 0
  %1378 = vmatprep.subr.bf16.mxu0 0
  %1379 = vmatpush1.bf16.msra.mxu0 0
  %1380 = vmatprep.subr.bf16.mxu0 0
  %1381 = vmatpush1.bf16.msra.mxu0 0
  %1382 = vmatprep.subr.bf16.mxu0 0
  %1383 = vmatpush1.bf16.msra.mxu0 0
  %1384 = vmatprep.subr.bf16.mxu0 0
  %1385 = vmatpush1.bf16.msra.mxu0 0
  %1386 = vmatprep.subr.bf16.mxu0 0
  %1387 = vmatpush1.bf16.msra.mxu0 0
  %1388 = vmatprep.subr.bf16.mxu0 0
  %1389 = vmatpush1.bf16.msra.mxu0 0
  %1390 = vmatprep.subr.bf16.mxu0 0
  %1391 = vmatpush1.bf16.msra.mxu0 0
  %1392 = vmatprep.mubr.bf16.mxu0 0
  %1393 = vmatmul.mubr.bf16.gmra.mrb[0].mxu0 0
  %v1394 = vpop.f32.mrb[0].mxu0
  %v1395 = vadd.f32 0.0, %v1394
  %v1396 = vpop.f32.mrb[0].mxu0
  %v1397 = vadd.f32 0.0, %v1396
  %v1398 = vpop.f32.mrb[0].mxu0
  %v1399 = vpop.f32.mrb[0].mxu0
  %1400 = vdwg.mxu0
  %v1401 = vadd.f32 %v1155, %v1354
  %v1402 = vadd.f32 %v1156, %v1356
  %v1403 = vadd.f32 %v1157, %v1395
  %v1404 = vadd.f32 %v1158, %v1397
  %v1405 = vxor.u32 %v1148, 2147483648
  %v1406 = vmul.f32 %v1405, 1.442695
  %v1407 = vpow.pop %v1406
  %v1408 = vadd.f32 %v1407, 1.0
  %v1409 = vrcp.pop %v1408
  %v1410 = vmul.f32 1.0, %v1409
  %v1411 = vxor.u32 %v1149, 2147483648
  %v1412 = vmul.f32 %v1411, 1.442695
  %v1413 = vpow.pop %v1412
  %v1414 = vadd.f32 %v1413, 1.0
  %v1415 = vrcp.pop %v1414
  %v1416 = vmul.f32 1.0, %v1415
  %v1417 = vtanh.pop %v1150
  %v1418 = vxor.u32 %v1151, 2147483648
  %v1419 = vmul.f32 %v1418, 1.442695
  %v1420 = vpow.pop %v1419
  %v1421 = vadd.f32 %v1420, 1.0
  %v1422 = vrcp.pop %v1421
  %v1423 = vmul.f32 1.0, %v1422
  %v1424 = vmul.f32 %v1416, 0.0
  %v1425 = vmul.f32 %v1410, %v1417
  %v1426 = vadd.f32 %v1424, %v1425
  %v1427 = vtanh.pop %v1426
  %v1428 = vmul.f32 %v1423, %v1427
  %v1429 = vxor.u32 %v1401, 2147483648
  %v1430 = vmul.f32 %v1429, 1.442695
  %v1431 = vpow.pop %v1430
  %v1432 = vadd.f32 %v1431, 1.0
  %v1433 = vrcp.pop %v1432
  %v1434 = vmul.f32 1.0, %v1433
  %v1435 = vxor.u32 %v1402, 2147483648
  %v1436 = vmul.f32 %v1435, 1.442695
  %v1437 = vpow.pop %v1436
  %v1438 = vadd.f32 %v1437, 1.0
  %v1439 = vrcp.pop %v1438
  %v1440 = vmul.f32 1.0, %v1439
  %v1441 = vtanh.pop %v1403
  %v1442 = vxor.u32 %v1404, 2147483648
  %v1443 = vmul.f32 %v1442, 1.442695
  %v1444 = vpow.pop %v1443
  %v1445 = vadd.f32 %v1444, 1.0
  %v1446 = vrcp.pop %v1445
  %v1447 = vmul.f32 1.0, %v1446
  %v1448 = vmul.f32 %v1440, 0.0
  %v1449 = vmul.f32 %v1434, %v1441
  %v1450 = vadd.f32 %v1448, %v1449
  %v1451 = vtanh.pop %v1450
  %v1452 = vmul.f32 %v1447, %v1451
  %1453 = vst [vmem:[%s5] sm:$0xff] %v1428
  %s1454 = scalar_lea.vmem [#allocation4], 56
  %1455 = vst [vmem:[%s1454] sm:$0xff] %v1452
  %s1456 = smul.u32 1, 4
  %s1457 = smul.addr %s1456, 8
  %s1458 = scalar_lea.vmem [#allocation2], %s1457
  %v1459 = vld [vmem:[%s1458] sm:$0xff]
  %v1460 = vld [vmem:[%s1458 + $0x8] sm:$0xff]
  %v1461 = vld [vmem:[%s1458 + $0x10] sm:$0xff]
  %v1462 = vld [vmem:[%s1458 + $0x18] sm:$0xff]
  %v1463 = vpack.c.bf16 %v1428, %v1428
  %1464 = vmatprep.subr.bf16.mxu0 %v1003
  %1465 = vmatpush1.bf16.msra.mxu0 %v1002
  %1466 = vmatprep.subr.bf16.mxu0 %v1007
  %1467 = vmatpush1.bf16.msra.mxu0 %v1006
  %1468 = vmatprep.subr.bf16.mxu0 %v1011
  %1469 = vmatpush1.bf16.msra.mxu0 %v1010
  %1470 = vmatprep.subr.bf16.mxu0 %v1015
  %1471 = vmatpush1.bf16.msra.mxu0 %v1014
  %1472 = vmatprep.subr.bf16.mxu0 %v1019
  %1473 = vmatpush1.bf16.msra.mxu0 %v1018
  %1474 = vmatprep.subr.bf16.mxu0 %v1023
  %1475 = vmatpush1.bf16.msra.mxu0 %v1022
  %1476 = vmatprep.subr.bf16.mxu0 %v1027
  %1477 = vmatpush1.bf16.msra.mxu0 %v1026
  %1478 = vmatprep.subr.bf16.mxu0 %v1031
  %1479 = vmatpush1.bf16.msra.mxu0 %v1030
  %1480 = vmatprep.subr.bf16.mxu0 0
  %1481 = vmatpush1.bf16.msra.mxu0 0
  %1482 = vmatprep.subr.bf16.mxu0 0
  %1483 = vmatpush1.bf16.msra.mxu0 0
  %1484 = vmatprep.subr.bf16.mxu0 0
  %1485 = vmatpush1.bf16.msra.mxu0 0
  %1486 = vmatprep.subr.bf16.mxu0 0
  %1487 = vmatpush1.bf16.msra.mxu0 0
  %1488 = vmatprep.subr.bf16.mxu0 0
  %1489 = vmatpush1.bf16.msra.mxu0 0
  %1490 = vmatprep.subr.bf16.mxu0 0
  %1491 = vmatpush1.bf16.msra.mxu0 0
  %1492 = vmatprep.subr.bf16.mxu0 0
  %1493 = vmatpush1.bf16.msra.mxu0 0
  %1494 = vmatprep.subr.bf16.mxu0 0
  %1495 = vmatpush1.bf16.msra.mxu0 0
  %1496 = vmatprep.mubr.bf16.mxu0 0
  %1497 = vmatmul.mubr.bf16.gmra.mrb[0].mxu0 %v1463
  %v1498 = vpop.f32.mrb[0].mxu0
  %v1499 = vadd.f32 0.0, %v1498
  %v1500 = vpop.f32.mrb[0].mxu0
  %v1501 = vadd.f32 0.0, %v1500
  %v1502 = vpop.f32.mrb[0].mxu0
  %v1503 = vpop.f32.mrb[0].mxu0
  %1504 = vdwg.mxu0
  %1505 = vmatprep.subr.bf16.mxu0 %v1005
  %1506 = vmatpush1.bf16.msra.mxu0 %v1004
  %1507 = vmatprep.subr.bf16.mxu0 %v1009
  %1508 = vmatpush1.bf16.msra.mxu0 %v1008
  %1509 = vmatprep.subr.bf16.mxu0 %v1013
  %1510 = vmatpush1.bf16.msra.mxu0 %v1012
  %1511 = vmatprep.subr.bf16.mxu0 %v1017
  %1512 = vmatpush1.bf16.msra.mxu0 %v1016
  %1513 = vmatprep.subr.bf16.mxu0 %v1021
  %1514 = vmatpush1.bf16.msra.mxu0 %v1020
  %1515 = vmatprep.subr.bf16.mxu0 %v1025
  %1516 = vmatpush1.bf16.msra.mxu0 %v1024
  %1517 = vmatprep.subr.bf16.mxu0 %v1029
  %1518 = vmatpush1.bf16.msra.mxu0 %v1028
  %1519 = vmatprep.subr.bf16.mxu0 %v1033
  %1520 = vmatpush1.bf16.msra.mxu0 %v1032
  %1521 = vmatprep.subr.bf16.mxu0 0
  %1522 = vmatpush1.bf16.msra.mxu0 0
  %1523 = vmatprep.subr.bf16.mxu0 0
  %1524 = vmatpush1.bf16.msra.mxu0 0
  %1525 = vmatprep.subr.bf16.mxu0 0
  %1526 = vmatpush1.bf16.msra.mxu0 0
  %1527 = vmatprep.subr.bf16.mxu0 0
  %1528 = vmatpush1.bf16.msra.mxu0 0
  %1529 = vmatprep.subr.bf16.mxu0 0
  %1530 = vmatpush1.bf16.msra.mxu0 0
  %1531 = vmatprep.subr.bf16.mxu0 0
  %1532 = vmatpush1.bf16.msra.mxu0 0
  %1533 = vmatprep.subr.bf16.mxu0 0
  %1534 = vmatpush1.bf16.msra.mxu0 0
  %1535 = vmatprep.subr.bf16.mxu0 0
  %1536 = vmatpush1.bf16.msra.mxu0 0
  %1537 = vmatprep.mubr.bf16.mxu0 0
  %1538 = vmatmul.mubr.bf16.gmra.mrb[0].mxu0 %v1463
  %v1539 = vpop.f32.mrb[0].mxu0
  %v1540 = vadd.f32 0.0, %v1539
  %v1541 = vpop.f32.mrb[0].mxu0
  %v1542 = vadd.f32 0.0, %v1541
  %v1543 = vpop.f32.mrb[0].mxu0
  %v1544 = vpop.f32.mrb[0].mxu0
  %1545 = vdwg.mxu0
  %v1546 = vadd.f32 %v1459, %v1499
  %v1547 = vadd.f32 %v1460, %v1501
  %v1548 = vadd.f32 %v1461, %v1540
  %v1549 = vadd.f32 %v1462, %v1542
  %s1550 = smul.u32 6, 4
  %s1551 = smul.addr %s1550, 8
  %s1552 = scalar_lea.vmem [#allocation3], %s1551
  %v1553 = vld [vmem:[%s1552] sm:$0xff]
  %v1554 = vld [vmem:[%s1552 + $0x8] sm:$0xff]
  %v1555 = vld [vmem:[%s1552 + $0x10] sm:$0xff]
  %v1556 = vld [vmem:[%s1552 + $0x18] sm:$0xff]
  %v1557 = vpack.c.bf16 %v1452, %v1452
  %1558 = vmatprep.subr.bf16.mxu0 %v1256
  %1559 = vmatpush1.bf16.msra.mxu0 %v1255
  %1560 = vmatprep.subr.bf16.mxu0 %v1260
  %1561 = vmatpush1.bf16.msra.mxu0 %v1259
  %1562 = vmatprep.subr.bf16.mxu0 %v1264
  %1563 = vmatpush1.bf16.msra.mxu0 %v1263
  %1564 = vmatprep.subr.bf16.mxu0 %v1268
  %1565 = vmatpush1.bf16.msra.mxu0 %v1267
  %1566 = vmatprep.subr.bf16.mxu0 %v1272
  %1567 = vmatpush1.bf16.msra.mxu0 %v1271
  %1568 = vmatprep.subr.bf16.mxu0 %v1276
  %1569 = vmatpush1.bf16.msra.mxu0 %v1275
  %1570 = vmatprep.subr.bf16.mxu0 %v1280
  %1571 = vmatpush1.bf16.msra.mxu0 %v1279
  %1572 = vmatprep.subr.bf16.mxu0 %v1284
  %1573 = vmatpush1.bf16.msra.mxu0 %v1283
  %1574 = vmatprep.subr.bf16.mxu0 0
  %1575 = vmatpush1.bf16.msra.mxu0 0
  %1576 = vmatprep.subr.bf16.mxu0 0
  %1577 = vmatpush1.bf16.msra.mxu0 0
  %1578 = vmatprep.subr.bf16.mxu0 0
  %1579 = vmatpush1.bf16.msra.mxu0 0
  %1580 = vmatprep.subr.bf16.mxu0 0
  %1581 = vmatpush1.bf16.msra.mxu0 0
  %1582 = vmatprep.subr.bf16.mxu0 0
  %1583 = vmatpush1.bf16.msra.mxu0 0
  %1584 = vmatprep.subr.bf16.mxu0 0
  %1585 = vmatpush1.bf16.msra.mxu0 0
  %1586 = vmatprep.subr.bf16.mxu0 0
  %1587 = vmatpush1.bf16.msra.mxu0 0
  %1588 = vmatprep.subr.bf16.mxu0 0
  %1589 = vmatpush1.bf16.msra.mxu0 0
  %1590 = vmatprep.mubr.bf16.mxu0 0
  %1591 = vmatmul.mubr.bf16.gmra.mrb[0].mxu0 %v1557
  %v1592 = vpop.f32.mrb[0].mxu0
  %v1593 = vadd.f32 0.0, %v1592
  %v1594 = vpop.f32.mrb[0].mxu0
  %v1595 = vadd.f32 0.0, %v1594
  %v1596 = vpop.f32.mrb[0].mxu0
  %v1597 = vpop.f32.mrb[0].mxu0
  %1598 = vdwg.mxu0
  %1599 = vmatprep.subr.bf16.mxu0 %v1258
  %1600 = vmatpush1.bf16.msra.mxu0 %v1257
  %1601 = vmatprep.subr.bf16.mxu0 %v1262
  %1602 = vmatpush1.bf16.msra.mxu0 %v1261
  %1603 = vmatprep.subr.bf16.mxu0 %v1266
  %1604 = vmatpush1.bf16.msra.mxu0 %v1265
  %1605 = vmatprep.subr.bf16.mxu0 %v1270
  %1606 = vmatpush1.bf16.msra.mxu0 %v1269
  %1607 = vmatprep.subr.bf16.mxu0 %v1274
  %1608 = vmatpush1.bf16.msra.mxu0 %v1273
  %1609 = vmatprep.subr.bf16.mxu0 %v1278
  %1610 = vmatpush1.bf16.msra.mxu0 %v1277
  %1611 = vmatprep.subr.bf16.mxu0 %v1282
  %1612 = vmatpush1.bf16.msra.mxu0 %v1281
  %1613 = vmatprep.subr.bf16.mxu0 %v1286
  %1614 = vmatpush1.bf16.msra.mxu0 %v1285
  %1615 = vmatprep.subr.bf16.mxu0 0
  %1616 = vmatpush1.bf16.msra.mxu0 0
  %1617 = vmatprep.subr.bf16.mxu0 0
  %1618 = vmatpush1.bf16.msra.mxu0 0
  %1619 = vmatprep.subr.bf16.mxu0 0
  %1620 = vmatpush1.bf16.msra.mxu0 0
  %1621 = vmatprep.subr.bf16.mxu0 0
  %1622 = vmatpush1.bf16.msra.mxu0 0
  %1623 = vmatprep.subr.bf16.mxu0 0
  %1624 = vmatpush1.bf16.msra.mxu0 0
  %1625 = vmatprep.subr.bf16.mxu0 0
  %1626 = vmatpush1.bf16.msra.mxu0 0
  %1627 = vmatprep.subr.bf16.mxu0 0
  %1628 = vmatpush1.bf16.msra.mxu0 0
  %1629 = vmatprep.subr.bf16.mxu0 0
  %1630 = vmatpush1.bf16.msra.mxu0 0
  %1631 = vmatprep.mubr.bf16.mxu0 0
  %1632 = vmatmul.mubr.bf16.gmra.mrb[0].mxu0 %v1557
  %v1633 = vpop.f32.mrb[0].mxu0
  %v1634 = vadd.f32 0.0, %v1633
  %v1635 = vpop.f32.mrb[0].mxu0
  %v1636 = vadd.f32 0.0, %v1635
  %v1637 = vpop.f32.mrb[0].mxu0
  %v1638 = vpop.f32.mrb[0].mxu0
  %1639 = vdwg.mxu0
  %v1640 = vadd.f32 %v1553, %v1593
  %v1641 = vadd.f32 %v1554, %v1595
  %v1642 = vadd.f32 %v1555, %v1634
  %v1643 = vadd.f32 %v1556, %v1636
  %v1644 = vxor.u32 %v1546, 2147483648
  %v1645 = vmul.f32 %v1644, 1.442695
  %v1646 = vpow.pop %v1645
  %v1647 = vadd.f32 %v1646, 1.0
  %v1648 = vrcp.pop %v1647
  %v1649 = vmul.f32 1.0, %v1648
  %v1650 = vxor.u32 %v1547, 2147483648
  %v1651 = vmul.f32 %v1650, 1.442695
  %v1652 = vpow.pop %v1651
  %v1653 = vadd.f32 %v1652, 1.0
  %v1654 = vrcp.pop %v1653
  %v1655 = vmul.f32 1.0, %v1654
  %v1656 = vtanh.pop %v1548
  %v1657 = vxor.u32 %v1549, 2147483648
  %v1658 = vmul.f32 %v1657, 1.442695
  %v1659 = vpow.pop %v1658
  %v1660 = vadd.f32 %v1659, 1.0
  %v1661 = vrcp.pop %v1660
  %v1662 = vmul.f32 1.0, %v1661
  %v1663 = vmul.f32 %v1655, %v1426
  %v1664 = vmul.f32 %v1649, %v1656
  %v1665 = vadd.f32 %v1663, %v1664
  %v1666 = vtanh.pop %v1665
  %v1667 = vmul.f32 %v1662, %v1666
  %v1668 = vxor.u32 %v1640, 2147483648
  %v1669 = vmul.f32 %v1668, 1.442695
  %v1670 = vpow.pop %v1669
  %v1671 = vadd.f32 %v1670, 1.0
  %v1672 = vrcp.pop %v1671
  %v1673 = vmul.f32 1.0, %v1672
  %v1674 = vxor.u32 %v1641, 2147483648
  %v1675 = vmul.f32 %v1674, 1.442695
  %v1676 = vpow.pop %v1675
  %v1677 = vadd.f32 %v1676, 1.0
  %v1678 = vrcp.pop %v1677
  %v1679 = vmul.f32 1.0, %v1678
  %v1680 = vtanh.pop %v1642
  %v1681 = vxor.u32 %v1643, 2147483648
  %v1682 = vmul.f32 %v1681, 1.442695
  %v1683 = vpow.pop %v1682
  %v1684 = vadd.f32 %v1683, 1.0
  %v1685 = vrcp.pop %v1684
  %v1686 = vmul.f32 1.0, %v1685
  %v1687 = vmul.f32 %v1679, %v1450
  %v1688 = vmul.f32 %v1673, %v1680
  %v1689 = vadd.f32 %v1687, %v1688
  %v1690 = vtanh.pop %v1689
  %v1691 = vmul.f32 %v1686, %v1690
  %s1692 = scalar_lea.vmem %s5, 8
  %1693 = vst [vmem:[%s1692] sm:$0xff] %v1667
  %s1694 = scalar_lea.vmem [#allocation4], 48
  %1695 = vst [vmem:[%s1694] sm:$0xff] %v1691
  %s1696 = smul.u32 2, 4
  %s1697 = smul.addr %s1696, 8
  %s1698 = scalar_lea.vmem [#allocation2], %s1697
  %v1699 = vld [vmem:[%s1698] sm:$0xff]
  %v1700 = vld [vmem:[%s1698 + $0x8] sm:$0xff]
  %v1701 = vld [vmem:[%s1698 + $0x10] sm:$0xff]
  %v1702 = vld [vmem:[%s1698 + $0x18] sm:$0xff]
  %v1703 = vpack.c.bf16 %v1667, %v1667
  %1704 = vmatprep.subr.bf16.mxu0 %v1003
  %1705 = vmatpush1.bf16.msra.mxu0 %v1002
  %1706 = vmatprep.subr.bf16.mxu0 %v1007
  %1707 = vmatpush1.bf16.msra.mxu0 %v1006
  %1708 = vmatprep.subr.bf16.mxu0 %v1011
  %1709 = vmatpush1.bf16.msra.mxu0 %v1010
  %1710 = vmatprep.subr.bf16.mxu0 %v1015
  %1711 = vmatpush1.bf16.msra.mxu0 %v1014
  %1712 = vmatprep.subr.bf16.mxu0 %v1019
  %1713 = vmatpush1.bf16.msra.mxu0 %v1018
  %1714 = vmatprep.subr.bf16.mxu0 %v1023
  %1715 = vmatpush1.bf16.msra.mxu0 %v1022
  %1716 = vmatprep.subr.bf16.mxu0 %v1027
  %1717 = vmatpush1.bf16.msra.mxu0 %v1026
  %1718 = vmatprep.subr.bf16.mxu0 %v1031
  %1719 = vmatpush1.bf16.msra.mxu0 %v1030
  %1720 = vmatprep.subr.bf16.mxu0 0
  %1721 = vmatpush1.bf16.msra.mxu0 0
  %1722 = vmatprep.subr.bf16.mxu0 0
  %1723 = vmatpush1.bf16.msra.mxu0 0
  %1724 = vmatprep.subr.bf16.mxu0 0
  %1725 = vmatpush1.bf16.msra.mxu0 0
  %1726 = vmatprep.subr.bf16.mxu0 0
  %1727 = vmatpush1.bf16.msra.mxu0 0
  %1728 = vmatprep.subr.bf16.mxu0 0
  %1729 = vmatpush1.bf16.msra.mxu0 0
  %1730 = vmatprep.subr.bf16.mxu0 0
  %1731 = vmatpush1.bf16.msra.mxu0 0
  %1732 = vmatprep.subr.bf16.mxu0 0
  %1733 = vmatpush1.bf16.msra.mxu0 0
  %1734 = vmatprep.subr.bf16.mxu0 0
  %1735 = vmatpush1.bf16.msra.mxu0 0
  %1736 = vmatprep.mubr.bf16.mxu0 0
  %1737 = vmatmul.mubr.bf16.gmra.mrb[0].mxu0 %v1703
  %v1738 = vpop.f32.mrb[0].mxu0
  %v1739 = vadd.f32 0.0, %v1738
  %v1740 = vpop.f32.mrb[0].mxu0
  %v1741 = vadd.f32 0.0, %v1740
  %v1742 = vpop.f32.mrb[0].mxu0
  %v1743 = vpop.f32.mrb[0].mxu0
  %1744 = vdwg.mxu0
  %1745 = vmatprep.subr.bf16.mxu0 %v1005
  %1746 = vmatpush1.bf16.msra.mxu0 %v1004
  %1747 = vmatprep.subr.bf16.mxu0 %v1009
  %1748 = vmatpush1.bf16.msra.mxu0 %v1008
  %1749 = vmatprep.subr.bf16.mxu0 %v1013
  %1750 = vmatpush1.bf16.msra.mxu0 %v1012
  %1751 = vmatprep.subr.bf16.mxu0 %v1017
  %1752 = vmatpush1.bf16.msra.mxu0 %v1016
  %1753 = vmatprep.subr.bf16.mxu0 %v1021
  %1754 = vmatpush1.bf16.msra.mxu0 %v1020
  %1755 = vmatprep.subr.bf16.mxu0 %v1025
  %1756 = vmatpush1.bf16.msra.mxu0 %v1024
  %1757 = vmatprep.subr.bf16.mxu0 %v1029
  %1758 = vmatpush1.bf16.msra.mxu0 %v1028
  %1759 = vmatprep.subr.bf16.mxu0 %v1033
  %1760 = vmatpush1.bf16.msra.mxu0 %v1032
  %1761 = vmatprep.subr.bf16.mxu0 0
  %1762 = vmatpush1.bf16.msra.mxu0 0
  %1763 = vmatprep.subr.bf16.mxu0 0
  %1764 = vmatpush1.bf16.msra.mxu0 0
  %1765 = vmatprep.subr.bf16.mxu0 0
  %1766 = vmatpush1.bf16.msra.mxu0 0
  %1767 = vmatprep.subr.bf16.mxu0 0
  %1768 = vmatpush1.bf16.msra.mxu0 0
  %1769 = vmatprep.subr.bf16.mxu0 0
  %1770 = vmatpush1.bf16.msra.mxu0 0
  %1771 = vmatprep.subr.bf16.mxu0 0
  %1772 = vmatpush1.bf16.msra.mxu0 0
  %1773 = vmatprep.subr.bf16.mxu0 0
  %1774 = vmatpush1.bf16.msra.mxu0 0
  %1775 = vmatprep.subr.bf16.mxu0 0
  %1776 = vmatpush1.bf16.msra.mxu0 0
  %1777 = vmatprep.mubr.bf16.mxu0 0
  %1778 = vmatmul.mubr.bf16.gmra.mrb[0].mxu0 %v1703
  %v1779 = vpop.f32.mrb[0].mxu0
  %v1780 = vadd.f32 0.0, %v1779
  %v1781 = vpop.f32.mrb[0].mxu0
  %v1782 = vadd.f32 0.0, %v1781
  %v1783 = vpop.f32.mrb[0].mxu0
  %v1784 = vpop.f32.mrb[0].mxu0
  %1785 = vdwg.mxu0
  %v1786 = vadd.f32 %v1699, %v1739
  %v1787 = vadd.f32 %v1700, %v1741
  %v1788 = vadd.f32 %v1701, %v1780
  %v1789 = vadd.f32 %v1702, %v1782
  %s1790 = smul.u32 5, 4
  %s1791 = smul.addr %s1790, 8
  %s1792 = scalar_lea.vmem [#allocation3], %s1791
  %v1793 = vld [vmem:[%s1792] sm:$0xff]
  %v1794 = vld [vmem:[%s1792 + $0x8] sm:$0xff]
  %v1795 = vld [vmem:[%s1792 + $0x10] sm:$0xff]
  %v1796 = vld [vmem:[%s1792 + $0x18] sm:$0xff]
  %v1797 = vpack.c.bf16 %v1691, %v1691
  %1798 = vmatprep.subr.bf16.mxu0 %v1256
  %1799 = vmatpush1.bf16.msra.mxu0 %v1255
  %1800 = vmatprep.subr.bf16.mxu0 %v1260
  %1801 = vmatpush1.bf16.msra.mxu0 %v1259
  %1802 = vmatprep.subr.bf16.mxu0 %v1264
  %1803 = vmatpush1.bf16.msra.mxu0 %v1263
  %1804 = vmatprep.subr.bf16.mxu0 %v1268
  %1805 = vmatpush1.bf16.msra.mxu0 %v1267
  %1806 = vmatprep.subr.bf16.mxu0 %v1272
  %1807 = vmatpush1.bf16.msra.mxu0 %v1271
  %1808 = vmatprep.subr.bf16.mxu0 %v1276
  %1809 = vmatpush1.bf16.msra.mxu0 %v1275
  %1810 = vmatprep.subr.bf16.mxu0 %v1280
  %1811 = vmatpush1.bf16.msra.mxu0 %v1279
  %1812 = vmatprep.subr.bf16.mxu0 %v1284
  %1813 = vmatpush1.bf16.msra.mxu0 %v1283
  %1814 = vmatprep.subr.bf16.mxu0 0
  %1815 = vmatpush1.bf16.msra.mxu0 0
  %1816 = vmatprep.subr.bf16.mxu0 0
  %1817 = vmatpush1.bf16.msra.mxu0 0
  %1818 = vmatprep.subr.bf16.mxu0 0
  %1819 = vmatpush1.bf16.msra.mxu0 0
  %1820 = vmatprep.subr.bf16.mxu0 0
  %1821 = vmatpush1.bf16.msra.mxu0 0
  %1822 = vmatprep.subr.bf16.mxu0 0
  %1823 = vmatpush1.bf16.msra.mxu0 0
  %1824 = vmatprep.subr.bf16.mxu0 0
  %1825 = vmatpush1.bf16.msra.mxu0 0
  %1826 = vmatprep.subr.bf16.mxu0 0
  %1827 = vmatpush1.bf16.msra.mxu0 0
  %1828 = vmatprep.subr.bf16.mxu0 0
  %1829 = vmatpush1.bf16.msra.mxu0 0
  %1830 = vmatprep.mubr.bf16.mxu0 0
  %1831 = vmatmul.mubr.bf16.gmra.mrb[0].mxu0 %v1797
  %v1832 = vpop.f32.mrb[0].mxu0
  %v1833 = vadd.f32 0.0, %v1832
  %v1834 = vpop.f32.mrb[0].mxu0
  %v1835 = vadd.f32 0.0, %v1834
  %v1836 = vpop.f32.mrb[0].mxu0
  %v1837 = vpop.f32.mrb[0].mxu0
  %1838 = vdwg.mxu0
  %1839 = vmatprep.subr.bf16.mxu0 %v1258
  %1840 = vmatpush1.bf16.msra.mxu0 %v1257
  %1841 = vmatprep.subr.bf16.mxu0 %v1262
  %1842 = vmatpush1.bf16.msra.mxu0 %v1261
  %1843 = vmatprep.subr.bf16.mxu0 %v1266
  %1844 = vmatpush1.bf16.msra.mxu0 %v1265
  %1845 = vmatprep.subr.bf16.mxu0 %v1270
  %1846 = vmatpush1.bf16.msra.mxu0 %v1269
  %1847 = vmatprep.subr.bf16.mxu0 %v1274
  %1848 = vmatpush1.bf16.msra.mxu0 %v1273
  %1849 = vmatprep.subr.bf16.mxu0 %v1278
  %1850 = vmatpush1.bf16.msra.mxu0 %v1277
  %1851 = vmatprep.subr.bf16.mxu0 %v1282
  %1852 = vmatpush1.bf16.msra.mxu0 %v1281
  %1853 = vmatprep.subr.bf16.mxu0 %v1286
  %1854 = vmatpush1.bf16.msra.mxu0 %v1285
  %1855 = vmatprep.subr.bf16.mxu0 0
  %1856 = vmatpush1.bf16.msra.mxu0 0
  %1857 = vmatprep.subr.bf16.mxu0 0
  %1858 = vmatpush1.bf16.msra.mxu0 0
  %1859 = vmatprep.subr.bf16.mxu0 0
  %1860 = vmatpush1.bf16.msra.mxu0 0
  %1861 = vmatprep.subr.bf16.mxu0 0
  %1862 = vmatpush1.bf16.msra.mxu0 0
  %1863 = vmatprep.subr.bf16.mxu0 0
  %1864 = vmatpush1.bf16.msra.mxu0 0
  %1865 = vmatprep.subr.bf16.mxu0 0
  %1866 = vmatpush1.bf16.msra.mxu0 0
  %1867 = vmatprep.subr.bf16.mxu0 0
  %1868 = vmatpush1.bf16.msra.mxu0 0
  %1869 = vmatprep.subr.bf16.mxu0 0
  %1870 = vmatpush1.bf16.msra.mxu0 0
  %1871 = vmatprep.mubr.bf16.mxu0 0
  %1872 = vmatmul.mubr.bf16.gmra.mrb[0].mxu0 %v1797
  %v1873 = vpop.f32.mrb[0].mxu0
  %v1874 = vadd.f32 0.0, %v1873
  %v1875 = vpop.f32.mrb[0].mxu0
  %v1876 = vadd.f32 0.0, %v1875
  %v1877 = vpop.f32.mrb[0].mxu0
  %v1878 = vpop.f32.mrb[0].mxu0
  %1879 = vdwg.mxu0
  %v1880 = vadd.f32 %v1793, %v1833
  %v1881 = vadd.f32 %v1794, %v1835
  %v1882 = vadd.f32 %v1795, %v1874
  %v1883 = vadd.f32 %v1796, %v1876
  %v1884 = vxor.u32 %v1786, 2147483648
  %v1885 = vmul.f32 %v1884, 1.442695
  %v1886 = vpow.pop %v1885
  %v1887 = vadd.f32 %v1886, 1.0
  %v1888 = vrcp.pop %v1887
  %v1889 = vmul.f32 1.0, %v1888
  %v1890 = vxor.u32 %v1787, 2147483648
  %v1891 = vmul.f32 %v1890, 1.442695
  %v1892 = vpow.pop %v1891
  %v1893 = vadd.f32 %v1892, 1.0
  %v1894 = vrcp.pop %v1893
  %v1895 = vmul.f32 1.0, %v1894
  %v1896 = vtanh.pop %v1788
  %v1897 = vxor.u32 %v1789, 2147483648
  %v1898 = vmul.f32 %v1897, 1.442695
  %v1899 = vpow.pop %v1898
  %v1900 = vadd.f32 %v1899, 1.0
  %v1901 = vrcp.pop %v1900
  %v1902 = vmul.f32 1.0, %v1901
  %v1903 = vmul.f32 %v1895, %v1665
  %v1904 = vmul.f32 %v1889, %v1896
  %v1905 = vadd.f32 %v1903, %v1904
  %v1906 = vtanh.pop %v1905
  %v1907 = vmul.f32 %v1902, %v1906
  %v1908 = vxor.u32 %v1880, 2147483648
  %v1909 = vmul.f32 %v1908, 1.442695
  %v1910 = vpow.pop %v1909
  %v1911 = vadd.f32 %v1910, 1.0
  %v1912 = vrcp.pop %v1911
  %v1913 = vmul.f32 1.0, %v1912
  %v1914 = vxor.u32 %v1881, 2147483648
  %v1915 = vmul.f32 %v1914, 1.442695
  %v1916 = vpow.pop %v1915
  %v1917 = vadd.f32 %v1916, 1.0
  %v1918 = vrcp.pop %v1917
  %v1919 = vmul.f32 1.0, %v1918
  %v1920 = vtanh.pop %v1882
  %v1921 = vxor.u32 %v1883, 2147483648
  %v1922 = vmul.f32 %v1921, 1.442695
  %v1923 = vpow.pop %v1922
  %v1924 = vadd.f32 %v1923, 1.0
  %v1925 = vrcp.pop %v1924
  %v1926 = vmul.f32 1.0, %v1925
  %v1927 = vmul.f32 %v1919, %v1689
  %v1928 = vmul.f32 %v1913, %v1920
  %v1929 = vadd.f32 %v1927, %v1928
  %v1930 = vtanh.pop %v1929
  %v1931 = vmul.f32 %v1926, %v1930
  %s1932 = scalar_lea.vmem %s5, 16
  %1933 = vst [vmem:[%s1932] sm:$0xff] %v1907
  %s1934 = scalar_lea.vmem [#allocation4], 40
  %1935 = vst [vmem:[%s1934] sm:$0xff] %v1931
  %s1936 = smul.u32 3, 4
  %s1937 = smul.addr %s1936, 8
  %s1938 = scalar_lea.vmem [#allocation2], %s1937
  %v1939 = vld [vmem:[%s1938] sm:$0xff]
  %v1940 = vld [vmem:[%s1938 + $0x8] sm:$0xff]
  %v1941 = vld [vmem:[%s1938 + $0x10] sm:$0xff]
  %v1942 = vld [vmem:[%s1938 + $0x18] sm:$0xff]
  %v1943 = vpack.c.bf16 %v1907, %v1907
  %1944 = vmatprep.subr.bf16.mxu0 %v1003
  %1945 = vmatpush1.bf16.msra.mxu0 %v1002
  %1946 = vmatprep.subr.bf16.mxu0 %v1007
  %1947 = vmatpush1.bf16.msra.mxu0 %v1006
  %1948 = vmatprep.subr.bf16.mxu0 %v1011
  %1949 = vmatpush1.bf16.msra.mxu0 %v1010
  %1950 = vmatprep.subr.bf16.mxu0 %v1015
  %1951 = vmatpush1.bf16.msra.mxu0 %v1014
  %1952 = vmatprep.subr.bf16.mxu0 %v1019
  %1953 = vmatpush1.bf16.msra.mxu0 %v1018
  %1954 = vmatprep.subr.bf16.mxu0 %v1023
  %1955 = vmatpush1.bf16.msra.mxu0 %v1022
  %1956 = vmatprep.subr.bf16.mxu0 %v1027
  %1957 = vmatpush1.bf16.msra.mxu0 %v1026
  %1958 = vmatprep.subr.bf16.mxu0 %v1031
  %1959 = vmatpush1.bf16.msra.mxu0 %v1030
  %1960 = vmatprep.subr.bf16.mxu0 0
  %1961 = vmatpush1.bf16.msra.mxu0 0
  %1962 = vmatprep.subr.bf16.mxu0 0
  %1963 = vmatpush1.bf16.msra.mxu0 0
  %1964 = vmatprep.subr.bf16.mxu0 0
  %1965 = vmatpush1.bf16.msra.mxu0 0
  %1966 = vmatprep.subr.bf16.mxu0 0
  %1967 = vmatpush1.bf16.msra.mxu0 0
  %1968 = vmatprep.subr.bf16.mxu0 0
  %1969 = vmatpush1.bf16.msra.mxu0 0
  %1970 = vmatprep.subr.bf16.mxu0 0
  %1971 = vmatpush1.bf16.msra.mxu0 0
  %1972 = vmatprep.subr.bf16.mxu0 0
  %1973 = vmatpush1.bf16.msra.mxu0 0
  %1974 = vmatprep.subr.bf16.mxu0 0
  %1975 = vmatpush1.bf16.msra.mxu0 0
  %1976 = vmatprep.mubr.bf16.mxu0 0
  %1977 = vmatmul.mubr.bf16.gmra.mrb[0].mxu0 %v1943
  %v1978 = vpop.f32.mrb[0].mxu0
  %v1979 = vadd.f32 0.0, %v1978
  %v1980 = vpop.f32.mrb[0].mxu0
  %v1981 = vadd.f32 0.0, %v1980
  %v1982 = vpop.f32.mrb[0].mxu0
  %v1983 = vpop.f32.mrb[0].mxu0
  %1984 = vdwg.mxu0
  %1985 = vmatprep.subr.bf16.mxu0 %v1005
  %1986 = vmatpush1.bf16.msra.mxu0 %v1004
  %1987 = vmatprep.subr.bf16.mxu0 %v1009
  %1988 = vmatpush1.bf16.msra.mxu0 %v1008
  %1989 = vmatprep.subr.bf16.mxu0 %v1013
  %1990 = vmatpush1.bf16.msra.mxu0 %v1012
  %1991 = vmatprep.subr.bf16.mxu0 %v1017
  %1992 = vmatpush1.bf16.msra.mxu0 %v1016
  %1993 = vmatprep.subr.bf16.mxu0 %v1021
  %1994 = vmatpush1.bf16.msra.mxu0 %v1020
  %1995 = vmatprep.subr.bf16.mxu0 %v1025
  %1996 = vmatpush1.bf16.msra.mxu0 %v1024
  %1997 = vmatprep.subr.bf16.mxu0 %v1029
  %1998 = vmatpush1.bf16.msra.mxu0 %v1028
  %1999 = vmatprep.subr.bf16.mxu0 %v1033
  %2000 = vmatpush1.bf16.msra.mxu0 %v1032
  %2001 = vmatprep.subr.bf16.mxu0 0
  %2002 = vmatpush1.bf16.msra.mxu0 0
  %2003 = vmatprep.subr.bf16.mxu0 0
  %2004 = vmatpush1.bf16.msra.mxu0 0
  %2005 = vmatprep.subr.bf16.mxu0 0
  %2006 = vmatpush1.bf16.msra.mxu0 0
  %2007 = vmatprep.subr.bf16.mxu0 0
  %2008 = vmatpush1.bf16.msra.mxu0 0
  %2009 = vmatprep.subr.bf16.mxu0 0
  %2010 = vmatpush1.bf16.msra.mxu0 0
  %2011 = vmatprep.subr.bf16.mxu0 0
  %2012 = vmatpush1.bf16.msra.mxu0 0
  %2013 = vmatprep.subr.bf16.mxu0 0
  %2014 = vmatpush1.bf16.msra.mxu0 0
  %2015 = vmatprep.subr.bf16.mxu0 0
  %2016 = vmatpush1.bf16.msra.mxu0 0
  %2017 = vmatprep.mubr.bf16.mxu0 0
  %2018 = vmatmul.mubr.bf16.gmra.mrb[0].mxu0 %v1943
  %v2019 = vpop.f32.mrb[0].mxu0
  %v2020 = vadd.f32 0.0, %v2019
  %v2021 = vpop.f32.mrb[0].mxu0
  %v2022 = vadd.f32 0.0, %v2021
  %v2023 = vpop.f32.mrb[0].mxu0
  %v2024 = vpop.f32.mrb[0].mxu0
  %2025 = vdwg.mxu0
  %v2026 = vadd.f32 %v1939, %v1979
  %v2027 = vadd.f32 %v1940, %v1981
  %v2028 = vadd.f32 %v1941, %v2020
  %v2029 = vadd.f32 %v1942, %v2022
  %s2030 = smul.u32 4, 4
  %s2031 = smul.addr %s2030, 8
  %s2032 = scalar_lea.vmem [#allocation3], %s2031
  %v2033 = vld [vmem:[%s2032] sm:$0xff]
  %v2034 = vld [vmem:[%s2032 + $0x8] sm:$0xff]
  %v2035 = vld [vmem:[%s2032 + $0x10] sm:$0xff]
  %v2036 = vld [vmem:[%s2032 + $0x18] sm:$0xff]
  %v2037 = vpack.c.bf16 %v1931, %v1931
  %2038 = vmatprep.subr.bf16.mxu0 %v1256
  %2039 = vmatpush1.bf16.msra.mxu0 %v1255
  %2040 = vmatprep.subr.bf16.mxu0 %v1260
  %2041 = vmatpush1.bf16.msra.mxu0 %v1259
  %2042 = vmatprep.subr.bf16.mxu0 %v1264
  %2043 = vmatpush1.bf16.msra.mxu0 %v1263
  %2044 = vmatprep.subr.bf16.mxu0 %v1268
  %2045 = vmatpush1.bf16.msra.mxu0 %v1267
  %2046 = vmatprep.subr.bf16.mxu0 %v1272
  %2047 = vmatpush1.bf16.msra.mxu0 %v1271
  %2048 = vmatprep.subr.bf16.mxu0 %v1276
  %2049 = vmatpush1.bf16.msra.mxu0 %v1275
  %2050 = vmatprep.subr.bf16.mxu0 %v1280
  %2051 = vmatpush1.bf16.msra.mxu0 %v1279
  %2052 = vmatprep.subr.bf16.mxu0 %v1284
  %2053 = vmatpush1.bf16.msra.mxu0 %v1283
  %2054 = vmatprep.subr.bf16.mxu0 0
  %2055 = vmatpush1.bf16.msra.mxu0 0
  %2056 = vmatprep.subr.bf16.mxu0 0
  %2057 = vmatpush1.bf16.msra.mxu0 0
  %2058 = vmatprep.subr.bf16.mxu0 0
  %2059 = vmatpush1.bf16.msra.mxu0 0
  %2060 = vmatprep.subr.bf16.mxu0 0
  %2061 = vmatpush1.bf16.msra.mxu0 0
  %2062 = vmatprep.subr.bf16.mxu0 0
  %2063 = vmatpush1.bf16.msra.mxu0 0
  %2064 = vmatprep.subr.bf16.mxu0 0
  %2065 = vmatpush1.bf16.msra.mxu0 0
  %2066 = vmatprep.subr.bf16.mxu0 0
  %2067 = vmatpush1.bf16.msra.mxu0 0
  %2068 = vmatprep.subr.bf16.mxu0 0
  %2069 = vmatpush1.bf16.msra.mxu0 0
  %2070 = vmatprep.mubr.bf16.mxu0 0
  %2071 = vmatmul.mubr.bf16.gmra.mrb[0].mxu0 %v2037
  %v2072 = vpop.f32.mrb[0].mxu0
  %v2073 = vadd.f32 0.0, %v2072
  %v2074 = vpop.f32.mrb[0].mxu0
  %v2075 = vadd.f32 0.0, %v2074
  %v2076 = vpop.f32.mrb[0].mxu0
  %v2077 = vpop.f32.mrb[0].mxu0
  %2078 = vdwg.mxu0
  %2079 = vmatprep.subr.bf16.mxu0 %v1258
  %2080 = vmatpush1.bf16.msra.mxu0 %v1257
  %2081 = vmatprep.subr.bf16.mxu0 %v1262
  %2082 = vmatpush1.bf16.msra.mxu0 %v1261
  %2083 = vmatprep.subr.bf16.mxu0 %v1266
  %2084 = vmatpush1.bf16.msra.mxu0 %v1265
  %2085 = vmatprep.subr.bf16.mxu0 %v1270
  %2086 = vmatpush1.bf16.msra.mxu0 %v1269
  %2087 = vmatprep.subr.bf16.mxu0 %v1274
  %2088 = vmatpush1.bf16.msra.mxu0 %v1273
  %2089 = vmatprep.subr.bf16.mxu0 %v1278
  %2090 = vmatpush1.bf16.msra.mxu0 %v1277
  %2091 = vmatprep.subr.bf16.mxu0 %v1282
  %2092 = vmatpush1.bf16.msra.mxu0 %v1281
  %2093 = vmatprep.subr.bf16.mxu0 %v1286
  %2094 = vmatpush1.bf16.msra.mxu0 %v1285
  %2095 = vmatprep.subr.bf16.mxu0 0
  %2096 = vmatpush1.bf16.msra.mxu0 0
  %2097 = vmatprep.subr.bf16.mxu0 0
  %2098 = vmatpush1.bf16.msra.mxu0 0
  %2099 = vmatprep.subr.bf16.mxu0 0
  %2100 = vmatpush1.bf16.msra.mxu0 0
  %2101 = vmatprep.subr.bf16.mxu0 0
  %2102 = vmatpush1.bf16.msra.mxu0 0
  %2103 = vmatprep.subr.bf16.mxu0 0
  %2104 = vmatpush1.bf16.msra.mxu0 0
  %2105 = vmatprep.subr.bf16.mxu0 0
  %2106 = vmatpush1.bf16.msra.mxu0 0
  %2107 = vmatprep.subr.bf16.mxu0 0
  %2108 = vmatpush1.bf16.msra.mxu0 0
  %2109 = vmatprep.subr.bf16.mxu0 0
  %2110 = vmatpush1.bf16.msra.mxu0 0
  %2111 = vmatprep.mubr.bf16.mxu0 0
  %2112 = vmatmul.mubr.bf16.gmra.mrb[0].mxu0 %v2037
  %v2113 = vpop.f32.mrb[0].mxu0
  %v2114 = vadd.f32 0.0, %v2113
  %v2115 = vpop.f32.mrb[0].mxu0
  %v2116 = vadd.f32 0.0, %v2115
  %v2117 = vpop.f32.mrb[0].mxu0
  %v2118 = vpop.f32.mrb[0].mxu0
  %2119 = vdwg.mxu0
  %v2120 = vadd.f32 %v2033, %v2073
  %v2121 = vadd.f32 %v2034, %v2075
  %v2122 = vadd.f32 %v2035, %v2114
  %v2123 = vadd.f32 %v2036, %v2116
  %v2124 = vxor.u32 %v2026, 2147483648
  %v2125 = vmul.f32 %v2124, 1.442695
  %v2126 = vpow.pop %v2125
  %v2127 = vadd.f32 %v2126, 1.0
  %v2128 = vrcp.pop %v2127
  %v2129 = vmul.f32 1.0, %v2128
  %v2130 = vxor.u32 %v2027, 2147483648
  %v2131 = vmul.f32 %v2130, 1.442695
  %v2132 = vpow.pop %v2131
  %v2133 = vadd.f32 %v2132, 1.0
  %v2134 = vrcp.pop %v2133
  %v2135 = vmul.f32 1.0, %v2134
  %v2136 = vtanh.pop %v2028
  %v2137 = vxor.u32 %v2029, 2147483648
  %v2138 = vmul.f32 %v2137, 1.442695
  %v2139 = vpow.pop %v2138
  %v2140 = vadd.f32 %v2139, 1.0
  %v2141 = vrcp.pop %v2140
  %v2142 = vmul.f32 1.0, %v2141
  %v2143 = vmul.f32 %v2135, %v1905
  %v2144 = vmul.f32 %v2129, %v2136
  %v2145 = vadd.f32 %v2143, %v2144
  %v2146 = vtanh.pop %v2145
  %v2147 = vmul.f32 %v2142, %v2146
  %v2148 = vxor.u32 %v2120, 2147483648
  %v2149 = vmul.f32 %v2148, 1.442695
  %v2150 = vpow.pop %v2149
  %v2151 = vadd.f32 %v2150, 1.0
  %v2152 = vrcp.pop %v2151
  %v2153 = vmul.f32 1.0, %v2152
  %v2154 = vxor.u32 %v2121, 2147483648
  %v2155 = vmul.f32 %v2154, 1.442695
  %v2156 = vpow.pop %v2155
  %v2157 = vadd.f32 %v2156, 1.0
  %v2158 = vrcp.pop %v2157
  %v2159 = vmul.f32 1.0, %v2158
  %v2160 = vtanh.pop %v2122
  %v2161 = vxor.u32 %v2123, 2147483648
  %v2162 = vmul.f32 %v2161, 1.442695
  %v2163 = vpow.pop %v2162
  %v2164 = vadd.f32 %v2163, 1.0
  %v2165 = vrcp.pop %v2164
  %v2166 = vmul.f32 1.0, %v2165
  %v2167 = vmul.f32 %v2159, %v1929
  %v2168 = vmul.f32 %v2153, %v2160
  %v2169 = vadd.f32 %v2167, %v2168
  %v2170 = vtanh.pop %v2169
  %v2171 = vmul.f32 %v2166, %v2170
  %s2172 = scalar_lea.vmem %s5, 24
  %2173 = vst [vmem:[%s2172] sm:$0xff] %v2147
  %s2174 = scalar_lea.vmem [#allocation4], 32
  %2175 = vst [vmem:[%s2174] sm:$0xff] %v2171
  %s2176 = smul.addr %s2030, 8
  %s2177 = scalar_lea.vmem [#allocation2], %s2176
  %v2178 = vld [vmem:[%s2177] sm:$0xff]
  %v2179 = vld [vmem:[%s2177 + $0x8] sm:$0xff]
  %v2180 = vld [vmem:[%s2177 + $0x10] sm:$0xff]
  %v2181 = vld [vmem:[%s2177 + $0x18] sm:$0xff]
  %v2182 = vpack.c.bf16 %v2147, %v2147
  %2183 = vmatprep.subr.bf16.mxu0 %v1003
  %2184 = vmatpush1.bf16.msra.mxu0 %v1002
  %2185 = vmatprep.subr.bf16.mxu0 %v1007
  %2186 = vmatpush1.bf16.msra.mxu0 %v1006
  %2187 = vmatprep.subr.bf16.mxu0 %v1011
  %2188 = vmatpush1.bf16.msra.mxu0 %v1010
  %2189 = vmatprep.subr.bf16.mxu0 %v1015
  %2190 = vmatpush1.bf16.msra.mxu0 %v1014
  %2191 = vmatprep.subr.bf16.mxu0 %v1019
  %2192 = vmatpush1.bf16.msra.mxu0 %v1018
  %2193 = vmatprep.subr.bf16.mxu0 %v1023
  %2194 = vmatpush1.bf16.msra.mxu0 %v1022
  %2195 = vmatprep.subr.bf16.mxu0 %v1027
  %2196 = vmatpush1.bf16.msra.mxu0 %v1026
  %2197 = vmatprep.subr.bf16.mxu0 %v1031
  %2198 = vmatpush1.bf16.msra.mxu0 %v1030
  %2199 = vmatprep.subr.bf16.mxu0 0
  %2200 = vmatpush1.bf16.msra.mxu0 0
  %2201 = vmatprep.subr.bf16.mxu0 0
  %2202 = vmatpush1.bf16.msra.mxu0 0
  %2203 = vmatprep.subr.bf16.mxu0 0
  %2204 = vmatpush1.bf16.msra.mxu0 0
  %2205 = vmatprep.subr.bf16.mxu0 0
  %2206 = vmatpush1.bf16.msra.mxu0 0
  %2207 = vmatprep.subr.bf16.mxu0 0
  %2208 = vmatpush1.bf16.msra.mxu0 0
  %2209 = vmatprep.subr.bf16.mxu0 0
  %2210 = vmatpush1.bf16.msra.mxu0 0
  %2211 = vmatprep.subr.bf16.mxu0 0
  %2212 = vmatpush1.bf16.msra.mxu0 0
  %2213 = vmatprep.subr.bf16.mxu0 0
  %2214 = vmatpush1.bf16.msra.mxu0 0
  %2215 = vmatprep.mubr.bf16.mxu0 0
  %2216 = vmatmul.mubr.bf16.gmra.mrb[0].mxu0 %v2182
  %v2217 = vpop.f32.mrb[0].mxu0
  %v2218 = vadd.f32 0.0, %v2217
  %v2219 = vpop.f32.mrb[0].mxu0
  %v2220 = vadd.f32 0.0, %v2219
  %v2221 = vpop.f32.mrb[0].mxu0
  %v2222 = vpop.f32.mrb[0].mxu0
  %2223 = vdwg.mxu0
  %2224 = vmatprep.subr.bf16.mxu0 %v1005
  %2225 = vmatpush1.bf16.msra.mxu0 %v1004
  %2226 = vmatprep.subr.bf16.mxu0 %v1009
  %2227 = vmatpush1.bf16.msra.mxu0 %v1008
  %2228 = vmatprep.subr.bf16.mxu0 %v1013
  %2229 = vmatpush1.bf16.msra.mxu0 %v1012
  %2230 = vmatprep.subr.bf16.mxu0 %v1017
  %2231 = vmatpush1.bf16.msra.mxu0 %v1016
  %2232 = vmatprep.subr.bf16.mxu0 %v1021
  %2233 = vmatpush1.bf16.msra.mxu0 %v1020
  %2234 = vmatprep.subr.bf16.mxu0 %v1025
  %2235 = vmatpush1.bf16.msra.mxu0 %v1024
  %2236 = vmatprep.subr.bf16.mxu0 %v1029
  %2237 = vmatpush1.bf16.msra.mxu0 %v1028
  %2238 = vmatprep.subr.bf16.mxu0 %v1033
  %2239 = vmatpush1.bf16.msra.mxu0 %v1032
  %2240 = vmatprep.subr.bf16.mxu0 0
  %2241 = vmatpush1.bf16.msra.mxu0 0
  %2242 = vmatprep.subr.bf16.mxu0 0
  %2243 = vmatpush1.bf16.msra.mxu0 0
  %2244 = vmatprep.subr.bf16.mxu0 0
  %2245 = vmatpush1.bf16.msra.mxu0 0
  %2246 = vmatprep.subr.bf16.mxu0 0
  %2247 = vmatpush1.bf16.msra.mxu0 0
  %2248 = vmatprep.subr.bf16.mxu0 0
  %2249 = vmatpush1.bf16.msra.mxu0 0
  %2250 = vmatprep.subr.bf16.mxu0 0
  %2251 = vmatpush1.bf16.msra.mxu0 0
  %2252 = vmatprep.subr.bf16.mxu0 0
  %2253 = vmatpush1.bf16.msra.mxu0 0
  %2254 = vmatprep.subr.bf16.mxu0 0
  %2255 = vmatpush1.bf16.msra.mxu0 0
  %2256 = vmatprep.mubr.bf16.mxu0 0
  %2257 = vmatmul.mubr.bf16.gmra.mrb[0].mxu0 %v2182
  %v2258 = vpop.f32.mrb[0].mxu0
  %v2259 = vadd.f32 0.0, %v2258
  %v2260 = vpop.f32.mrb[0].mxu0
  %v2261 = vadd.f32 0.0, %v2260
  %v2262 = vpop.f32.mrb[0].mxu0
  %v2263 = vpop.f32.mrb[0].mxu0
  %2264 = vdwg.mxu0
  %v2265 = vadd.f32 %v2178, %v2218
  %v2266 = vadd.f32 %v2179, %v2220
  %v2267 = vadd.f32 %v2180, %v2259
  %v2268 = vadd.f32 %v2181, %v2261
  %s2269 = smul.addr %s1936, 8
  %s2270 = scalar_lea.vmem [#allocation3], %s2269
  %v2271 = vld [vmem:[%s2270] sm:$0xff]
  %v2272 = vld [vmem:[%s2270 + $0x8] sm:$0xff]
  %v2273 = vld [vmem:[%s2270 + $0x10] sm:$0xff]
  %v2274 = vld [vmem:[%s2270 + $0x18] sm:$0xff]
  %v2275 = vpack.c.bf16 %v2171, %v2171
  %2276 = vmatprep.subr.bf16.mxu0 %v1256
  %2277 = vmatpush1.bf16.msra.mxu0 %v1255
  %2278 = vmatprep.subr.bf16.mxu0 %v1260
  %2279 = vmatpush1.bf16.msra.mxu0 %v1259
  %2280 = vmatprep.subr.bf16.mxu0 %v1264
  %2281 = vmatpush1.bf16.msra.mxu0 %v1263
  %2282 = vmatprep.subr.bf16.mxu0 %v1268
  %2283 = vmatpush1.bf16.msra.mxu0 %v1267
  %2284 = vmatprep.subr.bf16.mxu0 %v1272
  %2285 = vmatpush1.bf16.msra.mxu0 %v1271
  %2286 = vmatprep.subr.bf16.mxu0 %v1276
  %2287 = vmatpush1.bf16.msra.mxu0 %v1275
  %2288 = vmatprep.subr.bf16.mxu0 %v1280
  %2289 = vmatpush1.bf16.msra.mxu0 %v1279
  %2290 = vmatprep.subr.bf16.mxu0 %v1284
  %2291 = vmatpush1.bf16.msra.mxu0 %v1283
  %2292 = vmatprep.subr.bf16.mxu0 0
  %2293 = vmatpush1.bf16.msra.mxu0 0
  %2294 = vmatprep.subr.bf16.mxu0 0
  %2295 = vmatpush1.bf16.msra.mxu0 0
  %2296 = vmatprep.subr.bf16.mxu0 0
  %2297 = vmatpush1.bf16.msra.mxu0 0
  %2298 = vmatprep.subr.bf16.mxu0 0
  %2299 = vmatpush1.bf16.msra.mxu0 0
  %2300 = vmatprep.subr.bf16.mxu0 0
  %2301 = vmatpush1.bf16.msra.mxu0 0
  %2302 = vmatprep.subr.bf16.mxu0 0
  %2303 = vmatpush1.bf16.msra.mxu0 0
  %2304 = vmatprep.subr.bf16.mxu0 0
  %2305 = vmatpush1.bf16.msra.mxu0 0
  %2306 = vmatprep.subr.bf16.mxu0 0
  %2307 = vmatpush1.bf16.msra.mxu0 0
  %2308 = vmatprep.mubr.bf16.mxu0 0
  %2309 = vmatmul.mubr.bf16.gmra.mrb[0].mxu0 %v2275
  %v2310 = vpop.f32.mrb[0].mxu0
  %v2311 = vadd.f32 0.0, %v2310
  %v2312 = vpop.f32.mrb[0].mxu0
  %v2313 = vadd.f32 0.0, %v2312
  %v2314 = vpop.f32.mrb[0].mxu0
  %v2315 = vpop.f32.mrb[0].mxu0
  %2316 = vdwg.mxu0
  %2317 = vmatprep.subr.bf16.mxu0 %v1258
  %2318 = vmatpush1.bf16.msra.mxu0 %v1257
  %2319 = vmatprep.subr.bf16.mxu0 %v1262
  %2320 = vmatpush1.bf16.msra.mxu0 %v1261
  %2321 = vmatprep.subr.bf16.mxu0 %v1266
  %2322 = vmatpush1.bf16.msra.mxu0 %v1265
  %2323 = vmatprep.subr.bf16.mxu0 %v1270
  %2324 = vmatpush1.bf16.msra.mxu0 %v1269
  %2325 = vmatprep.subr.bf16.mxu0 %v1274
  %2326 = vmatpush1.bf16.msra.mxu0 %v1273
  %2327 = vmatprep.subr.bf16.mxu0 %v1278
  %2328 = vmatpush1.bf16.msra.mxu0 %v1277
  %2329 = vmatprep.subr.bf16.mxu0 %v1282
  %2330 = vmatpush1.bf16.msra.mxu0 %v1281
  %2331 = vmatprep.subr.bf16.mxu0 %v1286
  %2332 = vmatpush1.bf16.msra.mxu0 %v1285
  %2333 = vmatprep.subr.bf16.mxu0 0
  %2334 = vmatpush1.bf16.msra.mxu0 0
  %2335 = vmatprep.subr.bf16.mxu0 0
  %2336 = vmatpush1.bf16.msra.mxu0 0
  %2337 = vmatprep.subr.bf16.mxu0 0
  %2338 = vmatpush1.bf16.msra.mxu0 0
  %2339 = vmatprep.subr.bf16.mxu0 0
  %2340 = vmatpush1.bf16.msra.mxu0 0
  %2341 = vmatprep.subr.bf16.mxu0 0
  %2342 = vmatpush1.bf16.msra.mxu0 0
  %2343 = vmatprep.subr.bf16.mxu0 0
  %2344 = vmatpush1.bf16.msra.mxu0 0
  %2345 = vmatprep.subr.bf16.mxu0 0
  %2346 = vmatpush1.bf16.msra.mxu0 0
  %2347 = vmatprep.subr.bf16.mxu0 0
  %2348 = vmatpush1.bf16.msra.mxu0 0
  %2349 = vmatprep.mubr.bf16.mxu0 0
  %2350 = vmatmul.mubr.bf16.gmra.mrb[0].mxu0 %v2275
  %v2351 = vpop.f32.mrb[0].mxu0
  %v2352 = vadd.f32 0.0, %v2351
  %v2353 = vpop.f32.mrb[0].mxu0
  %v2354 = vadd.f32 0.0, %v2353
  %v2355 = vpop.f32.mrb[0].mxu0
  %v2356 = vpop.f32.mrb[0].mxu0
  %2357 = vdwg.mxu0
  %v2358 = vadd.f32 %v2271, %v2311
  %v2359 = vadd.f32 %v2272, %v2313
  %v2360 = vadd.f32 %v2273, %v2352
  %v2361 = vadd.f32 %v2274, %v2354
  %v2362 = vxor.u32 %v2265, 2147483648
  %v2363 = vmul.f32 %v2362, 1.442695
  %v2364 = vpow.pop %v2363
  %v2365 = vadd.f32 %v2364, 1.0
  %v2366 = vrcp.pop %v2365
  %v2367 = vmul.f32 1.0, %v2366
  %v2368 = vxor.u32 %v2266, 2147483648
  %v2369 = vmul.f32 %v2368, 1.442695
  %v2370 = vpow.pop %v2369
  %v2371 = vadd.f32 %v2370, 1.0
  %v2372 = vrcp.pop %v2371
  %v2373 = vmul.f32 1.0, %v2372
  %v2374 = vtanh.pop %v2267
  %v2375 = vxor.u32 %v2268, 2147483648
  %v2376 = vmul.f32 %v2375, 1.442695
  %v2377 = vpow.pop %v2376
  %v2378 = vadd.f32 %v2377, 1.0
  %v2379 = vrcp.pop %v2378
  %v2380 = vmul.f32 1.0, %v2379
  %v2381 = vmul.f32 %v2373, %v2145
  %v2382 = vmul.f32 %v2367, %v2374
  %v2383 = vadd.f32 %v2381, %v2382
  %v2384 = vtanh.pop %v2383
  %v2385 = vmul.f32 %v2380, %v2384
  %v2386 = vxor.u32 %v2358, 2147483648
  %v2387 = vmul.f32 %v2386, 1.442695
  %v2388 = vpow.pop %v2387
  %v2389 = vadd.f32 %v2388, 1.0
  %v2390 = vrcp.pop %v2389
  %v2391 = vmul.f32 1.0, %v2390
  %v2392 = vxor.u32 %v2359, 2147483648
  %v2393 = vmul.f32 %v2392, 1.442695
  %v2394 = vpow.pop %v2393
  %v2395 = vadd.f32 %v2394, 1.0
  %v2396 = vrcp.pop %v2395
  %v2397 = vmul.f32 1.0, %v2396
  %v2398 = vtanh.pop %v2360
  %v2399 = vxor.u32 %v2361, 2147483648
  %v2400 = vmul.f32 %v2399, 1.442695
  %v2401 = vpow.pop %v2400
  %v2402 = vadd.f32 %v2401, 1.0
  %v2403 = vrcp.pop %v2402
  %v2404 = vmul.f32 1.0, %v2403
  %v2405 = vmul.f32 %v2397, %v2169
  %v2406 = vmul.f32 %v2391, %v2398
  %v2407 = vadd.f32 %v2405, %v2406
  %v2408 = vtanh.pop %v2407
  %v2409 = vmul.f32 %v2404, %v2408
  %s2410 = scalar_lea.vmem %s5, 32
  %2411 = vst [vmem:[%s2410] sm:$0xff] %v2385
  %s2412 = scalar_lea.vmem [#allocation4], 24
  %2413 = vst [vmem:[%s2412] sm:$0xff] %v2409
  %s2414 = smul.addr %s1790, 8
  %s2415 = scalar_lea.vmem [#allocation2], %s2414
  %v2416 = vld [vmem:[%s2415] sm:$0xff]
  %v2417 = vld [vmem:[%s2415 + $0x8] sm:$0xff]
  %v2418 = vld [vmem:[%s2415 + $0x10] sm:$0xff]
  %v2419 = vld [vmem:[%s2415 + $0x18] sm:$0xff]
  %v2420 = vpack.c.bf16 %v2385, %v2385
  %2421 = vmatprep.subr.bf16.mxu0 %v1003
  %2422 = vmatpush1.bf16.msra.mxu0 %v1002
  %2423 = vmatprep.subr.bf16.mxu0 %v1007
  %2424 = vmatpush1.bf16.msra.mxu0 %v1006
  %2425 = vmatprep.subr.bf16.mxu0 %v1011
  %2426 = vmatpush1.bf16.msra.mxu0 %v1010
  %2427 = vmatprep.subr.bf16.mxu0 %v1015
  %2428 = vmatpush1.bf16.msra.mxu0 %v1014
  %2429 = vmatprep.subr.bf16.mxu0 %v1019
  %2430 = vmatpush1.bf16.msra.mxu0 %v1018
  %2431 = vmatprep.subr.bf16.mxu0 %v1023
  %2432 = vmatpush1.bf16.msra.mxu0 %v1022
  %2433 = vmatprep.subr.bf16.mxu0 %v1027
  %2434 = vmatpush1.bf16.msra.mxu0 %v1026
  %2435 = vmatprep.subr.bf16.mxu0 %v1031
  %2436 = vmatpush1.bf16.msra.mxu0 %v1030
  %2437 = vmatprep.subr.bf16.mxu0 0
  %2438 = vmatpush1.bf16.msra.mxu0 0
  %2439 = vmatprep.subr.bf16.mxu0 0
  %2440 = vmatpush1.bf16.msra.mxu0 0
  %2441 = vmatprep.subr.bf16.mxu0 0
  %2442 = vmatpush1.bf16.msra.mxu0 0
  %2443 = vmatprep.subr.bf16.mxu0 0
  %2444 = vmatpush1.bf16.msra.mxu0 0
  %2445 = vmatprep.subr.bf16.mxu0 0
  %2446 = vmatpush1.bf16.msra.mxu0 0
  %2447 = vmatprep.subr.bf16.mxu0 0
  %2448 = vmatpush1.bf16.msra.mxu0 0
  %2449 = vmatprep.subr.bf16.mxu0 0
  %2450 = vmatpush1.bf16.msra.mxu0 0
  %2451 = vmatprep.subr.bf16.mxu0 0
  %2452 = vmatpush1.bf16.msra.mxu0 0
  %2453 = vmatprep.mubr.bf16.mxu0 0
  %2454 = vmatmul.mubr.bf16.gmra.mrb[0].mxu0 %v2420
  %v2455 = vpop.f32.mrb[0].mxu0
  %v2456 = vadd.f32 0.0, %v2455
  %v2457 = vpop.f32.mrb[0].mxu0
  %v2458 = vadd.f32 0.0, %v2457
  %v2459 = vpop.f32.mrb[0].mxu0
  %v2460 = vpop.f32.mrb[0].mxu0
  %2461 = vdwg.mxu0
  %2462 = vmatprep.subr.bf16.mxu0 %v1005
  %2463 = vmatpush1.bf16.msra.mxu0 %v1004
  %2464 = vmatprep.subr.bf16.mxu0 %v1009
  %2465 = vmatpush1.bf16.msra.mxu0 %v1008
  %2466 = vmatprep.subr.bf16.mxu0 %v1013
  %2467 = vmatpush1.bf16.msra.mxu0 %v1012
  %2468 = vmatprep.subr.bf16.mxu0 %v1017
  %2469 = vmatpush1.bf16.msra.mxu0 %v1016
  %2470 = vmatprep.subr.bf16.mxu0 %v1021
  %2471 = vmatpush1.bf16.msra.mxu0 %v1020
  %2472 = vmatprep.subr.bf16.mxu0 %v1025
  %2473 = vmatpush1.bf16.msra.mxu0 %v1024
  %2474 = vmatprep.subr.bf16.mxu0 %v1029
  %2475 = vmatpush1.bf16.msra.mxu0 %v1028
  %2476 = vmatprep.subr.bf16.mxu0 %v1033
  %2477 = vmatpush1.bf16.msra.mxu0 %v1032
  %2478 = vmatprep.subr.bf16.mxu0 0
  %2479 = vmatpush1.bf16.msra.mxu0 0
  %2480 = vmatprep.subr.bf16.mxu0 0
  %2481 = vmatpush1.bf16.msra.mxu0 0
  %2482 = vmatprep.subr.bf16.mxu0 0
  %2483 = vmatpush1.bf16.msra.mxu0 0
  %2484 = vmatprep.subr.bf16.mxu0 0
  %2485 = vmatpush1.bf16.msra.mxu0 0
  %2486 = vmatprep.subr.bf16.mxu0 0
  %2487 = vmatpush1.bf16.msra.mxu0 0
  %2488 = vmatprep.subr.bf16.mxu0 0
  %2489 = vmatpush1.bf16.msra.mxu0 0
  %2490 = vmatprep.subr.bf16.mxu0 0
  %2491 = vmatpush1.bf16.msra.mxu0 0
  %2492 = vmatprep.subr.bf16.mxu0 0
  %2493 = vmatpush1.bf16.msra.mxu0 0
  %2494 = vmatprep.mubr.bf16.mxu0 0
  %2495 = vmatmul.mubr.bf16.gmra.mrb[0].mxu0 %v2420
  %v2496 = vpop.f32.mrb[0].mxu0
  %v2497 = vadd.f32 0.0, %v2496
  %v2498 = vpop.f32.mrb[0].mxu0
  %v2499 = vadd.f32 0.0, %v2498
  %v2500 = vpop.f32.mrb[0].mxu0
  %v2501 = vpop.f32.mrb[0].mxu0
  %2502 = vdwg.mxu0
  %v2503 = vadd.f32 %v2416, %v2456
  %v2504 = vadd.f32 %v2417, %v2458
  %v2505 = vadd.f32 %v2418, %v2497
  %v2506 = vadd.f32 %v2419, %v2499
  %s2507 = smul.addr %s1696, 8
  %s2508 = scalar_lea.vmem [#allocation3], %s2507
  %v2509 = vld [vmem:[%s2508] sm:$0xff]
  %v2510 = vld [vmem:[%s2508 + $0x8] sm:$0xff]
  %v2511 = vld [vmem:[%s2508 + $0x10] sm:$0xff]
  %v2512 = vld [vmem:[%s2508 + $0x18] sm:$0xff]
  %v2513 = vpack.c.bf16 %v2409, %v2409
  %2514 = vmatprep.subr.bf16.mxu0 %v1256
  %2515 = vmatpush1.bf16.msra.mxu0 %v1255
  %2516 = vmatprep.subr.bf16.mxu0 %v1260
  %2517 = vmatpush1.bf16.msra.mxu0 %v1259
  %2518 = vmatprep.subr.bf16.mxu0 %v1264
  %2519 = vmatpush1.bf16.msra.mxu0 %v1263
  %2520 = vmatprep.subr.bf16.mxu0 %v1268
  %2521 = vmatpush1.bf16.msra.mxu0 %v1267
  %2522 = vmatprep.subr.bf16.mxu0 %v1272
  %2523 = vmatpush1.bf16.msra.mxu0 %v1271
  %2524 = vmatprep.subr.bf16.mxu0 %v1276
  %2525 = vmatpush1.bf16.msra.mxu0 %v1275
  %2526 = vmatprep.subr.bf16.mxu0 %v1280
  %2527 = vmatpush1.bf16.msra.mxu0 %v1279
  %2528 = vmatprep.subr.bf16.mxu0 %v1284
  %2529 = vmatpush1.bf16.msra.mxu0 %v1283
  %2530 = vmatprep.subr.bf16.mxu0 0
  %2531 = vmatpush1.bf16.msra.mxu0 0
  %2532 = vmatprep.subr.bf16.mxu0 0
  %2533 = vmatpush1.bf16.msra.mxu0 0
  %2534 = vmatprep.subr.bf16.mxu0 0
  %2535 = vmatpush1.bf16.msra.mxu0 0
  %2536 = vmatprep.subr.bf16.mxu0 0
  %2537 = vmatpush1.bf16.msra.mxu0 0
  %2538 = vmatprep.subr.bf16.mxu0 0
  %2539 = vmatpush1.bf16.msra.mxu0 0
  %2540 = vmatprep.subr.bf16.mxu0 0
  %2541 = vmatpush1.bf16.msra.mxu0 0
  %2542 = vmatprep.subr.bf16.mxu0 0
  %2543 = vmatpush1.bf16.msra.mxu0 0
  %2544 = vmatprep.subr.bf16.mxu0 0
  %2545 = vmatpush1.bf16.msra.mxu0 0
  %2546 = vmatprep.mubr.bf16.mxu0 0
  %2547 = vmatmul.mubr.bf16.gmra.mrb[0].mxu0 %v2513
  %v2548 = vpop.f32.mrb[0].mxu0
  %v2549 = vadd.f32 0.0, %v2548
  %v2550 = vpop.f32.mrb[0].mxu0
  %v2551 = vadd.f32 0.0, %v2550
  %v2552 = vpop.f32.mrb[0].mxu0
  %v2553 = vpop.f32.mrb[0].mxu0
  %2554 = vdwg.mxu0
  %2555 = vmatprep.subr.bf16.mxu0 %v1258
  %2556 = vmatpush1.bf16.msra.mxu0 %v1257
  %2557 = vmatprep.subr.bf16.mxu0 %v1262
  %2558 = vmatpush1.bf16.msra.mxu0 %v1261
  %2559 = vmatprep.subr.bf16.mxu0 %v1266
  %2560 = vmatpush1.bf16.msra.mxu0 %v1265
  %2561 = vmatprep.subr.bf16.mxu0 %v1270
  %2562 = vmatpush1.bf16.msra.mxu0 %v1269
  %2563 = vmatprep.subr.bf16.mxu0 %v1274
  %2564 = vmatpush1.bf16.msra.mxu0 %v1273
  %2565 = vmatprep.subr.bf16.mxu0 %v1278
  %2566 = vmatpush1.bf16.msra.mxu0 %v1277
  %2567 = vmatprep.subr.bf16.mxu0 %v1282
  %2568 = vmatpush1.bf16.msra.mxu0 %v1281
  %2569 = vmatprep.subr.bf16.mxu0 %v1286
  %2570 = vmatpush1.bf16.msra.mxu0 %v1285
  %2571 = vmatprep.subr.bf16.mxu0 0
  %2572 = vmatpush1.bf16.msra.mxu0 0
  %2573 = vmatprep.subr.bf16.mxu0 0
  %2574 = vmatpush1.bf16.msra.mxu0 0
  %2575 = vmatprep.subr.bf16.mxu0 0
  %2576 = vmatpush1.bf16.msra.mxu0 0
  %2577 = vmatprep.subr.bf16.mxu0 0
  %2578 = vmatpush1.bf16.msra.mxu0 0
  %2579 = vmatprep.subr.bf16.mxu0 0
  %2580 = vmatpush1.bf16.msra.mxu0 0
  %2581 = vmatprep.subr.bf16.mxu0 0
  %2582 = vmatpush1.bf16.msra.mxu0 0
  %2583 = vmatprep.subr.bf16.mxu0 0
  %2584 = vmatpush1.bf16.msra.mxu0 0
  %2585 = vmatprep.subr.bf16.mxu0 0
  %2586 = vmatpush1.bf16.msra.mxu0 0
  %2587 = vmatprep.mubr.bf16.mxu0 0
  %2588 = vmatmul.mubr.bf16.gmra.mrb[0].mxu0 %v2513
  %v2589 = vpop.f32.mrb[0].mxu0
  %v2590 = vadd.f32 0.0, %v2589
  %v2591 = vpop.f32.mrb[0].mxu0
  %v2592 = vadd.f32 0.0, %v2591
  %v2593 = vpop.f32.mrb[0].mxu0
  %v2594 = vpop.f32.mrb[0].mxu0
  %2595 = vdwg.mxu0
  %v2596 = vadd.f32 %v2509, %v2549
  %v2597 = vadd.f32 %v2510, %v2551
  %v2598 = vadd.f32 %v2511, %v2590
  %v2599 = vadd.f32 %v2512, %v2592
  %v2600 = vxor.u32 %v2503, 2147483648
  %v2601 = vmul.f32 %v2600, 1.442695
  %v2602 = vpow.pop %v2601
  %v2603 = vadd.f32 %v2602, 1.0
  %v2604 = vrcp.pop %v2603
  %v2605 = vmul.f32 1.0, %v2604
  %v2606 = vxor.u32 %v2504, 2147483648
  %v2607 = vmul.f32 %v2606, 1.442695
  %v2608 = vpow.pop %v2607
  %v2609 = vadd.f32 %v2608, 1.0
  %v2610 = vrcp.pop %v2609
  %v2611 = vmul.f32 1.0, %v2610
  %v2612 = vtanh.pop %v2505
  %v2613 = vxor.u32 %v2506, 2147483648
  %v2614 = vmul.f32 %v2613, 1.442695
  %v2615 = vpow.pop %v2614
  %v2616 = vadd.f32 %v2615, 1.0
  %v2617 = vrcp.pop %v2616
  %v2618 = vmul.f32 1.0, %v2617
  %v2619 = vmul.f32 %v2611, %v2383
  %v2620 = vmul.f32 %v2605, %v2612
  %v2621 = vadd.f32 %v2619, %v2620
  %v2622 = vtanh.pop %v2621
  %v2623 = vmul.f32 %v2618, %v2622
  %v2624 = vxor.u32 %v2596, 2147483648
  %v2625 = vmul.f32 %v2624, 1.442695
  %v2626 = vpow.pop %v2625
  %v2627 = vadd.f32 %v2626, 1.0
  %v2628 = vrcp.pop %v2627
  %v2629 = vmul.f32 1.0, %v2628
  %v2630 = vxor.u32 %v2597, 2147483648
  %v2631 = vmul.f32 %v2630, 1.442695
  %v2632 = vpow.pop %v2631
  %v2633 = vadd.f32 %v2632, 1.0
  %v2634 = vrcp.pop %v2633
  %v2635 = vmul.f32 1.0, %v2634
  %v2636 = vtanh.pop %v2598
  %v2637 = vxor.u32 %v2599, 2147483648
  %v2638 = vmul.f32 %v2637, 1.442695
  %v2639 = vpow.pop %v2638
  %v2640 = vadd.f32 %v2639, 1.0
  %v2641 = vrcp.pop %v2640
  %v2642 = vmul.f32 1.0, %v2641
  %v2643 = vmul.f32 %v2635, %v2407
  %v2644 = vmul.f32 %v2629, %v2636
  %v2645 = vadd.f32 %v2643, %v2644
  %v2646 = vtanh.pop %v2645
  %v2647 = vmul.f32 %v2642, %v2646
  %s2648 = scalar_lea.vmem %s5, 40
  %2649 = vst [vmem:[%s2648] sm:$0xff] %v2623
  %s2650 = scalar_lea.vmem [#allocation4], 16
  %2651 = vst [vmem:[%s2650] sm:$0xff] %v2647
  %s2652 = smul.addr %s1550, 8
  %s2653 = scalar_lea.vmem [#allocation2], %s2652
  %v2654 = vld [vmem:[%s2653] sm:$0xff]
  %v2655 = vld [vmem:[%s2653 + $0x8] sm:$0xff]
  %v2656 = vld [vmem:[%s2653 + $0x10] sm:$0xff]
  %v2657 = vld [vmem:[%s2653 + $0x18] sm:$0xff]
  %v2658 = vpack.c.bf16 %v2623, %v2623
  %2659 = vmatprep.subr.bf16.mxu0 %v1003
  %2660 = vmatpush1.bf16.msra.mxu0 %v1002
  %2661 = vmatprep.subr.bf16.mxu0 %v1007
  %2662 = vmatpush1.bf16.msra.mxu0 %v1006
  %2663 = vmatprep.subr.bf16.mxu0 %v1011
  %2664 = vmatpush1.bf16.msra.mxu0 %v1010
  %2665 = vmatprep.subr.bf16.mxu0 %v1015
  %2666 = vmatpush1.bf16.msra.mxu0 %v1014
  %2667 = vmatprep.subr.bf16.mxu0 %v1019
  %2668 = vmatpush1.bf16.msra.mxu0 %v1018
  %2669 = vmatprep.subr.bf16.mxu0 %v1023
  %2670 = vmatpush1.bf16.msra.mxu0 %v1022
  %2671 = vmatprep.subr.bf16.mxu0 %v1027
  %2672 = vmatpush1.bf16.msra.mxu0 %v1026
  %2673 = vmatprep.subr.bf16.mxu0 %v1031
  %2674 = vmatpush1.bf16.msra.mxu0 %v1030
  %2675 = vmatprep.subr.bf16.mxu0 0
  %2676 = vmatpush1.bf16.msra.mxu0 0
  %2677 = vmatprep.subr.bf16.mxu0 0
  %2678 = vmatpush1.bf16.msra.mxu0 0
  %2679 = vmatprep.subr.bf16.mxu0 0
  %2680 = vmatpush1.bf16.msra.mxu0 0
  %2681 = vmatprep.subr.bf16.mxu0 0
  %2682 = vmatpush1.bf16.msra.mxu0 0
  %2683 = vmatprep.subr.bf16.mxu0 0
  %2684 = vmatpush1.bf16.msra.mxu0 0
  %2685 = vmatprep.subr.bf16.mxu0 0
  %2686 = vmatpush1.bf16.msra.mxu0 0
  %2687 = vmatprep.subr.bf16.mxu0 0
  %2688 = vmatpush1.bf16.msra.mxu0 0
  %2689 = vmatprep.subr.bf16.mxu0 0
  %2690 = vmatpush1.bf16.msra.mxu0 0
  %2691 = vmatprep.mubr.bf16.mxu0 0
  %2692 = vmatmul.mubr.bf16.gmra.mrb[0].mxu0 %v2658
  %v2693 = vpop.f32.mrb[0].mxu0
  %v2694 = vadd.f32 0.0, %v2693
  %v2695 = vpop.f32.mrb[0].mxu0
  %v2696 = vadd.f32 0.0, %v2695
  %v2697 = vpop.f32.mrb[0].mxu0
  %v2698 = vpop.f32.mrb[0].mxu0
  %2699 = vdwg.mxu0
  %2700 = vmatprep.subr.bf16.mxu0 %v1005
  %2701 = vmatpush1.bf16.msra.mxu0 %v1004
  %2702 = vmatprep.subr.bf16.mxu0 %v1009
  %2703 = vmatpush1.bf16.msra.mxu0 %v1008
  %2704 = vmatprep.subr.bf16.mxu0 %v1013
  %2705 = vmatpush1.bf16.msra.mxu0 %v1012
  %2706 = vmatprep.subr.bf16.mxu0 %v1017
  %2707 = vmatpush1.bf16.msra.mxu0 %v1016
  %2708 = vmatprep.subr.bf16.mxu0 %v1021
  %2709 = vmatpush1.bf16.msra.mxu0 %v1020
  %2710 = vmatprep.subr.bf16.mxu0 %v1025
  %2711 = vmatpush1.bf16.msra.mxu0 %v1024
  %2712 = vmatprep.subr.bf16.mxu0 %v1029
  %2713 = vmatpush1.bf16.msra.mxu0 %v1028
  %2714 = vmatprep.subr.bf16.mxu0 %v1033
  %2715 = vmatpush1.bf16.msra.mxu0 %v1032
  %2716 = vmatprep.subr.bf16.mxu0 0
  %2717 = vmatpush1.bf16.msra.mxu0 0
  %2718 = vmatprep.subr.bf16.mxu0 0
  %2719 = vmatpush1.bf16.msra.mxu0 0
  %2720 = vmatprep.subr.bf16.mxu0 0
  %2721 = vmatpush1.bf16.msra.mxu0 0
  %2722 = vmatprep.subr.bf16.mxu0 0
  %2723 = vmatpush1.bf16.msra.mxu0 0
  %2724 = vmatprep.subr.bf16.mxu0 0
  %2725 = vmatpush1.bf16.msra.mxu0 0
  %2726 = vmatprep.subr.bf16.mxu0 0
  %2727 = vmatpush1.bf16.msra.mxu0 0
  %2728 = vmatprep.subr.bf16.mxu0 0
  %2729 = vmatpush1.bf16.msra.mxu0 0
  %2730 = vmatprep.subr.bf16.mxu0 0
  %2731 = vmatpush1.bf16.msra.mxu0 0
  %2732 = vmatprep.mubr.bf16.mxu0 0
  %2733 = vmatmul.mubr.bf16.gmra.mrb[0].mxu0 %v2658
  %v2734 = vpop.f32.mrb[0].mxu0
  %v2735 = vadd.f32 0.0, %v2734
  %v2736 = vpop.f32.mrb[0].mxu0
  %v2737 = vadd.f32 0.0, %v2736
  %v2738 = vpop.f32.mrb[0].mxu0
  %v2739 = vpop.f32.mrb[0].mxu0
  %2740 = vdwg.mxu0
  %v2741 = vadd.f32 %v2654, %v2694
  %v2742 = vadd.f32 %v2655, %v2696
  %v2743 = vadd.f32 %v2656, %v2735
  %v2744 = vadd.f32 %v2657, %v2737
  %s2745 = smul.addr %s1456, 8
  %s2746 = scalar_lea.vmem [#allocation3], %s2745
  %v2747 = vld [vmem:[%s2746] sm:$0xff]
  %v2748 = vld [vmem:[%s2746 + $0x8] sm:$0xff]
  %v2749 = vld [vmem:[%s2746 + $0x10] sm:$0xff]
  %v2750 = vld [vmem:[%s2746 + $0x18] sm:$0xff]
  %v2751 = vpack.c.bf16 %v2647, %v2647
  %2752 = vmatprep.subr.bf16.mxu0 %v1256
  %2753 = vmatpush1.bf16.msra.mxu0 %v1255
  %2754 = vmatprep.subr.bf16.mxu0 %v1260
  %2755 = vmatpush1.bf16.msra.mxu0 %v1259
  %2756 = vmatprep.subr.bf16.mxu0 %v1264
  %2757 = vmatpush1.bf16.msra.mxu0 %v1263
  %2758 = vmatprep.subr.bf16.mxu0 %v1268
  %2759 = vmatpush1.bf16.msra.mxu0 %v1267
  %2760 = vmatprep.subr.bf16.mxu0 %v1272
  %2761 = vmatpush1.bf16.msra.mxu0 %v1271
  %2762 = vmatprep.subr.bf16.mxu0 %v1276
  %2763 = vmatpush1.bf16.msra.mxu0 %v1275
  %2764 = vmatprep.subr.bf16.mxu0 %v1280
  %2765 = vmatpush1.bf16.msra.mxu0 %v1279
  %2766 = vmatprep.subr.bf16.mxu0 %v1284
  %2767 = vmatpush1.bf16.msra.mxu0 %v1283
  %2768 = vmatprep.subr.bf16.mxu0 0
  %2769 = vmatpush1.bf16.msra.mxu0 0
  %2770 = vmatprep.subr.bf16.mxu0 0
  %2771 = vmatpush1.bf16.msra.mxu0 0
  %2772 = vmatprep.subr.bf16.mxu0 0
  %2773 = vmatpush1.bf16.msra.mxu0 0
  %2774 = vmatprep.subr.bf16.mxu0 0
  %2775 = vmatpush1.bf16.msra.mxu0 0
  %2776 = vmatprep.subr.bf16.mxu0 0
  %2777 = vmatpush1.bf16.msra.mxu0 0
  %2778 = vmatprep.subr.bf16.mxu0 0
  %2779 = vmatpush1.bf16.msra.mxu0 0
  %2780 = vmatprep.subr.bf16.mxu0 0
  %2781 = vmatpush1.bf16.msra.mxu0 0
  %2782 = vmatprep.subr.bf16.mxu0 0
  %2783 = vmatpush1.bf16.msra.mxu0 0
  %2784 = vmatprep.mubr.bf16.mxu0 0
  %2785 = vmatmul.mubr.bf16.gmra.mrb[0].mxu0 %v2751
  %v2786 = vpop.f32.mrb[0].mxu0
  %v2787 = vadd.f32 0.0, %v2786
  %v2788 = vpop.f32.mrb[0].mxu0
  %v2789 = vadd.f32 0.0, %v2788
  %v2790 = vpop.f32.mrb[0].mxu0
  %v2791 = vpop.f32.mrb[0].mxu0
  %2792 = vdwg.mxu0
  %2793 = vmatprep.subr.bf16.mxu0 %v1258
  %2794 = vmatpush1.bf16.msra.mxu0 %v1257
  %2795 = vmatprep.subr.bf16.mxu0 %v1262
  %2796 = vmatpush1.bf16.msra.mxu0 %v1261
  %2797 = vmatprep.subr.bf16.mxu0 %v1266
  %2798 = vmatpush1.bf16.msra.mxu0 %v1265
  %2799 = vmatprep.subr.bf16.mxu0 %v1270
  %2800 = vmatpush1.bf16.msra.mxu0 %v1269
  %2801 = vmatprep.subr.bf16.mxu0 %v1274
  %2802 = vmatpush1.bf16.msra.mxu0 %v1273
  %2803 = vmatprep.subr.bf16.mxu0 %v1278
  %2804 = vmatpush1.bf16.msra.mxu0 %v1277
  %2805 = vmatprep.subr.bf16.mxu0 %v1282
  %2806 = vmatpush1.bf16.msra.mxu0 %v1281
  %2807 = vmatprep.subr.bf16.mxu0 %v1286
  %2808 = vmatpush1.bf16.msra.mxu0 %v1285
  %2809 = vmatprep.subr.bf16.mxu0 0
  %2810 = vmatpush1.bf16.msra.mxu0 0
  %2811 = vmatprep.subr.bf16.mxu0 0
  %2812 = vmatpush1.bf16.msra.mxu0 0
  %2813 = vmatprep.subr.bf16.mxu0 0
  %2814 = vmatpush1.bf16.msra.mxu0 0
  %2815 = vmatprep.subr.bf16.mxu0 0
  %2816 = vmatpush1.bf16.msra.mxu0 0
  %2817 = vmatprep.subr.bf16.mxu0 0
  %2818 = vmatpush1.bf16.msra.mxu0 0
  %2819 = vmatprep.subr.bf16.mxu0 0
  %2820 = vmatpush1.bf16.msra.mxu0 0
  %2821 = vmatprep.subr.bf16.mxu0 0
  %2822 = vmatpush1.bf16.msra.mxu0 0
  %2823 = vmatprep.subr.bf16.mxu0 0
  %2824 = vmatpush1.bf16.msra.mxu0 0
  %2825 = vmatprep.mubr.bf16.mxu0 0
  %2826 = vmatmul.mubr.bf16.gmra.mrb[0].mxu0 %v2751
  %v2827 = vpop.f32.mrb[0].mxu0
  %v2828 = vadd.f32 0.0, %v2827
  %v2829 = vpop.f32.mrb[0].mxu0
  %v2830 = vadd.f32 0.0, %v2829
  %v2831 = vpop.f32.mrb[0].mxu0
  %v2832 = vpop.f32.mrb[0].mxu0
  %2833 = vdwg.mxu0
  %v2834 = vadd.f32 %v2747, %v2787
  %v2835 = vadd.f32 %v2748, %v2789
  %v2836 = vadd.f32 %v2749, %v2828
  %v2837 = vadd.f32 %v2750, %v2830
  %v2838 = vxor.u32 %v2741, 2147483648
  %v2839 = vmul.f32 %v2838, 1.442695
  %v2840 = vpow.pop %v2839
  %v2841 = vadd.f32 %v2840, 1.0
  %v2842 = vrcp.pop %v2841
  %v2843 = vmul.f32 1.0, %v2842
  %v2844 = vxor.u32 %v2742, 2147483648
  %v2845 = vmul.f32 %v2844, 1.442695
  %v2846 = vpow.pop %v2845
  %v2847 = vadd.f32 %v2846, 1.0
  %v2848 = vrcp.pop %v2847
  %v2849 = vmul.f32 1.0, %v2848
  %v2850 = vtanh.pop %v2743
  %v2851 = vxor.u32 %v2744, 2147483648
  %v2852 = vmul.f32 %v2851, 1.442695
  %v2853 = vpow.pop %v2852
  %v2854 = vadd.f32 %v2853, 1.0
  %v2855 = vrcp.pop %v2854
  %v2856 = vmul.f32 1.0, %v2855
  %v2857 = vmul.f32 %v2849, %v2621
  %v2858 = vmul.f32 %v2843, %v2850
  %v2859 = vadd.f32 %v2857, %v2858
  %v2860 = vtanh.pop %v2859
  %v2861 = vmul.f32 %v2856, %v2860
  %v2862 = vxor.u32 %v2834, 2147483648
  %v2863 = vmul.f32 %v2862, 1.442695
  %v2864 = vpow.pop %v2863
  %v2865 = vadd.f32 %v2864, 1.0
  %v2866 = vrcp.pop %v2865
  %v2867 = vmul.f32 1.0, %v2866
  %v2868 = vxor.u32 %v2835, 2147483648
  %v2869 = vmul.f32 %v2868, 1.442695
  %v2870 = vpow.pop %v2869
  %v2871 = vadd.f32 %v2870, 1.0
  %v2872 = vrcp.pop %v2871
  %v2873 = vmul.f32 1.0, %v2872
  %v2874 = vtanh.pop %v2836
  %v2875 = vxor.u32 %v2837, 2147483648
  %v2876 = vmul.f32 %v2875, 1.442695
  %v2877 = vpow.pop %v2876
  %v2878 = vadd.f32 %v2877, 1.0
  %v2879 = vrcp.pop %v2878
  %v2880 = vmul.f32 1.0, %v2879
  %v2881 = vmul.f32 %v2873, %v2645
  %v2882 = vmul.f32 %v2867, %v2874
  %v2883 = vadd.f32 %v2881, %v2882
  %v2884 = vtanh.pop %v2883
  %v2885 = vmul.f32 %v2880, %v2884
  %s2886 = scalar_lea.vmem %s5, 48
  %2887 = vst [vmem:[%s2886] sm:$0xff] %v2861
  %s2888 = scalar_lea.vmem [#allocation4], 8
  %2889 = vst [vmem:[%s2888] sm:$0xff] %v2885
  %s2890 = smul.addr %s1152, 8
  %s2891 = scalar_lea.vmem [#allocation2], %s2890
  %v2892 = vld [vmem:[%s2891] sm:$0xff]
  %v2893 = vld [vmem:[%s2891 + $0x8] sm:$0xff]
  %v2894 = vld [vmem:[%s2891 + $0x10] sm:$0xff]
  %v2895 = vld [vmem:[%s2891 + $0x18] sm:$0xff]
  %v2896 = vpack.c.bf16 %v2861, %v2861
  %2897 = vmatprep.subr.bf16.mxu0 %v1003
  %2898 = vmatpush1.bf16.msra.mxu0 %v1002
  %2899 = vmatprep.subr.bf16.mxu0 %v1007
  %2900 = vmatpush1.bf16.msra.mxu0 %v1006
  %2901 = vmatprep.subr.bf16.mxu0 %v1011
  %2902 = vmatpush1.bf16.msra.mxu0 %v1010
  %2903 = vmatprep.subr.bf16.mxu0 %v1015
  %2904 = vmatpush1.bf16.msra.mxu0 %v1014
  %2905 = vmatprep.subr.bf16.mxu0 %v1019
  %2906 = vmatpush1.bf16.msra.mxu0 %v1018
  %2907 = vmatprep.subr.bf16.mxu0 %v1023
  %2908 = vmatpush1.bf16.msra.mxu0 %v1022
  %2909 = vmatprep.subr.bf16.mxu0 %v1027
  %2910 = vmatpush1.bf16.msra.mxu0 %v1026
  %2911 = vmatprep.subr.bf16.mxu0 %v1031
  %2912 = vmatpush1.bf16.msra.mxu0 %v1030
  %2913 = vmatprep.subr.bf16.mxu0 0
  %2914 = vmatpush1.bf16.msra.mxu0 0
  %2915 = vmatprep.subr.bf16.mxu0 0
  %2916 = vmatpush1.bf16.msra.mxu0 0
  %2917 = vmatprep.subr.bf16.mxu0 0
  %2918 = vmatpush1.bf16.msra.mxu0 0
  %2919 = vmatprep.subr.bf16.mxu0 0
  %2920 = vmatpush1.bf16.msra.mxu0 0
  %2921 = vmatprep.subr.bf16.mxu0 0
  %2922 = vmatpush1.bf16.msra.mxu0 0
  %2923 = vmatprep.subr.bf16.mxu0 0
  %2924 = vmatpush1.bf16.msra.mxu0 0
  %2925 = vmatprep.subr.bf16.mxu0 0
  %2926 = vmatpush1.bf16.msra.mxu0 0
  %2927 = vmatprep.subr.bf16.mxu0 0
  %2928 = vmatpush1.bf16.msra.mxu0 0
  %2929 = vmatprep.mubr.bf16.mxu0 0
  %2930 = vmatmul.mubr.bf16.gmra.mrb[0].mxu0 %v2896
  %v2931 = vpop.f32.mrb[0].mxu0
  %v2932 = vadd.f32 0.0, %v2931
  %v2933 = vpop.f32.mrb[0].mxu0
  %v2934 = vadd.f32 0.0, %v2933
  %v2935 = vpop.f32.mrb[0].mxu0
  %v2936 = vpop.f32.mrb[0].mxu0
  %2937 = vdwg.mxu0
  %2938 = vmatprep.subr.bf16.mxu0 %v1005
  %2939 = vmatpush1.bf16.msra.mxu0 %v1004
  %2940 = vmatprep.subr.bf16.mxu0 %v1009
  %2941 = vmatpush1.bf16.msra.mxu0 %v1008
  %2942 = vmatprep.subr.bf16.mxu0 %v1013
  %2943 = vmatpush1.bf16.msra.mxu0 %v1012
  %2944 = vmatprep.subr.bf16.mxu0 %v1017
  %2945 = vmatpush1.bf16.msra.mxu0 %v1016
  %2946 = vmatprep.subr.bf16.mxu0 %v1021
  %2947 = vmatpush1.bf16.msra.mxu0 %v1020
  %2948 = vmatprep.subr.bf16.mxu0 %v1025
  %2949 = vmatpush1.bf16.msra.mxu0 %v1024
  %2950 = vmatprep.subr.bf16.mxu0 %v1029
  %2951 = vmatpush1.bf16.msra.mxu0 %v1028
  %2952 = vmatprep.subr.bf16.mxu0 %v1033
  %2953 = vmatpush1.bf16.msra.mxu0 %v1032
  %2954 = vmatprep.subr.bf16.mxu0 0
  %2955 = vmatpush1.bf16.msra.mxu0 0
  %2956 = vmatprep.subr.bf16.mxu0 0
  %2957 = vmatpush1.bf16.msra.mxu0 0
  %2958 = vmatprep.subr.bf16.mxu0 0
  %2959 = vmatpush1.bf16.msra.mxu0 0
  %2960 = vmatprep.subr.bf16.mxu0 0
  %2961 = vmatpush1.bf16.msra.mxu0 0
  %2962 = vmatprep.subr.bf16.mxu0 0
  %2963 = vmatpush1.bf16.msra.mxu0 0
  %2964 = vmatprep.subr.bf16.mxu0 0
  %2965 = vmatpush1.bf16.msra.mxu0 0
  %2966 = vmatprep.subr.bf16.mxu0 0
  %2967 = vmatpush1.bf16.msra.mxu0 0
  %2968 = vmatprep.subr.bf16.mxu0 0
  %2969 = vmatpush1.bf16.msra.mxu0 0
  %2970 = vmatprep.mubr.bf16.mxu0 0
  %2971 = vmatmul.mubr.bf16.gmra.mrb[0].mxu0 %v2896
  %v2972 = vpop.f32.mrb[0].mxu0
  %v2973 = vadd.f32 0.0, %v2972
  %v2974 = vpop.f32.mrb[0].mxu0
  %v2975 = vadd.f32 0.0, %v2974
  %v2976 = vpop.f32.mrb[0].mxu0
  %v2977 = vpop.f32.mrb[0].mxu0
  %2978 = vdwg.mxu0
  %v2979 = vadd.f32 %v2892, %v2932
  %v2980 = vadd.f32 %v2893, %v2934
  %v2981 = vadd.f32 %v2894, %v2973
  %v2982 = vadd.f32 %v2895, %v2975
  %s2983 = smul.addr %s899, 8
  %s2984 = scalar_lea.vmem [#allocation3], %s2983
  %v2985 = vld [vmem:[%s2984] sm:$0xff]
  %v2986 = vld [vmem:[%s2984 + $0x8] sm:$0xff]
  %v2987 = vld [vmem:[%s2984 + $0x10] sm:$0xff]
  %v2988 = vld [vmem:[%s2984 + $0x18] sm:$0xff]
  %v2989 = vpack.c.bf16 %v2885, %v2885
  %2990 = vmatprep.subr.bf16.mxu0 %v1256
  %2991 = vmatpush1.bf16.msra.mxu0 %v1255
  %2992 = vmatprep.subr.bf16.mxu0 %v1260
  %2993 = vmatpush1.bf16.msra.mxu0 %v1259
  %2994 = vmatprep.subr.bf16.mxu0 %v1264
  %2995 = vmatpush1.bf16.msra.mxu0 %v1263
  %2996 = vmatprep.subr.bf16.mxu0 %v1268
  %2997 = vmatpush1.bf16.msra.mxu0 %v1267
  %2998 = vmatprep.subr.bf16.mxu0 %v1272
  %2999 = vmatpush1.bf16.msra.mxu0 %v1271
  %3000 = vmatprep.subr.bf16.mxu0 %v1276
  %3001 = vmatpush1.bf16.msra.mxu0 %v1275
  %3002 = vmatprep.subr.bf16.mxu0 %v1280
  %3003 = vmatpush1.bf16.msra.mxu0 %v1279
  %3004 = vmatprep.subr.bf16.mxu0 %v1284
  %3005 = vmatpush1.bf16.msra.mxu0 %v1283
  %3006 = vmatprep.subr.bf16.mxu0 0
  %3007 = vmatpush1.bf16.msra.mxu0 0
  %3008 = vmatprep.subr.bf16.mxu0 0
  %3009 = vmatpush1.bf16.msra.mxu0 0
  %3010 = vmatprep.subr.bf16.mxu0 0
  %3011 = vmatpush1.bf16.msra.mxu0 0
  %3012 = vmatprep.subr.bf16.mxu0 0
  %3013 = vmatpush1.bf16.msra.mxu0 0
  %3014 = vmatprep.subr.bf16.mxu0 0
  %3015 = vmatpush1.bf16.msra.mxu0 0
  %3016 = vmatprep.subr.bf16.mxu0 0
  %3017 = vmatpush1.bf16.msra.mxu0 0
  %3018 = vmatprep.subr.bf16.mxu0 0
  %3019 = vmatpush1.bf16.msra.mxu0 0
  %3020 = vmatprep.subr.bf16.mxu0 0
  %3021 = vmatpush1.bf16.msra.mxu0 0
  %3022 = vmatprep.mubr.bf16.mxu0 0
  %3023 = vmatmul.mubr.bf16.gmra.mrb[0].mxu0 %v2989
  %v3024 = vpop.f32.mrb[0].mxu0
  %v3025 = vadd.f32 0.0, %v3024
  %v3026 = vpop.f32.mrb[0].mxu0
  %v3027 = vadd.f32 0.0, %v3026
  %v3028 = vpop.f32.mrb[0].mxu0
  %v3029 = vpop.f32.mrb[0].mxu0
  %3030 = vdwg.mxu0
  %3031 = vmatprep.subr.bf16.mxu0 %v1258
  %3032 = vmatpush1.bf16.msra.mxu0 %v1257
  %3033 = vmatprep.subr.bf16.mxu0 %v1262
  %3034 = vmatpush1.bf16.msra.mxu0 %v1261
  %3035 = vmatprep.subr.bf16.mxu0 %v1266
  %3036 = vmatpush1.bf16.msra.mxu0 %v1265
  %3037 = vmatprep.subr.bf16.mxu0 %v1270
  %3038 = vmatpush1.bf16.msra.mxu0 %v1269
  %3039 = vmatprep.subr.bf16.mxu0 %v1274
  %3040 = vmatpush1.bf16.msra.mxu0 %v1273
  %3041 = vmatprep.subr.bf16.mxu0 %v1278
  %3042 = vmatpush1.bf16.msra.mxu0 %v1277
  %3043 = vmatprep.subr.bf16.mxu0 %v1282
  %3044 = vmatpush1.bf16.msra.mxu0 %v1281
  %3045 = vmatprep.subr.bf16.mxu0 %v1286
  %3046 = vmatpush1.bf16.msra.mxu0 %v1285
  %3047 = vmatprep.subr.bf16.mxu0 0
  %3048 = vmatpush1.bf16.msra.mxu0 0
  %3049 = vmatprep.subr.bf16.mxu0 0
  %3050 = vmatpush1.bf16.msra.mxu0 0
  %3051 = vmatprep.subr.bf16.mxu0 0
  %3052 = vmatpush1.bf16.msra.mxu0 0
  %3053 = vmatprep.subr.bf16.mxu0 0
  %3054 = vmatpush1.bf16.msra.mxu0 0
  %3055 = vmatprep.subr.bf16.mxu0 0
  %3056 = vmatpush1.bf16.msra.mxu0 0
  %3057 = vmatprep.subr.bf16.mxu0 0
  %3058 = vmatpush1.bf16.msra.mxu0 0
  %3059 = vmatprep.subr.bf16.mxu0 0
  %3060 = vmatpush1.bf16.msra.mxu0 0
  %3061 = vmatprep.subr.bf16.mxu0 0
  %3062 = vmatpush1.bf16.msra.mxu0 0
  %3063 = vmatprep.mubr.bf16.mxu0 0
  %3064 = vmatmul.mubr.bf16.gmra.mrb[0].mxu0 %v2989
  %v3065 = vpop.f32.mrb[0].mxu0
  %v3066 = vadd.f32 0.0, %v3065
  %v3067 = vpop.f32.mrb[0].mxu0
  %v3068 = vadd.f32 0.0, %v3067
  %v3069 = vpop.f32.mrb[0].mxu0
  %v3070 = vpop.f32.mrb[0].mxu0
  %3071 = vdwg.mxu0
  %v3072 = vadd.f32 %v2985, %v3025
  %v3073 = vadd.f32 %v2986, %v3027
  %v3074 = vadd.f32 %v2987, %v3066
  %v3075 = vadd.f32 %v2988, %v3068
  %v3076 = vxor.u32 %v2979, 2147483648
  %v3077 = vmul.f32 %v3076, 1.442695
  %v3078 = vpow.pop %v3077
  %v3079 = vadd.f32 %v3078, 1.0
  %v3080 = vrcp.pop %v3079
  %v3081 = vmul.f32 1.0, %v3080
  %v3082 = vxor.u32 %v2980, 2147483648
  %v3083 = vmul.f32 %v3082, 1.442695
  %v3084 = vpow.pop %v3083
  %v3085 = vadd.f32 %v3084, 1.0
  %v3086 = vrcp.pop %v3085
  %v3087 = vmul.f32 1.0, %v3086
  %v3088 = vtanh.pop %v2981
  %v3089 = vxor.u32 %v2982, 2147483648
  %v3090 = vmul.f32 %v3089, 1.442695
  %v3091 = vpow.pop %v3090
  %v3092 = vadd.f32 %v3091, 1.0
  %v3093 = vrcp.pop %v3092
  %v3094 = vmul.f32 1.0, %v3093
  %v3095 = vmul.f32 %v3087, %v2859
  %v3096 = vmul.f32 %v3081, %v3088
  %v3097 = vadd.f32 %v3095, %v3096
  %v3098 = vtanh.pop %v3097
  %v3099 = vmul.f32 %v3094, %v3098
  %v3100 = vxor.u32 %v3072, 2147483648
  %v3101 = vmul.f32 %v3100, 1.442695
  %v3102 = vpow.pop %v3101
  %v3103 = vadd.f32 %v3102, 1.0
  %v3104 = vrcp.pop %v3103
  %v3105 = vmul.f32 1.0, %v3104
  %v3106 = vxor.u32 %v3073, 2147483648
  %v3107 = vmul.f32 %v3106, 1.442695
  %v3108 = vpow.pop %v3107
  %v3109 = vadd.f32 %v3108, 1.0
  %v3110 = vrcp.pop %v3109
  %v3111 = vmul.f32 1.0, %v3110
  %v3112 = vtanh.pop %v3074
  %v3113 = vxor.u32 %v3075, 2147483648
  %v3114 = vmul.f32 %v3113, 1.442695
  %v3115 = vpow.pop %v3114
  %v3116 = vadd.f32 %v3115, 1.0
  %v3117 = vrcp.pop %v3116
  %v3118 = vmul.f32 1.0, %v3117
  %v3119 = vmul.f32 %v3111, %v2883
  %v3120 = vmul.f32 %v3105, %v3112
  %v3121 = vadd.f32 %v3119, %v3120
  %v3122 = vtanh.pop %v3121
  %v3123 = vmul.f32 %v3118, %v3122
  %s3124 = scalar_lea.vmem %s5, 56
  %3125 = vst [vmem:[%s3124] sm:$0xff] %v3099
  %3126 = vst [vmem:[#allocation4] sm:$0xff] %v3123
  %v3127 = vld [vmem:[%s5] sm:$0xff]
  %v3128 = vld [vmem:[%s5 + $0x8] sm:$0xff]
  %v3129 = vld [vmem:[%s5 + $0x10] sm:$0xff]
  %v3130 = vld [vmem:[%s5 + $0x18] sm:$0xff]
  %v3131 = vld [vmem:[%s5 + $0x20] sm:$0xff]
  %v3132 = vld [vmem:[%s5 + $0x28] sm:$0xff]
  %v3133 = vld [vmem:[%s5 + $0x30] sm:$0xff]
  %v3134 = vld [vmem:[%s5 + $0x38] sm:$0xff]
  %v3135 = vld [vmem:[#allocation4] sm:$0xff]
  %v3136 = vld [vmem:[#allocation4 + $0x8] sm:$0xff]
  %v3137 = vld [vmem:[#allocation4 + $0x10] sm:$0xff]
  %v3138 = vld [vmem:[#allocation4 + $0x18] sm:$0xff]
  %v3139 = vld [vmem:[#allocation4 + $0x20] sm:$0xff]
  %v3140 = vld [vmem:[#allocation4 + $0x28] sm:$0xff]
  %v3141 = vld [vmem:[#allocation4 + $0x30] sm:$0xff]
  %v3142 = vld [vmem:[#allocation4 + $0x38] sm:$0xff]
  %v3143 = vadd.f32 %v3127, %v3135
  %v3144 = vadd.f32 %v3128, %v3136
  %v3145 = vadd.f32 %v3129, %v3137
  %v3146 = vadd.f32 %v3130, %v3138
  %v3147 = vadd.f32 %v3131, %v3139
  %v3148 = vadd.f32 %v3132, %v3140
  %v3149 = vadd.f32 %v3133, %v3141
  %v3150 = vadd.f32 %v3134, %v3142
  %3151 = vst [vmem:[%s5] sm:$0xff] %v3143
  %3152 = vst [vmem:[%s5 + $0x8] sm:$0xff] %v3144
  %3153 = vst [vmem:[%s5 + $0x10] sm:$0xff] %v3145
  %3154 = vst [vmem:[%s5 + $0x18] sm:$0xff] %v3146
  %3155 = vst [vmem:[%s5 + $0x20] sm:$0xff] %v3147
  %3156 = vst [vmem:[%s5 + $0x28] sm:$0xff] %v3148
  %3157 = vst [vmem:[%s5 + $0x30] sm:$0xff] %v3149
  %3158 = vst [vmem:[%s5 + $0x38] sm:$0xff] %v3150
  // Predicated region
  $region22: #{encoder_rnn_forward.1} parent=0 // pred_check
    _
  $region23: #{encoder_rnn_forward.1} parent=0 // pred_check_branch
    %3160 = sbr.rel (0) target = $region25
  $region24: #{encoder_rnn_forward.1} parent=0 // pred_region
    _
  $region25: #{encoder_rnn_forward.1} parent=0 // pred_fallthru
    _
  // Predicated region
  $region26: #{encoder_rnn_forward.1} parent=0 // pred_check
    _
  $region27: #{encoder_rnn_forward.1} parent=0 // pred_check_branch
    %3162 = sbr.rel (0) target = $region29
  $region28: #{encoder_rnn_forward.1} parent=0 // pred_region
    _
  $region29: #{encoder_rnn_forward.1} parent=0 // pred_fallthru
    _

</llo_original>
